<compile_context>
chip_gen: v5e
topology: v5e:2x2
jax: 0.10.0
libtpu: 0.0.40
codegen_flags: <defaults>
</compile_context>

<pallas_src>
import functools
import math

import jax
import jax.numpy as jnp
from jax.experimental import pallas as pl
from jax.experimental.pallas import tpu as pltpu

# ---------------- synthetic BERT config (small) ----------------
VOCAB = 128
TYPE_VOCAB = 2
MAX_POS = 32
HIDDEN = 32
N_LAYERS = 2
N_HEADS = 4
HEAD_DIM = HIDDEN // N_HEADS
INTERMEDIATE = 64
LN_EPS = 1e-12
HEAD_PAD = 128          # lane-dense head output width (lanes 0..3 are real)

BATCH = 2
SEQ = 8


# ---------------- single fused Pallas kernel (one batch per grid step) -----
def _model_kernel(emb_ref, mask_ref,
                  emb_ln_g_ref, emb_ln_b_ref,
                  q_w_ref, k_w_ref, v_w_ref,
                  q_b_ref, k_b_ref, v_b_ref,
                  ao_w_ref, ao_b_ref,
                  ln1_g_ref, ln1_b_ref,
                  i_w_ref, i_b_ref, o_w_ref, o_b_ref,
                  ln2_g_ref, ln2_b_ref,
                  pooler_w_ref, pooler_b_ref,
                  head_w_ref, head_b_ref,
                  out_ref):
    """Whole BERT forward (2 layers) + pooler + heads for ONE batch element.

    emb  : [1, S, H]       summed embeddings (word + pos + type), f32
    mask : [1, 1, S]       attention mask (1 = keep, 0 = pad), f32
    out  : [1, S, 128]     tanh-pooled rows through zero-padded [reg|cls|0...]
                           heads; wrapper reads row 0 (CLS), lanes [:4].
    """
    scale = 1.0 / math.sqrt(HEAD_DIM)

    def _ln(x, g, b):
        mean = jnp.mean(x, axis=-1, keepdims=True)
        var = jnp.mean(jnp.square(x - mean), axis=-1, keepdims=True)
        return (x - mean) * jax.lax.rsqrt(var + LN_EPS) * g + b

    def _gelu(y):
        # TODO(synk): HF BERT uses erf-based gelu; tanh approximation used
        # here for robust Mosaic lowering.
        c = math.sqrt(2.0 / math.pi)
        return 0.5 * y * (1.0 + jnp.tanh(c * (y + 0.044715 * y * y * y)))

    # per-batch key-padding bias, built in-kernel (cheap VPU work, O(S))
    bias = (1.0 - mask_ref[0]) * -1e9                      # [1, S]

    h = _ln(emb_ref[0], emb_ln_g_ref[...], emb_ln_b_ref[...])   # [S, H] f32

    for l in range(N_LAYERS):                              # static unroll
        h_bf = h.astype(jnp.bfloat16)

        # per-head attention; heads indexed on the LEADING weight axis, so
        # there is no lane slicing of activations.  NOTE: padded-query rows
        # produce garbage attention outputs (only key padding is masked);
        # harmless because only the CLS row is consumed downstream.
        ctx_heads = []
        for hh in range(N_HEADS):                          # static unroll
            q_h = (jnp.dot(h_bf, q_w_ref[l, hh],
                           preferred_element_type=jnp.float32)
                   + q_b_ref[l, hh])                       # [S, Dh] f32
            k_h = (jnp.dot(h_bf, k_w_ref[l, hh],
                           preferred_element_type=jnp.float32)
                   + k_b_ref[l, hh])
            v_h = (jnp.dot(h_bf, v_w_ref[l, hh],
                           preferred_element_type=jnp.float32)
                   + v_b_ref[l, hh])

            scores = jax.lax.dot_general(                  # q @ k^T, [S, S]
                q_h.astype(jnp.bfloat16), k_h.astype(jnp.bfloat16),
                (((1,), (1,)), ((), ())),
                preferred_element_type=jnp.float32) * scale + bias
            scores = scores - jnp.max(scores, axis=-1, keepdims=True)
            p = jnp.exp(scores)
            p = p * pl.reciprocal(jnp.sum(p, axis=-1, keepdims=True),
                                  approx=True)
            ctx_heads.append(jnp.dot(p.astype(jnp.bfloat16),
                                     v_h.astype(jnp.bfloat16),
                                     preferred_element_type=jnp.float32))

        # head concat + SINGLE output projection matmul (no per-head sums)
        ctx = jnp.concatenate(ctx_heads, axis=-1)          # [S, H]
        attn = (jnp.dot(ctx.astype(jnp.bfloat16), ao_w_ref[l],
                        preferred_element_type=jnp.float32)
                + ao_b_ref[l])

        # residual + LN (fused)
        h = _ln(attn + h, ln1_g_ref[l], ln1_b_ref[l])

        # FFN (bf16 MXU operands, f32 accumulate, f32 gelu)
        inter = _gelu(jnp.dot(h.astype(jnp.bfloat16), i_w_ref[l],
                              preferred_element_type=jnp.float32)
                      + i_b_ref[l])
        ffn = (jnp.dot(inter.astype(jnp.bfloat16), o_w_ref[l],
                       preferred_element_type=jnp.float32)
               + o_b_ref[l])
        h = _ln(ffn + h, ln2_g_ref[l], ln2_b_ref[l])

    # pooler (tanh dense) on the batch's S rows (one sublane group — same
    # vector cost as a single row); heads are zero-padded to 128 lanes so the
    # store is unmasked and lane-dense.  Wrapper keeps row 0 (CLS), lanes :4.
    pooled = jnp.tanh(jnp.dot(h.astype(jnp.bfloat16), pooler_w_ref[...],
                              preferred_element_type=jnp.float32)
                      + pooler_b_ref[...])                 # [S, H]
    out_ref[0] = (jnp.dot(pooled.astype(jnp.bfloat16), head_w_ref[...],
                          preferred_element_type=jnp.float32)
                  + head_b_ref[...])                       # [S, 128]


# ---------------- parameter init (deterministic, synthetic) ----------------
def init_params(key):
    keys = iter(jax.random.split(key, 128))

    def w(shape, scale=0.02):
        return scale * jax.random.normal(next(keys), shape, dtype=jnp.float32)

    def zeros(shape):
        return jnp.zeros(shape, dtype=jnp.float32)

    def ones(shape):
        return jnp.ones(shape, dtype=jnp.float32)

    params = {
        "word_emb": w((VOCAB, HIDDEN)),
        "pos_emb": w((MAX_POS, HIDDEN)),
        "type_emb": w((TYPE_VOCAB, HIDDEN)),
        "emb_ln_g": ones((HIDDEN,)),
        "emb_ln_b": zeros((HIDDEN,)),
        "layers": [],
        "pooler_w": w((HIDDEN, HIDDEN)),
        "pooler_b": zeros((HIDDEN,)),
        "cls_w": w((HIDDEN, 3)),
        "cls_b": zeros((3,)),
        "reg_w": w((HIDDEN, 1)),
        "reg_b": zeros((1,)),
    }
    for _ in range(N_LAYERS):
        params["layers"].append({
            "q_w": w((HIDDEN, HIDDEN)), "q_b": zeros((HIDDEN,)),
            "k_w": w((HIDDEN, HIDDEN)), "k_b": zeros((HIDDEN,)),
            "v_w": w((HIDDEN, HIDDEN)), "v_b": zeros((HIDDEN,)),
            "ao_w": w((HIDDEN, HIDDEN)), "ao_b": zeros((HIDDEN,)),
            "ln1_g": ones((HIDDEN,)), "ln1_b": zeros((HIDDEN,)),
            "i_w": w((HIDDEN, INTERMEDIATE)), "i_b": zeros((INTERMEDIATE,)),
            "o_w": w((INTERMEDIATE, HIDDEN)), "o_b": zeros((HIDDEN,)),
            "ln2_g": ones((HIDDEN,)), "ln2_b": zeros((HIDDEN,)),
        })
    return params


# ---------------- model forward ----------------
def multilabel_forward(params, input_ids, attention_mask, token_type_ids):
    B, S = input_ids.shape
    pos_ids = jnp.arange(S)

    # embedding gathers stay in plain JAX (data-dependent gather); the sum is
    # fed to the fused kernel as a per-batch [S, H] activation block.
    emb = (params["word_emb"][input_ids]
           + params["pos_emb"][pos_ids][None, :, :]
           + params["type_emb"][token_type_ids])                   # [B, S, H]
    mask = attention_mask.astype(jnp.float32).reshape(B, 1, S)     # [B, 1, S]

    L = params["layers"]

    def stack_head_w(name):   # [L, NH, H, Dh]  (heads on a leading axis), bf16
        return jnp.stack([
            p[name].reshape(HIDDEN, N_HEADS, HEAD_DIM).transpose(1, 0, 2)
            for p in L]).astype(jnp.bfloat16)

    def stack_head_b(name):   # [L, NH, 1, Dh]  f32
        return jnp.stack([p[name].reshape(N_HEADS, 1, HEAD_DIM) for p in L])

    q_w = stack_head_w("q_w"); k_w = stack_head_w("k_w"); v_w = stack_head_w("v_w")
    q_b = stack_head_b("q_b"); k_b = stack_head_b("k_b"); v_b = stack_head_b("v_b")

    ao_w = jnp.stack([p["ao_w"] for p in L]).astype(jnp.bfloat16)   # [L,H,H]
    ao_b = jnp.stack([p["ao_b"][None, :] for p in L])               # [L,1,H]
    ln1_g = jnp.stack([p["ln1_g"][None, :] for p in L])
    ln1_b = jnp.stack([p["ln1_b"][None, :] for p in L])
    i_w = jnp.stack([p["i_w"] for p in L]).astype(jnp.bfloat16)     # [L,H,I]
    i_b = jnp.stack([p["i_b"][None, :] for p in L])                 # [L,1,I]
    o_w = jnp.stack([p["o_w"] for p in L]).astype(jnp.bfloat16)     # [L,I,H]
    o_b = jnp.stack([p["o_b"][None, :] for p in L])                 # [L,1,H]
    ln2_g = jnp.stack([p["ln2_g"][None, :] for p in L])
    ln2_b = jnp.stack([p["ln2_b"][None, :] for p in L])

    emb_ln_g = params["emb_ln_g"][None, :]
    emb_ln_b = params["emb_ln_b"][None, :]
    pooler_w = params["pooler_w"].astype(jnp.bfloat16)
    pooler_b = params["pooler_b"][None, :]

    # [reg | cls] heads, zero-padded to 128 lanes for unmasked, lane-dense stores
    head_w = jnp.concatenate([params["reg_w"], params["cls_w"]], axis=1)   # [H,4]
    head_w = jnp.pad(head_w, ((0, 0), (0, HEAD_PAD - 4))).astype(jnp.bfloat16)
    head_b = jnp.concatenate([params["reg_b"], params["cls_b"]])[None, :]  # [1,4]
    head_b = jnp.pad(head_b, ((0, 0), (0, HEAD_PAD - 4)))

    def full_spec(arr):          # whole-array block, constant across the grid
        nd = arr.ndim
        return pl.BlockSpec(arr.shape, lambda b, nd=nd: (0,) * nd)

    args = (emb, mask, emb_ln_g, emb_ln_b,
            q_w, k_w, v_w, q_b, k_b, v_b,
            ao_w, ao_b, ln1_g, ln1_b,
            i_w, i_b, o_w, o_b, ln2_g, ln2_b,
            pooler_w, pooler_b, head_w, head_b)

    in_specs = [
        pl.BlockSpec((1, S, HIDDEN), lambda b: (b, 0, 0)),    # emb (per batch)
        pl.BlockSpec((1, 1, S), lambda b: (b, 0, 0)),         # mask (per batch)
    ] + [full_spec(a) for a in args[2:]]

    out_specs = pl.BlockSpec((1, S, HEAD_PAD), lambda b: (b, 0, 0))

    # advisory cost estimate (helps XLA overlap the gathers / CLS slicing)
    flops = (N_LAYERS * B * (3 * N_HEADS * 2 * S * HIDDEN * HEAD_DIM     # qkv
                             + 2 * N_HEADS * 2 * S * S * HEAD_DIM        # scores+ctx
                             + 2 * S * HIDDEN * HIDDEN                   # out proj
                             + 4 * S * HIDDEN * INTERMEDIATE)            # ffn
             + B * (2 * S * HIDDEN * HIDDEN + 2 * S * HIDDEN * HEAD_PAD))  # pool+heads
    transcendentals = B * (N_LAYERS * (N_HEADS * S * S + S * INTERMEDIATE)
                           + S * HIDDEN + (4 * N_LAYERS + 1) * S)
    bytes_accessed = (sum(a.size * a.dtype.itemsize for a in args)
                      + B * S * HEAD_PAD * 4)

    out = pl.pallas_call(
        _model_kernel,
        out_shape=jax.ShapeDtypeStruct((B, S, HEAD_PAD), jnp.float32),
        grid=(B,),
        in_specs=in_specs,
        out_specs=out_specs,
        compiler_params=pltpu.CompilerParams(
            dimension_semantics=("parallel",)),
        cost_estimate=pl.CostEstimate(flops=flops,
                                      transcendentals=transcendentals,
                                      bytes_accessed=bytes_accessed),
    )(*args)

    # BERT pooler uses the CLS (first) token of each sequence.
    heads_out = out[:, 0, :4]                                # [B, 4]
    relatedness = heads_out[:, :1]                           # [B, 1]
    entailment = heads_out[:, 1:4]                           # [B, 3]
    return relatedness, entailment


# ---------------- main ----------------
if __name__ == "__main__":
    key = jax.random.PRNGKey(0)
    pkey, ikey = jax.random.split(key)

    params = init_params(pkey)

    input_ids = jax.random.randint(ikey, (BATCH, SEQ), 0, VOCAB, dtype=jnp.int32)
    # second example has 2 padding positions to exercise the attention mask
    attention_mask = jnp.array(
        [[1] * SEQ, [1] * (SEQ - 2) + [0, 0]], dtype=jnp.int32)
    token_type_ids = jnp.array(
        [[0] * (SEQ // 2) + [1] * (SEQ // 2)] * BATCH, dtype=jnp.int32)

    fwd = jax.jit(functools.partial(multilabel_forward, params))
    relatedness, entailment = fwd(input_ids, attention_mask, token_type_ids)
    jax.block_until_ready((relatedness, entailment))

    assert relatedness.shape == (BATCH, 1)
    assert entailment.shape == (BATCH, 3)
    print("KERNEL_OK")
</pallas_src>

<mosaic_0001>
module attributes {stable_mosaic.version = 11 : i64} {
  func.func @_model_kernel(%arg0: i32, %arg1: memref<1x8x32xf32, #tpu.memory_space<vmem>>, %arg2: memref<1x1x8xf32, #tpu.memory_space<vmem>>, %arg3: memref<1x32xf32, #tpu.memory_space<vmem>>, %arg4: memref<1x32xf32, #tpu.memory_space<vmem>>, %arg5: memref<2x4x32x8xbf16, #tpu.memory_space<vmem>>, %arg6: memref<2x4x32x8xbf16, #tpu.memory_space<vmem>>, %arg7: memref<2x4x32x8xbf16, #tpu.memory_space<vmem>>, %arg8: memref<2x4x1x8xf32, #tpu.memory_space<vmem>>, %arg9: memref<2x4x1x8xf32, #tpu.memory_space<vmem>>, %arg10: memref<2x4x1x8xf32, #tpu.memory_space<vmem>>, %arg11: memref<2x32x32xbf16, #tpu.memory_space<vmem>>, %arg12: memref<2x1x32xf32, #tpu.memory_space<vmem>>, %arg13: memref<2x1x32xf32, #tpu.memory_space<vmem>>, %arg14: memref<2x1x32xf32, #tpu.memory_space<vmem>>, %arg15: memref<2x32x64xbf16, #tpu.memory_space<vmem>>, %arg16: memref<2x1x64xf32, #tpu.memory_space<vmem>>, %arg17: memref<2x64x32xbf16, #tpu.memory_space<vmem>>, %arg18: memref<2x1x32xf32, #tpu.memory_space<vmem>>, %arg19: memref<2x1x32xf32, #tpu.memory_space<vmem>>, %arg20: memref<2x1x32xf32, #tpu.memory_space<vmem>>, %arg21: memref<32x32xbf16, #tpu.memory_space<vmem>>, %arg22: memref<1x32xf32, #tpu.memory_space<vmem>>, %arg23: memref<32x128xbf16, #tpu.memory_space<vmem>>, %arg24: memref<1x128xf32, #tpu.memory_space<vmem>>, %arg25: memref<1x8x128xf32, #tpu.memory_space<vmem>>) attributes {dimension_semantics = [#tpu.dimension_semantics<parallel>], iteration_bounds = array<i64: 2>, scalar_prefetch = 0 : i64, scratch_operands = 0 : i64, tpu.core_type = #tpu.core_type<tc>, window_params = [{transform_indices = @transform_0, window_bounds = array<i64: 1, 8, 32>}, {transform_indices = @transform_1, window_bounds = array<i64: 1, 1, 8>}, {pipeline_mode = #tpu.pipeline_mode<synchronous>, transform_indices = @transform_2, window_bounds = array<i64: 1, 32>}, {pipeline_mode = #tpu.pipeline_mode<synchronous>, transform_indices = @transform_3, window_bounds = array<i64: 1, 32>}, {pipeline_mode = #tpu.pipeline_mode<synchronous>, transform_indices = @transform_4, window_bounds = array<i64: 2, 4, 32, 8>}, {pipeline_mode = #tpu.pipeline_mode<synchronous>, transform_indices = @transform_5, window_bounds = array<i64: 2, 4, 32, 8>}, {pipeline_mode = #tpu.pipeline_mode<synchronous>, transform_indices = @transform_6, window_bounds = array<i64: 2, 4, 32, 8>}, {pipeline_mode = #tpu.pipeline_mode<synchronous>, transform_indices = @transform_7, window_bounds = array<i64: 2, 4, 1, 8>}, {pipeline_mode = #tpu.pipeline_mode<synchronous>, transform_indices = @transform_8, window_bounds = array<i64: 2, 4, 1, 8>}, {pipeline_mode = #tpu.pipeline_mode<synchronous>, transform_indices = @transform_9, window_bounds = array<i64: 2, 4, 1, 8>}, {pipeline_mode = #tpu.pipeline_mode<synchronous>, transform_indices = @transform_10, window_bounds = array<i64: 2, 32, 32>}, {pipeline_mode = #tpu.pipeline_mode<synchronous>, transform_indices = @transform_11, window_bounds = array<i64: 2, 1, 32>}, {pipeline_mode = #tpu.pipeline_mode<synchronous>, transform_indices = @transform_12, window_bounds = array<i64: 2, 1, 32>}, {pipeline_mode = #tpu.pipeline_mode<synchronous>, transform_indices = @transform_13, window_bounds = array<i64: 2, 1, 32>}, {pipeline_mode = #tpu.pipeline_mode<synchronous>, transform_indices = @transform_14, window_bounds = array<i64: 2, 32, 64>}, {pipeline_mode = #tpu.pipeline_mode<synchronous>, transform_indices = @transform_15, window_bounds = array<i64: 2, 1, 64>}, {pipeline_mode = #tpu.pipeline_mode<synchronous>, transform_indices = @transform_16, window_bounds = array<i64: 2, 64, 32>}, {pipeline_mode = #tpu.pipeline_mode<synchronous>, transform_indices = @transform_17, window_bounds = array<i64: 2, 1, 32>}, {pipeline_mode = #tpu.pipeline_mode<synchronous>, transform_indices = @transform_18, window_bounds = array<i64: 2, 1, 32>}, {pipeline_mode = #tpu.pipeline_mode<synchronous>, transform_indices = @transform_19, window_bounds = array<i64: 2, 1, 32>}, {pipeline_mode = #tpu.pipeline_mode<synchronous>, transform_indices = @transform_20, window_bounds = array<i64: 32, 32>}, {pipeline_mode = #tpu.pipeline_mode<synchronous>, transform_indices = @transform_21, window_bounds = array<i64: 1, 32>}, {pipeline_mode = #tpu.pipeline_mode<synchronous>, transform_indices = @transform_22, window_bounds = array<i64: 32, 128>}, {pipeline_mode = #tpu.pipeline_mode<synchronous>, transform_indices = @transform_23, window_bounds = array<i64: 1, 128>}, {transform_indices = @transform_24, window_bounds = array<i64: 1, 8, 128>}]} {
    %c0 = arith.constant 0 : index
    %c0_0 = arith.constant 0 : index
    %c0_1 = arith.constant 0 : index
    %0 = vector.load %arg2[%c0, %c0_0, %c0_1] : memref<1x1x8xf32, #tpu.memory_space<vmem>>, vector<1x1x8xf32>
    %1 = vector.shape_cast %0 : vector<1x1x8xf32> to vector<1x8xf32>
    %cst = arith.constant 1.000000e+00 : f32
    %2 = vector.broadcast %cst : f32 to vector<1x8xf32>
    %3 = arith.subf %2, %1 : vector<1x8xf32>
    %cst_2 = arith.constant -1.000000e+09 : f32
    %4 = vector.broadcast %cst_2 : f32 to vector<1x8xf32>
    %5 = arith.mulf %3, %4 : vector<1x8xf32>
    %c0_3 = arith.constant 0 : index
    %c0_4 = arith.constant 0 : index
    %c0_5 = arith.constant 0 : index
    %6 = vector.load %arg1[%c0_3, %c0_4, %c0_5] : memref<1x8x32xf32, #tpu.memory_space<vmem>>, vector<1x8x32xf32>
    %7 = vector.shape_cast %6 : vector<1x8x32xf32> to vector<8x32xf32>
    %c0_6 = arith.constant 0 : index
    %c0_7 = arith.constant 0 : index
    %8 = vector.load %arg3[%c0_6, %c0_7] : memref<1x32xf32, #tpu.memory_space<vmem>>, vector<1x32xf32>
    %c0_8 = arith.constant 0 : index
    %c0_9 = arith.constant 0 : index
    %9 = vector.load %arg4[%c0_8, %c0_9] : memref<1x32xf32, #tpu.memory_space<vmem>>, vector<1x32xf32>
    %cst_10 = arith.constant dense<0.000000e+00> : vector<8xf32>
    %10 = vector.multi_reduction <add>, %7, %cst_10 [1] : vector<8x32xf32> to vector<8xf32>
    %11 = vector.shape_cast %10 : vector<8xf32> to vector<8x1xf32>
    %cst_11 = arith.constant 3.200000e+01 : f32
    %12 = vector.broadcast %cst_11 : f32 to vector<8x1xf32>
    %13 = arith.divf %11, %12 : vector<8x1xf32>
    %14 = vector.broadcast %13 : vector<8x1xf32> to vector<8x32xf32>
    %15 = arith.subf %7, %14 : vector<8x32xf32>
    %16 = arith.mulf %15, %15 : vector<8x32xf32>
    %cst_12 = arith.constant dense<0.000000e+00> : vector<8xf32>
    %17 = vector.multi_reduction <add>, %16, %cst_12 [1] : vector<8x32xf32> to vector<8xf32>
    %18 = vector.shape_cast %17 : vector<8xf32> to vector<8x1xf32>
    %cst_13 = arith.constant 3.200000e+01 : f32
    %19 = vector.broadcast %cst_13 : f32 to vector<8x1xf32>
    %20 = arith.divf %18, %19 : vector<8x1xf32>
    %21 = vector.broadcast %13 : vector<8x1xf32> to vector<8x32xf32>
    %22 = arith.subf %7, %21 : vector<8x32xf32>
    %cst_14 = arith.constant 9.99999996E-13 : f32
    %23 = vector.broadcast %cst_14 : f32 to vector<8x1xf32>
    %24 = arith.addf %20, %23 : vector<8x1xf32>
    %25 = math.rsqrt %24 : vector<8x1xf32>
    %26 = vector.broadcast %25 : vector<8x1xf32> to vector<8x32xf32>
    %27 = arith.mulf %22, %26 : vector<8x32xf32>
    %28 = vector.broadcast %8 : vector<1x32xf32> to vector<8x32xf32>
    %29 = arith.mulf %27, %28 : vector<8x32xf32>
    %30 = vector.broadcast %9 : vector<1x32xf32> to vector<8x32xf32>
    %31 = arith.addf %29, %30 : vector<8x32xf32>
    %32 = arith.truncf %31 : vector<8x32xf32> to vector<8x32xbf16>
    %c0_15 = arith.constant 0 : index
    %c0_16 = arith.constant 0 : index
    %c0_17 = arith.constant 0 : index
    %c0_18 = arith.constant 0 : index
    %33 = vector.load %arg5[%c0_15, %c0_16, %c0_17, %c0_18] : memref<2x4x32x8xbf16, #tpu.memory_space<vmem>>, vector<1x1x32x8xbf16>
    %34 = vector.shape_cast %33 : vector<1x1x32x8xbf16> to vector<32x8xbf16>
    %cst_19 = arith.constant dense<0.000000e+00> : vector<8x8xf32>
    %35 = tpu.matmul %32, %34, %cst_19 {dimension_numbers = #tpu.dot_dimension_numbers<[1], [0], [0], [1], [0, 0, 1, 1], [], []>} : vector<8x32xbf16>, vector<32x8xbf16>, vector<8x8xf32> -> vector<8x8xf32>
    %c0_20 = arith.constant 0 : index
    %c0_21 = arith.constant 0 : index
    %c0_22 = arith.constant 0 : index
    %c0_23 = arith.constant 0 : index
    %36 = vector.load %arg8[%c0_20, %c0_21, %c0_22, %c0_23] : memref<2x4x1x8xf32, #tpu.memory_space<vmem>>, vector<1x1x1x8xf32>
    %37 = vector.shape_cast %36 : vector<1x1x1x8xf32> to vector<1x8xf32>
    %38 = vector.broadcast %37 : vector<1x8xf32> to vector<8x8xf32>
    %39 = arith.addf %35, %38 : vector<8x8xf32>
    %c0_24 = arith.constant 0 : index
    %c0_25 = arith.constant 0 : index
    %c0_26 = arith.constant 0 : index
    %c0_27 = arith.constant 0 : index
    %40 = vector.load %arg6[%c0_24, %c0_25, %c0_26, %c0_27] : memref<2x4x32x8xbf16, #tpu.memory_space<vmem>>, vector<1x1x32x8xbf16>
    %41 = vector.shape_cast %40 : vector<1x1x32x8xbf16> to vector<32x8xbf16>
    %cst_28 = arith.constant dense<0.000000e+00> : vector<8x8xf32>
    %42 = tpu.matmul %32, %41, %cst_28 {dimension_numbers = #tpu.dot_dimension_numbers<[1], [0], [0], [1], [0, 0, 1, 1], [], []>} : vector<8x32xbf16>, vector<32x8xbf16>, vector<8x8xf32> -> vector<8x8xf32>
    %c0_29 = arith.constant 0 : index
    %c0_30 = arith.constant 0 : index
    %c0_31 = arith.constant 0 : index
    %c0_32 = arith.constant 0 : index
    %43 = vector.load %arg9[%c0_29, %c0_30, %c0_31, %c0_32] : memref<2x4x1x8xf32, #tpu.memory_space<vmem>>, vector<1x1x1x8xf32>
    %44 = vector.shape_cast %43 : vector<1x1x1x8xf32> to vector<1x8xf32>
    %45 = vector.broadcast %44 : vector<1x8xf32> to vector<8x8xf32>
    %46 = arith.addf %42, %45 : vector<8x8xf32>
    %c0_33 = arith.constant 0 : index
    %c0_34 = arith.constant 0 : index
    %c0_35 = arith.constant 0 : index
    %c0_36 = arith.constant 0 : index
    %47 = vector.load %arg7[%c0_33, %c0_34, %c0_35, %c0_36] : memref<2x4x32x8xbf16, #tpu.memory_space<vmem>>, vector<1x1x32x8xbf16>
    %48 = vector.shape_cast %47 : vector<1x1x32x8xbf16> to vector<32x8xbf16>
    %cst_37 = arith.constant dense<0.000000e+00> : vector<8x8xf32>
    %49 = tpu.matmul %32, %48, %cst_37 {dimension_numbers = #tpu.dot_dimension_numbers<[1], [0], [0], [1], [0, 0, 1, 1], [], []>} : vector<8x32xbf16>, vector<32x8xbf16>, vector<8x8xf32> -> vector<8x8xf32>
    %c0_38 = arith.constant 0 : index
    %c0_39 = arith.constant 0 : index
    %c0_40 = arith.constant 0 : index
    %c0_41 = arith.constant 0 : index
    %50 = vector.load %arg10[%c0_38, %c0_39, %c0_40, %c0_41] : memref<2x4x1x8xf32, #tpu.memory_space<vmem>>, vector<1x1x1x8xf32>
    %51 = vector.shape_cast %50 : vector<1x1x1x8xf32> to vector<1x8xf32>
    %52 = vector.broadcast %51 : vector<1x8xf32> to vector<8x8xf32>
    %53 = arith.addf %49, %52 : vector<8x8xf32>
    %54 = arith.truncf %39 : vector<8x8xf32> to vector<8x8xbf16>
    %55 = arith.truncf %46 : vector<8x8xf32> to vector<8x8xbf16>
    %cst_42 = arith.constant dense<0.000000e+00> : vector<8x8xf32>
    %56 = tpu.matmul %54, %55, %cst_42 {dimension_numbers = #tpu.dot_dimension_numbers<[1], [1], [0], [0], [0, 0, 1, 0], [], []>} : vector<8x8xbf16>, vector<8x8xbf16>, vector<8x8xf32> -> vector<8x8xf32>
    %cst_43 = arith.constant 0.353553385 : f32
    %57 = vector.broadcast %cst_43 : f32 to vector<8x8xf32>
    %58 = arith.mulf %56, %57 : vector<8x8xf32>
    %59 = vector.broadcast %5 : vector<1x8xf32> to vector<8x8xf32>
    %60 = arith.addf %58, %59 : vector<8x8xf32>
    %cst_44 = arith.constant dense<0xFF800000> : vector<8xf32>
    %61 = vector.multi_reduction <maximumf>, %60, %cst_44 [1] : vector<8x8xf32> to vector<8xf32>
    %62 = vector.shape_cast %61 : vector<8xf32> to vector<8x1xf32>
    %63 = vector.broadcast %62 : vector<8x1xf32> to vector<8x8xf32>
    %64 = arith.subf %60, %63 : vector<8x8xf32>
    %65 = math.exp %64 : vector<8x8xf32>
    %cst_45 = arith.constant dense<0.000000e+00> : vector<8xf32>
    %66 = vector.multi_reduction <add>, %65, %cst_45 [1] : vector<8x8xf32> to vector<8xf32>
    %67 = vector.shape_cast %66 : vector<8xf32> to vector<8x1xf32>
    %68 = tpu.reciprocal %67 {approx = true} : vector<8x1xf32> -> vector<8x1xf32>
    %69 = vector.broadcast %68 : vector<8x1xf32> to vector<8x8xf32>
    %70 = arith.mulf %65, %69 : vector<8x8xf32>
    %71 = arith.truncf %70 : vector<8x8xf32> to vector<8x8xbf16>
    %72 = arith.truncf %53 : vector<8x8xf32> to vector<8x8xbf16>
    %cst_46 = arith.constant dense<0.000000e+00> : vector<8x8xf32>
    %73 = tpu.matmul %71, %72, %cst_46 {dimension_numbers = #tpu.dot_dimension_numbers<[1], [0], [0], [1], [0, 0, 1, 1], [], []>} : vector<8x8xbf16>, vector<8x8xbf16>, vector<8x8xf32> -> vector<8x8xf32>
    %c0_47 = arith.constant 0 : index
    %c1 = arith.constant 1 : index
    %c0_48 = arith.constant 0 : index
    %c0_49 = arith.constant 0 : index
    %74 = vector.load %arg5[%c0_47, %c1, %c0_48, %c0_49] : memref<2x4x32x8xbf16, #tpu.memory_space<vmem>>, vector<1x1x32x8xbf16>
    %75 = vector.shape_cast %74 : vector<1x1x32x8xbf16> to vector<32x8xbf16>
    %cst_50 = arith.constant dense<0.000000e+00> : vector<8x8xf32>
    %76 = tpu.matmul %32, %75, %cst_50 {dimension_numbers = #tpu.dot_dimension_numbers<[1], [0], [0], [1], [0, 0, 1, 1], [], []>} : vector<8x32xbf16>, vector<32x8xbf16>, vector<8x8xf32> -> vector<8x8xf32>
    %c0_51 = arith.constant 0 : index
    %c1_52 = arith.constant 1 : index
    %c0_53 = arith.constant 0 : index
    %c0_54 = arith.constant 0 : index
    %77 = vector.load %arg8[%c0_51, %c1_52, %c0_53, %c0_54] : memref<2x4x1x8xf32, #tpu.memory_space<vmem>>, vector<1x1x1x8xf32>
    %78 = vector.shape_cast %77 : vector<1x1x1x8xf32> to vector<1x8xf32>
    %79 = vector.broadcast %78 : vector<1x8xf32> to vector<8x8xf32>
    %80 = arith.addf %76, %79 : vector<8x8xf32>
    %c0_55 = arith.constant 0 : index
    %c1_56 = arith.constant 1 : index
    %c0_57 = arith.constant 0 : index
    %c0_58 = arith.constant 0 : index
    %81 = vector.load %arg6[%c0_55, %c1_56, %c0_57, %c0_58] : memref<2x4x32x8xbf16, #tpu.memory_space<vmem>>, vector<1x1x32x8xbf16>
    %82 = vector.shape_cast %81 : vector<1x1x32x8xbf16> to vector<32x8xbf16>
    %cst_59 = arith.constant dense<0.000000e+00> : vector<8x8xf32>
    %83 = tpu.matmul %32, %82, %cst_59 {dimension_numbers = #tpu.dot_dimension_numbers<[1], [0], [0], [1], [0, 0, 1, 1], [], []>} : vector<8x32xbf16>, vector<32x8xbf16>, vector<8x8xf32> -> vector<8x8xf32>
    %c0_60 = arith.constant 0 : index
    %c1_61 = arith.constant 1 : index
    %c0_62 = arith.constant 0 : index
    %c0_63 = arith.constant 0 : index
    %84 = vector.load %arg9[%c0_60, %c1_61, %c0_62, %c0_63] : memref<2x4x1x8xf32, #tpu.memory_space<vmem>>, vector<1x1x1x8xf32>
    %85 = vector.shape_cast %84 : vector<1x1x1x8xf32> to vector<1x8xf32>
    %86 = vector.broadcast %85 : vector<1x8xf32> to vector<8x8xf32>
    %87 = arith.addf %83, %86 : vector<8x8xf32>
    %c0_64 = arith.constant 0 : index
    %c1_65 = arith.constant 1 : index
    %c0_66 = arith.constant 0 : index
    %c0_67 = arith.constant 0 : index
    %88 = vector.load %arg7[%c0_64, %c1_65, %c0_66, %c0_67] : memref<2x4x32x8xbf16, #tpu.memory_space<vmem>>, vector<1x1x32x8xbf16>
    %89 = vector.shape_cast %88 : vector<1x1x32x8xbf16> to vector<32x8xbf16>
    %cst_68 = arith.constant dense<0.000000e+00> : vector<8x8xf32>
    %90 = tpu.matmul %32, %89, %cst_68 {dimension_numbers = #tpu.dot_dimension_numbers<[1], [0], [0], [1], [0, 0, 1, 1], [], []>} : vector<8x32xbf16>, vector<32x8xbf16>, vector<8x8xf32> -> vector<8x8xf32>
    %c0_69 = arith.constant 0 : index
    %c1_70 = arith.constant 1 : index
    %c0_71 = arith.constant 0 : index
    %c0_72 = arith.constant 0 : index
    %91 = vector.load %arg10[%c0_69, %c1_70, %c0_71, %c0_72] : memref<2x4x1x8xf32, #tpu.memory_space<vmem>>, vector<1x1x1x8xf32>
    %92 = vector.shape_cast %91 : vector<1x1x1x8xf32> to vector<1x8xf32>
    %93 = vector.broadcast %92 : vector<1x8xf32> to vector<8x8xf32>
    %94 = arith.addf %90, %93 : vector<8x8xf32>
    %95 = arith.truncf %80 : vector<8x8xf32> to vector<8x8xbf16>
    %96 = arith.truncf %87 : vector<8x8xf32> to vector<8x8xbf16>
    %cst_73 = arith.constant dense<0.000000e+00> : vector<8x8xf32>
    %97 = tpu.matmul %95, %96, %cst_73 {dimension_numbers = #tpu.dot_dimension_numbers<[1], [1], [0], [0], [0, 0, 1, 0], [], []>} : vector<8x8xbf16>, vector<8x8xbf16>, vector<8x8xf32> -> vector<8x8xf32>
    %cst_74 = arith.constant 0.353553385 : f32
    %98 = vector.broadcast %cst_74 : f32 to vector<8x8xf32>
    %99 = arith.mulf %97, %98 : vector<8x8xf32>
    %100 = vector.broadcast %5 : vector<1x8xf32> to vector<8x8xf32>
    %101 = arith.addf %99, %100 : vector<8x8xf32>
    %cst_75 = arith.constant dense<0xFF800000> : vector<8xf32>
    %102 = vector.multi_reduction <maximumf>, %101, %cst_75 [1] : vector<8x8xf32> to vector<8xf32>
    %103 = vector.shape_cast %102 : vector<8xf32> to vector<8x1xf32>
    %104 = vector.broadcast %103 : vector<8x1xf32> to vector<8x8xf32>
    %105 = arith.subf %101, %104 : vector<8x8xf32>
    %106 = math.exp %105 : vector<8x8xf32>
    %cst_76 = arith.constant dense<0.000000e+00> : vector<8xf32>
    %107 = vector.multi_reduction <add>, %106, %cst_76 [1] : vector<8x8xf32> to vector<8xf32>
    %108 = vector.shape_cast %107 : vector<8xf32> to vector<8x1xf32>
    %109 = tpu.reciprocal %108 {approx = true} : vector<8x1xf32> -> vector<8x1xf32>
    %110 = vector.broadcast %109 : vector<8x1xf32> to vector<8x8xf32>
    %111 = arith.mulf %106, %110 : vector<8x8xf32>
    %112 = arith.truncf %111 : vector<8x8xf32> to vector<8x8xbf16>
    %113 = arith.truncf %94 : vector<8x8xf32> to vector<8x8xbf16>
    %cst_77 = arith.constant dense<0.000000e+00> : vector<8x8xf32>
    %114 = tpu.matmul %112, %113, %cst_77 {dimension_numbers = #tpu.dot_dimension_numbers<[1], [0], [0], [1], [0, 0, 1, 1], [], []>} : vector<8x8xbf16>, vector<8x8xbf16>, vector<8x8xf32> -> vector<8x8xf32>
    %c0_78 = arith.constant 0 : index
    %c2 = arith.constant 2 : index
    %c0_79 = arith.constant 0 : index
    %c0_80 = arith.constant 0 : index
    %115 = vector.load %arg5[%c0_78, %c2, %c0_79, %c0_80] : memref<2x4x32x8xbf16, #tpu.memory_space<vmem>>, vector<1x1x32x8xbf16>
    %116 = vector.shape_cast %115 : vector<1x1x32x8xbf16> to vector<32x8xbf16>
    %cst_81 = arith.constant dense<0.000000e+00> : vector<8x8xf32>
    %117 = tpu.matmul %32, %116, %cst_81 {dimension_numbers = #tpu.dot_dimension_numbers<[1], [0], [0], [1], [0, 0, 1, 1], [], []>} : vector<8x32xbf16>, vector<32x8xbf16>, vector<8x8xf32> -> vector<8x8xf32>
    %c0_82 = arith.constant 0 : index
    %c2_83 = arith.constant 2 : index
    %c0_84 = arith.constant 0 : index
    %c0_85 = arith.constant 0 : index
    %118 = vector.load %arg8[%c0_82, %c2_83, %c0_84, %c0_85] : memref<2x4x1x8xf32, #tpu.memory_space<vmem>>, vector<1x1x1x8xf32>
    %119 = vector.shape_cast %118 : vector<1x1x1x8xf32> to vector<1x8xf32>
    %120 = vector.broadcast %119 : vector<1x8xf32> to vector<8x8xf32>
    %121 = arith.addf %117, %120 : vector<8x8xf32>
    %c0_86 = arith.constant 0 : index
    %c2_87 = arith.constant 2 : index
    %c0_88 = arith.constant 0 : index
    %c0_89 = arith.constant 0 : index
    %122 = vector.load %arg6[%c0_86, %c2_87, %c0_88, %c0_89] : memref<2x4x32x8xbf16, #tpu.memory_space<vmem>>, vector<1x1x32x8xbf16>
    %123 = vector.shape_cast %122 : vector<1x1x32x8xbf16> to vector<32x8xbf16>
    %cst_90 = arith.constant dense<0.000000e+00> : vector<8x8xf32>
    %124 = tpu.matmul %32, %123, %cst_90 {dimension_numbers = #tpu.dot_dimension_numbers<[1], [0], [0], [1], [0, 0, 1, 1], [], []>} : vector<8x32xbf16>, vector<32x8xbf16>, vector<8x8xf32> -> vector<8x8xf32>
    %c0_91 = arith.constant 0 : index
    %c2_92 = arith.constant 2 : index
    %c0_93 = arith.constant 0 : index
    %c0_94 = arith.constant 0 : index
    %125 = vector.load %arg9[%c0_91, %c2_92, %c0_93, %c0_94] : memref<2x4x1x8xf32, #tpu.memory_space<vmem>>, vector<1x1x1x8xf32>
    %126 = vector.shape_cast %125 : vector<1x1x1x8xf32> to vector<1x8xf32>
    %127 = vector.broadcast %126 : vector<1x8xf32> to vector<8x8xf32>
    %128 = arith.addf %124, %127 : vector<8x8xf32>
    %c0_95 = arith.constant 0 : index
    %c2_96 = arith.constant 2 : index
    %c0_97 = arith.constant 0 : index
    %c0_98 = arith.constant 0 : index
    %129 = vector.load %arg7[%c0_95, %c2_96, %c0_97, %c0_98] : memref<2x4x32x8xbf16, #tpu.memory_space<vmem>>, vector<1x1x32x8xbf16>
    %130 = vector.shape_cast %129 : vector<1x1x32x8xbf16> to vector<32x8xbf16>
    %cst_99 = arith.constant dense<0.000000e+00> : vector<8x8xf32>
    %131 = tpu.matmul %32, %130, %cst_99 {dimension_numbers = #tpu.dot_dimension_numbers<[1], [0], [0], [1], [0, 0, 1, 1], [], []>} : vector<8x32xbf16>, vector<32x8xbf16>, vector<8x8xf32> -> vector<8x8xf32>
    %c0_100 = arith.constant 0 : index
    %c2_101 = arith.constant 2 : index
    %c0_102 = arith.constant 0 : index
    %c0_103 = arith.constant 0 : index
    %132 = vector.load %arg10[%c0_100, %c2_101, %c0_102, %c0_103] : memref<2x4x1x8xf32, #tpu.memory_space<vmem>>, vector<1x1x1x8xf32>
    %133 = vector.shape_cast %132 : vector<1x1x1x8xf32> to vector<1x8xf32>
    %134 = vector.broadcast %133 : vector<1x8xf32> to vector<8x8xf32>
    %135 = arith.addf %131, %134 : vector<8x8xf32>
    %136 = arith.truncf %121 : vector<8x8xf32> to vector<8x8xbf16>
    %137 = arith.truncf %128 : vector<8x8xf32> to vector<8x8xbf16>
    %cst_104 = arith.constant dense<0.000000e+00> : vector<8x8xf32>
    %138 = tpu.matmul %136, %137, %cst_104 {dimension_numbers = #tpu.dot_dimension_numbers<[1], [1], [0], [0], [0, 0, 1, 0], [], []>} : vector<8x8xbf16>, vector<8x8xbf16>, vector<8x8xf32> -> vector<8x8xf32>
    %cst_105 = arith.constant 0.353553385 : f32
    %139 = vector.broadcast %cst_105 : f32 to vector<8x8xf32>
    %140 = arith.mulf %138, %139 : vector<8x8xf32>
    %141 = vector.broadcast %5 : vector<1x8xf32> to vector<8x8xf32>
    %142 = arith.addf %140, %141 : vector<8x8xf32>
    %cst_106 = arith.constant dense<0xFF800000> : vector<8xf32>
    %143 = vector.multi_reduction <maximumf>, %142, %cst_106 [1] : vector<8x8xf32> to vector<8xf32>
    %144 = vector.shape_cast %143 : vector<8xf32> to vector<8x1xf32>
    %145 = vector.broadcast %144 : vector<8x1xf32> to vector<8x8xf32>
    %146 = arith.subf %142, %145 : vector<8x8xf32>
    %147 = math.exp %146 : vector<8x8xf32>
    %cst_107 = arith.constant dense<0.000000e+00> : vector<8xf32>
    %148 = vector.multi_reduction <add>, %147, %cst_107 [1] : vector<8x8xf32> to vector<8xf32>
    %149 = vector.shape_cast %148 : vector<8xf32> to vector<8x1xf32>
    %150 = tpu.reciprocal %149 {approx = true} : vector<8x1xf32> -> vector<8x1xf32>
    %151 = vector.broadcast %150 : vector<8x1xf32> to vector<8x8xf32>
    %152 = arith.mulf %147, %151 : vector<8x8xf32>
    %153 = arith.truncf %152 : vector<8x8xf32> to vector<8x8xbf16>
    %154 = arith.truncf %135 : vector<8x8xf32> to vector<8x8xbf16>
    %cst_108 = arith.constant dense<0.000000e+00> : vector<8x8xf32>
    %155 = tpu.matmul %153, %154, %cst_108 {dimension_numbers = #tpu.dot_dimension_numbers<[1], [0], [0], [1], [0, 0, 1, 1], [], []>} : vector<8x8xbf16>, vector<8x8xbf16>, vector<8x8xf32> -> vector<8x8xf32>
    %c0_109 = arith.constant 0 : index
    %c3 = arith.constant 3 : index
    %c0_110 = arith.constant 0 : index
    %c0_111 = arith.constant 0 : index
    %156 = vector.load %arg5[%c0_109, %c3, %c0_110, %c0_111] : memref<2x4x32x8xbf16, #tpu.memory_space<vmem>>, vector<1x1x32x8xbf16>
    %157 = vector.shape_cast %156 : vector<1x1x32x8xbf16> to vector<32x8xbf16>
    %cst_112 = arith.constant dense<0.000000e+00> : vector<8x8xf32>
    %158 = tpu.matmul %32, %157, %cst_112 {dimension_numbers = #tpu.dot_dimension_numbers<[1], [0], [0], [1], [0, 0, 1, 1], [], []>} : vector<8x32xbf16>, vector<32x8xbf16>, vector<8x8xf32> -> vector<8x8xf32>
    %c0_113 = arith.constant 0 : index
    %c3_114 = arith.constant 3 : index
    %c0_115 = arith.constant 0 : index
    %c0_116 = arith.constant 0 : index
    %159 = vector.load %arg8[%c0_113, %c3_114, %c0_115, %c0_116] : memref<2x4x1x8xf32, #tpu.memory_space<vmem>>, vector<1x1x1x8xf32>
    %160 = vector.shape_cast %159 : vector<1x1x1x8xf32> to vector<1x8xf32>
    %161 = vector.broadcast %160 : vector<1x8xf32> to vector<8x8xf32>
    %162 = arith.addf %158, %161 : vector<8x8xf32>
    %c0_117 = arith.constant 0 : index
    %c3_118 = arith.constant 3 : index
    %c0_119 = arith.constant 0 : index
    %c0_120 = arith.constant 0 : index
    %163 = vector.load %arg6[%c0_117, %c3_118, %c0_119, %c0_120] : memref<2x4x32x8xbf16, #tpu.memory_space<vmem>>, vector<1x1x32x8xbf16>
    %164 = vector.shape_cast %163 : vector<1x1x32x8xbf16> to vector<32x8xbf16>
    %cst_121 = arith.constant dense<0.000000e+00> : vector<8x8xf32>
    %165 = tpu.matmul %32, %164, %cst_121 {dimension_numbers = #tpu.dot_dimension_numbers<[1], [0], [0], [1], [0, 0, 1, 1], [], []>} : vector<8x32xbf16>, vector<32x8xbf16>, vector<8x8xf32> -> vector<8x8xf32>
    %c0_122 = arith.constant 0 : index
    %c3_123 = arith.constant 3 : index
    %c0_124 = arith.constant 0 : index
    %c0_125 = arith.constant 0 : index
    %166 = vector.load %arg9[%c0_122, %c3_123, %c0_124, %c0_125] : memref<2x4x1x8xf32, #tpu.memory_space<vmem>>, vector<1x1x1x8xf32>
    %167 = vector.shape_cast %166 : vector<1x1x1x8xf32> to vector<1x8xf32>
    %168 = vector.broadcast %167 : vector<1x8xf32> to vector<8x8xf32>
    %169 = arith.addf %165, %168 : vector<8x8xf32>
    %c0_126 = arith.constant 0 : index
    %c3_127 = arith.constant 3 : index
    %c0_128 = arith.constant 0 : index
    %c0_129 = arith.constant 0 : index
    %170 = vector.load %arg7[%c0_126, %c3_127, %c0_128, %c0_129] : memref<2x4x32x8xbf16, #tpu.memory_space<vmem>>, vector<1x1x32x8xbf16>
    %171 = vector.shape_cast %170 : vector<1x1x32x8xbf16> to vector<32x8xbf16>
    %cst_130 = arith.constant dense<0.000000e+00> : vector<8x8xf32>
    %172 = tpu.matmul %32, %171, %cst_130 {dimension_numbers = #tpu.dot_dimension_numbers<[1], [0], [0], [1], [0, 0, 1, 1], [], []>} : vector<8x32xbf16>, vector<32x8xbf16>, vector<8x8xf32> -> vector<8x8xf32>
    %c0_131 = arith.constant 0 : index
    %c3_132 = arith.constant 3 : index
    %c0_133 = arith.constant 0 : index
    %c0_134 = arith.constant 0 : index
    %173 = vector.load %arg10[%c0_131, %c3_132, %c0_133, %c0_134] : memref<2x4x1x8xf32, #tpu.memory_space<vmem>>, vector<1x1x1x8xf32>
    %174 = vector.shape_cast %173 : vector<1x1x1x8xf32> to vector<1x8xf32>
    %175 = vector.broadcast %174 : vector<1x8xf32> to vector<8x8xf32>
    %176 = arith.addf %172, %175 : vector<8x8xf32>
    %177 = arith.truncf %162 : vector<8x8xf32> to vector<8x8xbf16>
    %178 = arith.truncf %169 : vector<8x8xf32> to vector<8x8xbf16>
    %cst_135 = arith.constant dense<0.000000e+00> : vector<8x8xf32>
    %179 = tpu.matmul %177, %178, %cst_135 {dimension_numbers = #tpu.dot_dimension_numbers<[1], [1], [0], [0], [0, 0, 1, 0], [], []>} : vector<8x8xbf16>, vector<8x8xbf16>, vector<8x8xf32> -> vector<8x8xf32>
    %cst_136 = arith.constant 0.353553385 : f32
    %180 = vector.broadcast %cst_136 : f32 to vector<8x8xf32>
    %181 = arith.mulf %179, %180 : vector<8x8xf32>
    %182 = vector.broadcast %5 : vector<1x8xf32> to vector<8x8xf32>
    %183 = arith.addf %181, %182 : vector<8x8xf32>
    %cst_137 = arith.constant dense<0xFF800000> : vector<8xf32>
    %184 = vector.multi_reduction <maximumf>, %183, %cst_137 [1] : vector<8x8xf32> to vector<8xf32>
    %185 = vector.shape_cast %184 : vector<8xf32> to vector<8x1xf32>
    %186 = vector.broadcast %185 : vector<8x1xf32> to vector<8x8xf32>
    %187 = arith.subf %183, %186 : vector<8x8xf32>
    %188 = math.exp %187 : vector<8x8xf32>
    %cst_138 = arith.constant dense<0.000000e+00> : vector<8xf32>
    %189 = vector.multi_reduction <add>, %188, %cst_138 [1] : vector<8x8xf32> to vector<8xf32>
    %190 = vector.shape_cast %189 : vector<8xf32> to vector<8x1xf32>
    %191 = tpu.reciprocal %190 {approx = true} : vector<8x1xf32> -> vector<8x1xf32>
    %192 = vector.broadcast %191 : vector<8x1xf32> to vector<8x8xf32>
    %193 = arith.mulf %188, %192 : vector<8x8xf32>
    %194 = arith.truncf %193 : vector<8x8xf32> to vector<8x8xbf16>
    %195 = arith.truncf %176 : vector<8x8xf32> to vector<8x8xbf16>
    %cst_139 = arith.constant dense<0.000000e+00> : vector<8x8xf32>
    %196 = tpu.matmul %194, %195, %cst_139 {dimension_numbers = #tpu.dot_dimension_numbers<[1], [0], [0], [1], [0, 0, 1, 1], [], []>} : vector<8x8xbf16>, vector<8x8xbf16>, vector<8x8xf32> -> vector<8x8xf32>
    %197 = tpu.concatenate %73, %114, %155, %196 in 1 : vector<8x8xf32>, vector<8x8xf32>, vector<8x8xf32>, vector<8x8xf32> -> vector<8x32xf32>
    %198 = arith.truncf %197 : vector<8x32xf32> to vector<8x32xbf16>
    %c0_140 = arith.constant 0 : index
    %c0_141 = arith.constant 0 : index
    %c0_142 = arith.constant 0 : index
    %199 = vector.load %arg11[%c0_140, %c0_141, %c0_142] : memref<2x32x32xbf16, #tpu.memory_space<vmem>>, vector<1x32x32xbf16>
    %200 = vector.shape_cast %199 : vector<1x32x32xbf16> to vector<32x32xbf16>
    %cst_143 = arith.constant dense<0.000000e+00> : vector<8x32xf32>
    %201 = tpu.matmul %198, %200, %cst_143 {dimension_numbers = #tpu.dot_dimension_numbers<[1], [0], [0], [1], [0, 0, 1, 1], [], []>} : vector<8x32xbf16>, vector<32x32xbf16>, vector<8x32xf32> -> vector<8x32xf32>
    %c0_144 = arith.constant 0 : index
    %c0_145 = arith.constant 0 : index
    %c0_146 = arith.constant 0 : index
    %202 = vector.load %arg12[%c0_144, %c0_145, %c0_146] : memref<2x1x32xf32, #tpu.memory_space<vmem>>, vector<1x1x32xf32>
    %203 = vector.shape_cast %202 : vector<1x1x32xf32> to vector<1x32xf32>
    %204 = vector.broadcast %203 : vector<1x32xf32> to vector<8x32xf32>
    %205 = arith.addf %201, %204 : vector<8x32xf32>
    %206 = arith.addf %205, %31 : vector<8x32xf32>
    %c0_147 = arith.constant 0 : index
    %c0_148 = arith.constant 0 : index
    %c0_149 = arith.constant 0 : index
    %207 = vector.load %arg13[%c0_147, %c0_148, %c0_149] : memref<2x1x32xf32, #tpu.memory_space<vmem>>, vector<1x1x32xf32>
    %208 = vector.shape_cast %207 : vector<1x1x32xf32> to vector<1x32xf32>
    %c0_150 = arith.constant 0 : index
    %c0_151 = arith.constant 0 : index
    %c0_152 = arith.constant 0 : index
    %209 = vector.load %arg14[%c0_150, %c0_151, %c0_152] : memref<2x1x32xf32, #tpu.memory_space<vmem>>, vector<1x1x32xf32>
    %210 = vector.shape_cast %209 : vector<1x1x32xf32> to vector<1x32xf32>
    %cst_153 = arith.constant dense<0.000000e+00> : vector<8xf32>
    %211 = vector.multi_reduction <add>, %206, %cst_153 [1] : vector<8x32xf32> to vector<8xf32>
    %212 = vector.shape_cast %211 : vector<8xf32> to vector<8x1xf32>
    %cst_154 = arith.constant 3.200000e+01 : f32
    %213 = vector.broadcast %cst_154 : f32 to vector<8x1xf32>
    %214 = arith.divf %212, %213 : vector<8x1xf32>
    %215 = vector.broadcast %214 : vector<8x1xf32> to vector<8x32xf32>
    %216 = arith.subf %206, %215 : vector<8x32xf32>
    %217 = arith.mulf %216, %216 : vector<8x32xf32>
    %cst_155 = arith.constant dense<0.000000e+00> : vector<8xf32>
    %218 = vector.multi_reduction <add>, %217, %cst_155 [1] : vector<8x32xf32> to vector<8xf32>
    %219 = vector.shape_cast %218 : vector<8xf32> to vector<8x1xf32>
    %cst_156 = arith.constant 3.200000e+01 : f32
    %220 = vector.broadcast %cst_156 : f32 to vector<8x1xf32>
    %221 = arith.divf %219, %220 : vector<8x1xf32>
    %222 = vector.broadcast %214 : vector<8x1xf32> to vector<8x32xf32>
    %223 = arith.subf %206, %222 : vector<8x32xf32>
    %cst_157 = arith.constant 9.99999996E-13 : f32
    %224 = vector.broadcast %cst_157 : f32 to vector<8x1xf32>
    %225 = arith.addf %221, %224 : vector<8x1xf32>
    %226 = math.rsqrt %225 : vector<8x1xf32>
    %227 = vector.broadcast %226 : vector<8x1xf32> to vector<8x32xf32>
    %228 = arith.mulf %223, %227 : vector<8x32xf32>
    %229 = vector.broadcast %208 : vector<1x32xf32> to vector<8x32xf32>
    %230 = arith.mulf %228, %229 : vector<8x32xf32>
    %231 = vector.broadcast %210 : vector<1x32xf32> to vector<8x32xf32>
    %232 = arith.addf %230, %231 : vector<8x32xf32>
    %233 = arith.truncf %232 : vector<8x32xf32> to vector<8x32xbf16>
    %c0_158 = arith.constant 0 : index
    %c0_159 = arith.constant 0 : index
    %c0_160 = arith.constant 0 : index
    %234 = vector.load %arg15[%c0_158, %c0_159, %c0_160] : memref<2x32x64xbf16, #tpu.memory_space<vmem>>, vector<1x32x64xbf16>
    %235 = vector.shape_cast %234 : vector<1x32x64xbf16> to vector<32x64xbf16>
    %cst_161 = arith.constant dense<0.000000e+00> : vector<8x64xf32>
    %236 = tpu.matmul %233, %235, %cst_161 {dimension_numbers = #tpu.dot_dimension_numbers<[1], [0], [0], [1], [0, 0, 1, 1], [], []>} : vector<8x32xbf16>, vector<32x64xbf16>, vector<8x64xf32> -> vector<8x64xf32>
    %c0_162 = arith.constant 0 : index
    %c0_163 = arith.constant 0 : index
    %c0_164 = arith.constant 0 : index
    %237 = vector.load %arg16[%c0_162, %c0_163, %c0_164] : memref<2x1x64xf32, #tpu.memory_space<vmem>>, vector<1x1x64xf32>
    %238 = vector.shape_cast %237 : vector<1x1x64xf32> to vector<1x64xf32>
    %239 = vector.broadcast %238 : vector<1x64xf32> to vector<8x64xf32>
    %240 = arith.addf %236, %239 : vector<8x64xf32>
    %cst_165 = arith.constant 5.000000e-01 : f32
    %241 = vector.broadcast %cst_165 : f32 to vector<8x64xf32>
    %242 = arith.mulf %241, %240 : vector<8x64xf32>
    %cst_166 = arith.constant 4.471500e-02 : f32
    %243 = vector.broadcast %cst_166 : f32 to vector<8x64xf32>
    %244 = arith.mulf %243, %240 : vector<8x64xf32>
    %245 = arith.mulf %244, %240 : vector<8x64xf32>
    %246 = arith.mulf %245, %240 : vector<8x64xf32>
    %247 = arith.addf %240, %246 : vector<8x64xf32>
    %cst_167 = arith.constant 0.797884583 : f32
    %248 = vector.broadcast %cst_167 : f32 to vector<8x64xf32>
    %249 = arith.mulf %248, %247 : vector<8x64xf32>
    %250 = math.tanh %249 : vector<8x64xf32>
    %cst_168 = arith.constant 1.000000e+00 : f32
    %251 = vector.broadcast %cst_168 : f32 to vector<8x64xf32>
    %252 = arith.addf %251, %250 : vector<8x64xf32>
    %253 = arith.mulf %242, %252 : vector<8x64xf32>
    %254 = arith.truncf %253 : vector<8x64xf32> to vector<8x64xbf16>
    %c0_169 = arith.constant 0 : index
    %c0_170 = arith.constant 0 : index
    %c0_171 = arith.constant 0 : index
    %255 = vector.load %arg17[%c0_169, %c0_170, %c0_171] : memref<2x64x32xbf16, #tpu.memory_space<vmem>>, vector<1x64x32xbf16>
    %256 = vector.shape_cast %255 : vector<1x64x32xbf16> to vector<64x32xbf16>
    %cst_172 = arith.constant dense<0.000000e+00> : vector<8x32xf32>
    %257 = tpu.matmul %254, %256, %cst_172 {dimension_numbers = #tpu.dot_dimension_numbers<[1], [0], [0], [1], [0, 0, 1, 1], [], []>} : vector<8x64xbf16>, vector<64x32xbf16>, vector<8x32xf32> -> vector<8x32xf32>
    %c0_173 = arith.constant 0 : index
    %c0_174 = arith.constant 0 : index
    %c0_175 = arith.constant 0 : index
    %258 = vector.load %arg18[%c0_173, %c0_174, %c0_175] : memref<2x1x32xf32, #tpu.memory_space<vmem>>, vector<1x1x32xf32>
    %259 = vector.shape_cast %258 : vector<1x1x32xf32> to vector<1x32xf32>
    %260 = vector.broadcast %259 : vector<1x32xf32> to vector<8x32xf32>
    %261 = arith.addf %257, %260 : vector<8x32xf32>
    %262 = arith.addf %261, %232 : vector<8x32xf32>
    %c0_176 = arith.constant 0 : index
    %c0_177 = arith.constant 0 : index
    %c0_178 = arith.constant 0 : index
    %263 = vector.load %arg19[%c0_176, %c0_177, %c0_178] : memref<2x1x32xf32, #tpu.memory_space<vmem>>, vector<1x1x32xf32>
    %264 = vector.shape_cast %263 : vector<1x1x32xf32> to vector<1x32xf32>
    %c0_179 = arith.constant 0 : index
    %c0_180 = arith.constant 0 : index
    %c0_181 = arith.constant 0 : index
    %265 = vector.load %arg20[%c0_179, %c0_180, %c0_181] : memref<2x1x32xf32, #tpu.memory_space<vmem>>, vector<1x1x32xf32>
    %266 = vector.shape_cast %265 : vector<1x1x32xf32> to vector<1x32xf32>
    %cst_182 = arith.constant dense<0.000000e+00> : vector<8xf32>
    %267 = vector.multi_reduction <add>, %262, %cst_182 [1] : vector<8x32xf32> to vector<8xf32>
    %268 = vector.shape_cast %267 : vector<8xf32> to vector<8x1xf32>
    %cst_183 = arith.constant 3.200000e+01 : f32
    %269 = vector.broadcast %cst_183 : f32 to vector<8x1xf32>
    %270 = arith.divf %268, %269 : vector<8x1xf32>
    %271 = vector.broadcast %270 : vector<8x1xf32> to vector<8x32xf32>
    %272 = arith.subf %262, %271 : vector<8x32xf32>
    %273 = arith.mulf %272, %272 : vector<8x32xf32>
    %cst_184 = arith.constant dense<0.000000e+00> : vector<8xf32>
    %274 = vector.multi_reduction <add>, %273, %cst_184 [1] : vector<8x32xf32> to vector<8xf32>
    %275 = vector.shape_cast %274 : vector<8xf32> to vector<8x1xf32>
    %cst_185 = arith.constant 3.200000e+01 : f32
    %276 = vector.broadcast %cst_185 : f32 to vector<8x1xf32>
    %277 = arith.divf %275, %276 : vector<8x1xf32>
    %278 = vector.broadcast %270 : vector<8x1xf32> to vector<8x32xf32>
    %279 = arith.subf %262, %278 : vector<8x32xf32>
    %cst_186 = arith.constant 9.99999996E-13 : f32
    %280 = vector.broadcast %cst_186 : f32 to vector<8x1xf32>
    %281 = arith.addf %277, %280 : vector<8x1xf32>
    %282 = math.rsqrt %281 : vector<8x1xf32>
    %283 = vector.broadcast %282 : vector<8x1xf32> to vector<8x32xf32>
    %284 = arith.mulf %279, %283 : vector<8x32xf32>
    %285 = vector.broadcast %264 : vector<1x32xf32> to vector<8x32xf32>
    %286 = arith.mulf %284, %285 : vector<8x32xf32>
    %287 = vector.broadcast %266 : vector<1x32xf32> to vector<8x32xf32>
    %288 = arith.addf %286, %287 : vector<8x32xf32>
    %289 = arith.truncf %288 : vector<8x32xf32> to vector<8x32xbf16>
    %c1_187 = arith.constant 1 : index
    %c0_188 = arith.constant 0 : index
    %c0_189 = arith.constant 0 : index
    %c0_190 = arith.constant 0 : index
    %290 = vector.load %arg5[%c1_187, %c0_188, %c0_189, %c0_190] : memref<2x4x32x8xbf16, #tpu.memory_space<vmem>>, vector<1x1x32x8xbf16>
    %291 = vector.shape_cast %290 : vector<1x1x32x8xbf16> to vector<32x8xbf16>
    %cst_191 = arith.constant dense<0.000000e+00> : vector<8x8xf32>
    %292 = tpu.matmul %289, %291, %cst_191 {dimension_numbers = #tpu.dot_dimension_numbers<[1], [0], [0], [1], [0, 0, 1, 1], [], []>} : vector<8x32xbf16>, vector<32x8xbf16>, vector<8x8xf32> -> vector<8x8xf32>
    %c1_192 = arith.constant 1 : index
    %c0_193 = arith.constant 0 : index
    %c0_194 = arith.constant 0 : index
    %c0_195 = arith.constant 0 : index
    %293 = vector.load %arg8[%c1_192, %c0_193, %c0_194, %c0_195] : memref<2x4x1x8xf32, #tpu.memory_space<vmem>>, vector<1x1x1x8xf32>
    %294 = vector.shape_cast %293 : vector<1x1x1x8xf32> to vector<1x8xf32>
    %295 = vector.broadcast %294 : vector<1x8xf32> to vector<8x8xf32>
    %296 = arith.addf %292, %295 : vector<8x8xf32>
    %c1_196 = arith.constant 1 : index
    %c0_197 = arith.constant 0 : index
    %c0_198 = arith.constant 0 : index
    %c0_199 = arith.constant 0 : index
    %297 = vector.load %arg6[%c1_196, %c0_197, %c0_198, %c0_199] : memref<2x4x32x8xbf16, #tpu.memory_space<vmem>>, vector<1x1x32x8xbf16>
    %298 = vector.shape_cast %297 : vector<1x1x32x8xbf16> to vector<32x8xbf16>
    %cst_200 = arith.constant dense<0.000000e+00> : vector<8x8xf32>
    %299 = tpu.matmul %289, %298, %cst_200 {dimension_numbers = #tpu.dot_dimension_numbers<[1], [0], [0], [1], [0, 0, 1, 1], [], []>} : vector<8x32xbf16>, vector<32x8xbf16>, vector<8x8xf32> -> vector<8x8xf32>
    %c1_201 = arith.constant 1 : index
    %c0_202 = arith.constant 0 : index
    %c0_203 = arith.constant 0 : index
    %c0_204 = arith.constant 0 : index
    %300 = vector.load %arg9[%c1_201, %c0_202, %c0_203, %c0_204] : memref<2x4x1x8xf32, #tpu.memory_space<vmem>>, vector<1x1x1x8xf32>
    %301 = vector.shape_cast %300 : vector<1x1x1x8xf32> to vector<1x8xf32>
    %302 = vector.broadcast %301 : vector<1x8xf32> to vector<8x8xf32>
    %303 = arith.addf %299, %302 : vector<8x8xf32>
    %c1_205 = arith.constant 1 : index
    %c0_206 = arith.constant 0 : index
    %c0_207 = arith.constant 0 : index
    %c0_208 = arith.constant 0 : index
    %304 = vector.load %arg7[%c1_205, %c0_206, %c0_207, %c0_208] : memref<2x4x32x8xbf16, #tpu.memory_space<vmem>>, vector<1x1x32x8xbf16>
    %305 = vector.shape_cast %304 : vector<1x1x32x8xbf16> to vector<32x8xbf16>
    %cst_209 = arith.constant dense<0.000000e+00> : vector<8x8xf32>
    %306 = tpu.matmul %289, %305, %cst_209 {dimension_numbers = #tpu.dot_dimension_numbers<[1], [0], [0], [1], [0, 0, 1, 1], [], []>} : vector<8x32xbf16>, vector<32x8xbf16>, vector<8x8xf32> -> vector<8x8xf32>
    %c1_210 = arith.constant 1 : index
    %c0_211 = arith.constant 0 : index
    %c0_212 = arith.constant 0 : index
    %c0_213 = arith.constant 0 : index
    %307 = vector.load %arg10[%c1_210, %c0_211, %c0_212, %c0_213] : memref<2x4x1x8xf32, #tpu.memory_space<vmem>>, vector<1x1x1x8xf32>
    %308 = vector.shape_cast %307 : vector<1x1x1x8xf32> to vector<1x8xf32>
    %309 = vector.broadcast %308 : vector<1x8xf32> to vector<8x8xf32>
    %310 = arith.addf %306, %309 : vector<8x8xf32>
    %311 = arith.truncf %296 : vector<8x8xf32> to vector<8x8xbf16>
    %312 = arith.truncf %303 : vector<8x8xf32> to vector<8x8xbf16>
    %cst_214 = arith.constant dense<0.000000e+00> : vector<8x8xf32>
    %313 = tpu.matmul %311, %312, %cst_214 {dimension_numbers = #tpu.dot_dimension_numbers<[1], [1], [0], [0], [0, 0, 1, 0], [], []>} : vector<8x8xbf16>, vector<8x8xbf16>, vector<8x8xf32> -> vector<8x8xf32>
    %cst_215 = arith.constant 0.353553385 : f32
    %314 = vector.broadcast %cst_215 : f32 to vector<8x8xf32>
    %315 = arith.mulf %313, %314 : vector<8x8xf32>
    %316 = vector.broadcast %5 : vector<1x8xf32> to vector<8x8xf32>
    %317 = arith.addf %315, %316 : vector<8x8xf32>
    %cst_216 = arith.constant dense<0xFF800000> : vector<8xf32>
    %318 = vector.multi_reduction <maximumf>, %317, %cst_216 [1] : vector<8x8xf32> to vector<8xf32>
    %319 = vector.shape_cast %318 : vector<8xf32> to vector<8x1xf32>
    %320 = vector.broadcast %319 : vector<8x1xf32> to vector<8x8xf32>
    %321 = arith.subf %317, %320 : vector<8x8xf32>
    %322 = math.exp %321 : vector<8x8xf32>
    %cst_217 = arith.constant dense<0.000000e+00> : vector<8xf32>
    %323 = vector.multi_reduction <add>, %322, %cst_217 [1] : vector<8x8xf32> to vector<8xf32>
    %324 = vector.shape_cast %323 : vector<8xf32> to vector<8x1xf32>
    %325 = tpu.reciprocal %324 {approx = true} : vector<8x1xf32> -> vector<8x1xf32>
    %326 = vector.broadcast %325 : vector<8x1xf32> to vector<8x8xf32>
    %327 = arith.mulf %322, %326 : vector<8x8xf32>
    %328 = arith.truncf %327 : vector<8x8xf32> to vector<8x8xbf16>
    %329 = arith.truncf %310 : vector<8x8xf32> to vector<8x8xbf16>
    %cst_218 = arith.constant dense<0.000000e+00> : vector<8x8xf32>
    %330 = tpu.matmul %328, %329, %cst_218 {dimension_numbers = #tpu.dot_dimension_numbers<[1], [0], [0], [1], [0, 0, 1, 1], [], []>} : vector<8x8xbf16>, vector<8x8xbf16>, vector<8x8xf32> -> vector<8x8xf32>
    %c1_219 = arith.constant 1 : index
    %c1_220 = arith.constant 1 : index
    %c0_221 = arith.constant 0 : index
    %c0_222 = arith.constant 0 : index
    %331 = vector.load %arg5[%c1_219, %c1_220, %c0_221, %c0_222] : memref<2x4x32x8xbf16, #tpu.memory_space<vmem>>, vector<1x1x32x8xbf16>
    %332 = vector.shape_cast %331 : vector<1x1x32x8xbf16> to vector<32x8xbf16>
    %cst_223 = arith.constant dense<0.000000e+00> : vector<8x8xf32>
    %333 = tpu.matmul %289, %332, %cst_223 {dimension_numbers = #tpu.dot_dimension_numbers<[1], [0], [0], [1], [0, 0, 1, 1], [], []>} : vector<8x32xbf16>, vector<32x8xbf16>, vector<8x8xf32> -> vector<8x8xf32>
    %c1_224 = arith.constant 1 : index
    %c1_225 = arith.constant 1 : index
    %c0_226 = arith.constant 0 : index
    %c0_227 = arith.constant 0 : index
    %334 = vector.load %arg8[%c1_224, %c1_225, %c0_226, %c0_227] : memref<2x4x1x8xf32, #tpu.memory_space<vmem>>, vector<1x1x1x8xf32>
    %335 = vector.shape_cast %334 : vector<1x1x1x8xf32> to vector<1x8xf32>
    %336 = vector.broadcast %335 : vector<1x8xf32> to vector<8x8xf32>
    %337 = arith.addf %333, %336 : vector<8x8xf32>
    %c1_228 = arith.constant 1 : index
    %c1_229 = arith.constant 1 : index
    %c0_230 = arith.constant 0 : index
    %c0_231 = arith.constant 0 : index
    %338 = vector.load %arg6[%c1_228, %c1_229, %c0_230, %c0_231] : memref<2x4x32x8xbf16, #tpu.memory_space<vmem>>, vector<1x1x32x8xbf16>
    %339 = vector.shape_cast %338 : vector<1x1x32x8xbf16> to vector<32x8xbf16>
    %cst_232 = arith.constant dense<0.000000e+00> : vector<8x8xf32>
    %340 = tpu.matmul %289, %339, %cst_232 {dimension_numbers = #tpu.dot_dimension_numbers<[1], [0], [0], [1], [0, 0, 1, 1], [], []>} : vector<8x32xbf16>, vector<32x8xbf16>, vector<8x8xf32> -> vector<8x8xf32>
    %c1_233 = arith.constant 1 : index
    %c1_234 = arith.constant 1 : index
    %c0_235 = arith.constant 0 : index
    %c0_236 = arith.constant 0 : index
    %341 = vector.load %arg9[%c1_233, %c1_234, %c0_235, %c0_236] : memref<2x4x1x8xf32, #tpu.memory_space<vmem>>, vector<1x1x1x8xf32>
    %342 = vector.shape_cast %341 : vector<1x1x1x8xf32> to vector<1x8xf32>
    %343 = vector.broadcast %342 : vector<1x8xf32> to vector<8x8xf32>
    %344 = arith.addf %340, %343 : vector<8x8xf32>
    %c1_237 = arith.constant 1 : index
    %c1_238 = arith.constant 1 : index
    %c0_239 = arith.constant 0 : index
    %c0_240 = arith.constant 0 : index
    %345 = vector.load %arg7[%c1_237, %c1_238, %c0_239, %c0_240] : memref<2x4x32x8xbf16, #tpu.memory_space<vmem>>, vector<1x1x32x8xbf16>
    %346 = vector.shape_cast %345 : vector<1x1x32x8xbf16> to vector<32x8xbf16>
    %cst_241 = arith.constant dense<0.000000e+00> : vector<8x8xf32>
    %347 = tpu.matmul %289, %346, %cst_241 {dimension_numbers = #tpu.dot_dimension_numbers<[1], [0], [0], [1], [0, 0, 1, 1], [], []>} : vector<8x32xbf16>, vector<32x8xbf16>, vector<8x8xf32> -> vector<8x8xf32>
    %c1_242 = arith.constant 1 : index
    %c1_243 = arith.constant 1 : index
    %c0_244 = arith.constant 0 : index
    %c0_245 = arith.constant 0 : index
    %348 = vector.load %arg10[%c1_242, %c1_243, %c0_244, %c0_245] : memref<2x4x1x8xf32, #tpu.memory_space<vmem>>, vector<1x1x1x8xf32>
    %349 = vector.shape_cast %348 : vector<1x1x1x8xf32> to vector<1x8xf32>
    %350 = vector.broadcast %349 : vector<1x8xf32> to vector<8x8xf32>
    %351 = arith.addf %347, %350 : vector<8x8xf32>
    %352 = arith.truncf %337 : vector<8x8xf32> to vector<8x8xbf16>
    %353 = arith.truncf %344 : vector<8x8xf32> to vector<8x8xbf16>
    %cst_246 = arith.constant dense<0.000000e+00> : vector<8x8xf32>
    %354 = tpu.matmul %352, %353, %cst_246 {dimension_numbers = #tpu.dot_dimension_numbers<[1], [1], [0], [0], [0, 0, 1, 0], [], []>} : vector<8x8xbf16>, vector<8x8xbf16>, vector<8x8xf32> -> vector<8x8xf32>
    %cst_247 = arith.constant 0.353553385 : f32
    %355 = vector.broadcast %cst_247 : f32 to vector<8x8xf32>
    %356 = arith.mulf %354, %355 : vector<8x8xf32>
    %357 = vector.broadcast %5 : vector<1x8xf32> to vector<8x8xf32>
    %358 = arith.addf %356, %357 : vector<8x8xf32>
    %cst_248 = arith.constant dense<0xFF800000> : vector<8xf32>
    %359 = vector.multi_reduction <maximumf>, %358, %cst_248 [1] : vector<8x8xf32> to vector<8xf32>
    %360 = vector.shape_cast %359 : vector<8xf32> to vector<8x1xf32>
    %361 = vector.broadcast %360 : vector<8x1xf32> to vector<8x8xf32>
    %362 = arith.subf %358, %361 : vector<8x8xf32>
    %363 = math.exp %362 : vector<8x8xf32>
    %cst_249 = arith.constant dense<0.000000e+00> : vector<8xf32>
    %364 = vector.multi_reduction <add>, %363, %cst_249 [1] : vector<8x8xf32> to vector<8xf32>
    %365 = vector.shape_cast %364 : vector<8xf32> to vector<8x1xf32>
    %366 = tpu.reciprocal %365 {approx = true} : vector<8x1xf32> -> vector<8x1xf32>
    %367 = vector.broadcast %366 : vector<8x1xf32> to vector<8x8xf32>
    %368 = arith.mulf %363, %367 : vector<8x8xf32>
    %369 = arith.truncf %368 : vector<8x8xf32> to vector<8x8xbf16>
    %370 = arith.truncf %351 : vector<8x8xf32> to vector<8x8xbf16>
    %cst_250 = arith.constant dense<0.000000e+00> : vector<8x8xf32>
    %371 = tpu.matmul %369, %370, %cst_250 {dimension_numbers = #tpu.dot_dimension_numbers<[1], [0], [0], [1], [0, 0, 1, 1], [], []>} : vector<8x8xbf16>, vector<8x8xbf16>, vector<8x8xf32> -> vector<8x8xf32>
    %c1_251 = arith.constant 1 : index
    %c2_252 = arith.constant 2 : index
    %c0_253 = arith.constant 0 : index
    %c0_254 = arith.constant 0 : index
    %372 = vector.load %arg5[%c1_251, %c2_252, %c0_253, %c0_254] : memref<2x4x32x8xbf16, #tpu.memory_space<vmem>>, vector<1x1x32x8xbf16>
    %373 = vector.shape_cast %372 : vector<1x1x32x8xbf16> to vector<32x8xbf16>
    %cst_255 = arith.constant dense<0.000000e+00> : vector<8x8xf32>
    %374 = tpu.matmul %289, %373, %cst_255 {dimension_numbers = #tpu.dot_dimension_numbers<[1], [0], [0], [1], [0, 0, 1, 1], [], []>} : vector<8x32xbf16>, vector<32x8xbf16>, vector<8x8xf32> -> vector<8x8xf32>
    %c1_256 = arith.constant 1 : index
    %c2_257 = arith.constant 2 : index
    %c0_258 = arith.constant 0 : index
    %c0_259 = arith.constant 0 : index
    %375 = vector.load %arg8[%c1_256, %c2_257, %c0_258, %c0_259] : memref<2x4x1x8xf32, #tpu.memory_space<vmem>>, vector<1x1x1x8xf32>
    %376 = vector.shape_cast %375 : vector<1x1x1x8xf32> to vector<1x8xf32>
    %377 = vector.broadcast %376 : vector<1x8xf32> to vector<8x8xf32>
    %378 = arith.addf %374, %377 : vector<8x8xf32>
    %c1_260 = arith.constant 1 : index
    %c2_261 = arith.constant 2 : index
    %c0_262 = arith.constant 0 : index
    %c0_263 = arith.constant 0 : index
    %379 = vector.load %arg6[%c1_260, %c2_261, %c0_262, %c0_263] : memref<2x4x32x8xbf16, #tpu.memory_space<vmem>>, vector<1x1x32x8xbf16>
    %380 = vector.shape_cast %379 : vector<1x1x32x8xbf16> to vector<32x8xbf16>
    %cst_264 = arith.constant dense<0.000000e+00> : vector<8x8xf32>
    %381 = tpu.matmul %289, %380, %cst_264 {dimension_numbers = #tpu.dot_dimension_numbers<[1], [0], [0], [1], [0, 0, 1, 1], [], []>} : vector<8x32xbf16>, vector<32x8xbf16>, vector<8x8xf32> -> vector<8x8xf32>
    %c1_265 = arith.constant 1 : index
    %c2_266 = arith.constant 2 : index
    %c0_267 = arith.constant 0 : index
    %c0_268 = arith.constant 0 : index
    %382 = vector.load %arg9[%c1_265, %c2_266, %c0_267, %c0_268] : memref<2x4x1x8xf32, #tpu.memory_space<vmem>>, vector<1x1x1x8xf32>
    %383 = vector.shape_cast %382 : vector<1x1x1x8xf32> to vector<1x8xf32>
    %384 = vector.broadcast %383 : vector<1x8xf32> to vector<8x8xf32>
    %385 = arith.addf %381, %384 : vector<8x8xf32>
    %c1_269 = arith.constant 1 : index
    %c2_270 = arith.constant 2 : index
    %c0_271 = arith.constant 0 : index
    %c0_272 = arith.constant 0 : index
    %386 = vector.load %arg7[%c1_269, %c2_270, %c0_271, %c0_272] : memref<2x4x32x8xbf16, #tpu.memory_space<vmem>>, vector<1x1x32x8xbf16>
    %387 = vector.shape_cast %386 : vector<1x1x32x8xbf16> to vector<32x8xbf16>
    %cst_273 = arith.constant dense<0.000000e+00> : vector<8x8xf32>
    %388 = tpu.matmul %289, %387, %cst_273 {dimension_numbers = #tpu.dot_dimension_numbers<[1], [0], [0], [1], [0, 0, 1, 1], [], []>} : vector<8x32xbf16>, vector<32x8xbf16>, vector<8x8xf32> -> vector<8x8xf32>
    %c1_274 = arith.constant 1 : index
    %c2_275 = arith.constant 2 : index
    %c0_276 = arith.constant 0 : index
    %c0_277 = arith.constant 0 : index
    %389 = vector.load %arg10[%c1_274, %c2_275, %c0_276, %c0_277] : memref<2x4x1x8xf32, #tpu.memory_space<vmem>>, vector<1x1x1x8xf32>
    %390 = vector.shape_cast %389 : vector<1x1x1x8xf32> to vector<1x8xf32>
    %391 = vector.broadcast %390 : vector<1x8xf32> to vector<8x8xf32>
    %392 = arith.addf %388, %391 : vector<8x8xf32>
    %393 = arith.truncf %378 : vector<8x8xf32> to vector<8x8xbf16>
    %394 = arith.truncf %385 : vector<8x8xf32> to vector<8x8xbf16>
    %cst_278 = arith.constant dense<0.000000e+00> : vector<8x8xf32>
    %395 = tpu.matmul %393, %394, %cst_278 {dimension_numbers = #tpu.dot_dimension_numbers<[1], [1], [0], [0], [0, 0, 1, 0], [], []>} : vector<8x8xbf16>, vector<8x8xbf16>, vector<8x8xf32> -> vector<8x8xf32>
    %cst_279 = arith.constant 0.353553385 : f32
    %396 = vector.broadcast %cst_279 : f32 to vector<8x8xf32>
    %397 = arith.mulf %395, %396 : vector<8x8xf32>
    %398 = vector.broadcast %5 : vector<1x8xf32> to vector<8x8xf32>
    %399 = arith.addf %397, %398 : vector<8x8xf32>
    %cst_280 = arith.constant dense<0xFF800000> : vector<8xf32>
    %400 = vector.multi_reduction <maximumf>, %399, %cst_280 [1] : vector<8x8xf32> to vector<8xf32>
    %401 = vector.shape_cast %400 : vector<8xf32> to vector<8x1xf32>
    %402 = vector.broadcast %401 : vector<8x1xf32> to vector<8x8xf32>
    %403 = arith.subf %399, %402 : vector<8x8xf32>
    %404 = math.exp %403 : vector<8x8xf32>
    %cst_281 = arith.constant dense<0.000000e+00> : vector<8xf32>
    %405 = vector.multi_reduction <add>, %404, %cst_281 [1] : vector<8x8xf32> to vector<8xf32>
    %406 = vector.shape_cast %405 : vector<8xf32> to vector<8x1xf32>
    %407 = tpu.reciprocal %406 {approx = true} : vector<8x1xf32> -> vector<8x1xf32>
    %408 = vector.broadcast %407 : vector<8x1xf32> to vector<8x8xf32>
    %409 = arith.mulf %404, %408 : vector<8x8xf32>
    %410 = arith.truncf %409 : vector<8x8xf32> to vector<8x8xbf16>
    %411 = arith.truncf %392 : vector<8x8xf32> to vector<8x8xbf16>
    %cst_282 = arith.constant dense<0.000000e+00> : vector<8x8xf32>
    %412 = tpu.matmul %410, %411, %cst_282 {dimension_numbers = #tpu.dot_dimension_numbers<[1], [0], [0], [1], [0, 0, 1, 1], [], []>} : vector<8x8xbf16>, vector<8x8xbf16>, vector<8x8xf32> -> vector<8x8xf32>
    %c1_283 = arith.constant 1 : index
    %c3_284 = arith.constant 3 : index
    %c0_285 = arith.constant 0 : index
    %c0_286 = arith.constant 0 : index
    %413 = vector.load %arg5[%c1_283, %c3_284, %c0_285, %c0_286] : memref<2x4x32x8xbf16, #tpu.memory_space<vmem>>, vector<1x1x32x8xbf16>
    %414 = vector.shape_cast %413 : vector<1x1x32x8xbf16> to vector<32x8xbf16>
    %cst_287 = arith.constant dense<0.000000e+00> : vector<8x8xf32>
    %415 = tpu.matmul %289, %414, %cst_287 {dimension_numbers = #tpu.dot_dimension_numbers<[1], [0], [0], [1], [0, 0, 1, 1], [], []>} : vector<8x32xbf16>, vector<32x8xbf16>, vector<8x8xf32> -> vector<8x8xf32>
    %c1_288 = arith.constant 1 : index
    %c3_289 = arith.constant 3 : index
    %c0_290 = arith.constant 0 : index
    %c0_291 = arith.constant 0 : index
    %416 = vector.load %arg8[%c1_288, %c3_289, %c0_290, %c0_291] : memref<2x4x1x8xf32, #tpu.memory_space<vmem>>, vector<1x1x1x8xf32>
    %417 = vector.shape_cast %416 : vector<1x1x1x8xf32> to vector<1x8xf32>
    %418 = vector.broadcast %417 : vector<1x8xf32> to vector<8x8xf32>
    %419 = arith.addf %415, %418 : vector<8x8xf32>
    %c1_292 = arith.constant 1 : index
    %c3_293 = arith.constant 3 : index
    %c0_294 = arith.constant 0 : index
    %c0_295 = arith.constant 0 : index
    %420 = vector.load %arg6[%c1_292, %c3_293, %c0_294, %c0_295] : memref<2x4x32x8xbf16, #tpu.memory_space<vmem>>, vector<1x1x32x8xbf16>
    %421 = vector.shape_cast %420 : vector<1x1x32x8xbf16> to vector<32x8xbf16>
    %cst_296 = arith.constant dense<0.000000e+00> : vector<8x8xf32>
    %422 = tpu.matmul %289, %421, %cst_296 {dimension_numbers = #tpu.dot_dimension_numbers<[1], [0], [0], [1], [0, 0, 1, 1], [], []>} : vector<8x32xbf16>, vector<32x8xbf16>, vector<8x8xf32> -> vector<8x8xf32>
    %c1_297 = arith.constant 1 : index
    %c3_298 = arith.constant 3 : index
    %c0_299 = arith.constant 0 : index
    %c0_300 = arith.constant 0 : index
    %423 = vector.load %arg9[%c1_297, %c3_298, %c0_299, %c0_300] : memref<2x4x1x8xf32, #tpu.memory_space<vmem>>, vector<1x1x1x8xf32>
    %424 = vector.shape_cast %423 : vector<1x1x1x8xf32> to vector<1x8xf32>
    %425 = vector.broadcast %424 : vector<1x8xf32> to vector<8x8xf32>
    %426 = arith.addf %422, %425 : vector<8x8xf32>
    %c1_301 = arith.constant 1 : index
    %c3_302 = arith.constant 3 : index
    %c0_303 = arith.constant 0 : index
    %c0_304 = arith.constant 0 : index
    %427 = vector.load %arg7[%c1_301, %c3_302, %c0_303, %c0_304] : memref<2x4x32x8xbf16, #tpu.memory_space<vmem>>, vector<1x1x32x8xbf16>
    %428 = vector.shape_cast %427 : vector<1x1x32x8xbf16> to vector<32x8xbf16>
    %cst_305 = arith.constant dense<0.000000e+00> : vector<8x8xf32>
    %429 = tpu.matmul %289, %428, %cst_305 {dimension_numbers = #tpu.dot_dimension_numbers<[1], [0], [0], [1], [0, 0, 1, 1], [], []>} : vector<8x32xbf16>, vector<32x8xbf16>, vector<8x8xf32> -> vector<8x8xf32>
    %c1_306 = arith.constant 1 : index
    %c3_307 = arith.constant 3 : index
    %c0_308 = arith.constant 0 : index
    %c0_309 = arith.constant 0 : index
    %430 = vector.load %arg10[%c1_306, %c3_307, %c0_308, %c0_309] : memref<2x4x1x8xf32, #tpu.memory_space<vmem>>, vector<1x1x1x8xf32>
    %431 = vector.shape_cast %430 : vector<1x1x1x8xf32> to vector<1x8xf32>
    %432 = vector.broadcast %431 : vector<1x8xf32> to vector<8x8xf32>
    %433 = arith.addf %429, %432 : vector<8x8xf32>
    %434 = arith.truncf %419 : vector<8x8xf32> to vector<8x8xbf16>
    %435 = arith.truncf %426 : vector<8x8xf32> to vector<8x8xbf16>
    %cst_310 = arith.constant dense<0.000000e+00> : vector<8x8xf32>
    %436 = tpu.matmul %434, %435, %cst_310 {dimension_numbers = #tpu.dot_dimension_numbers<[1], [1], [0], [0], [0, 0, 1, 0], [], []>} : vector<8x8xbf16>, vector<8x8xbf16>, vector<8x8xf32> -> vector<8x8xf32>
    %cst_311 = arith.constant 0.353553385 : f32
    %437 = vector.broadcast %cst_311 : f32 to vector<8x8xf32>
    %438 = arith.mulf %436, %437 : vector<8x8xf32>
    %439 = vector.broadcast %5 : vector<1x8xf32> to vector<8x8xf32>
    %440 = arith.addf %438, %439 : vector<8x8xf32>
    %cst_312 = arith.constant dense<0xFF800000> : vector<8xf32>
    %441 = vector.multi_reduction <maximumf>, %440, %cst_312 [1] : vector<8x8xf32> to vector<8xf32>
    %442 = vector.shape_cast %441 : vector<8xf32> to vector<8x1xf32>
    %443 = vector.broadcast %442 : vector<8x1xf32> to vector<8x8xf32>
    %444 = arith.subf %440, %443 : vector<8x8xf32>
    %445 = math.exp %444 : vector<8x8xf32>
    %cst_313 = arith.constant dense<0.000000e+00> : vector<8xf32>
    %446 = vector.multi_reduction <add>, %445, %cst_313 [1] : vector<8x8xf32> to vector<8xf32>
    %447 = vector.shape_cast %446 : vector<8xf32> to vector<8x1xf32>
    %448 = tpu.reciprocal %447 {approx = true} : vector<8x1xf32> -> vector<8x1xf32>
    %449 = vector.broadcast %448 : vector<8x1xf32> to vector<8x8xf32>
    %450 = arith.mulf %445, %449 : vector<8x8xf32>
    %451 = arith.truncf %450 : vector<8x8xf32> to vector<8x8xbf16>
    %452 = arith.truncf %433 : vector<8x8xf32> to vector<8x8xbf16>
    %cst_314 = arith.constant dense<0.000000e+00> : vector<8x8xf32>
    %453 = tpu.matmul %451, %452, %cst_314 {dimension_numbers = #tpu.dot_dimension_numbers<[1], [0], [0], [1], [0, 0, 1, 1], [], []>} : vector<8x8xbf16>, vector<8x8xbf16>, vector<8x8xf32> -> vector<8x8xf32>
    %454 = tpu.concatenate %330, %371, %412, %453 in 1 : vector<8x8xf32>, vector<8x8xf32>, vector<8x8xf32>, vector<8x8xf32> -> vector<8x32xf32>
    %455 = arith.truncf %454 : vector<8x32xf32> to vector<8x32xbf16>
    %c1_315 = arith.constant 1 : index
    %c0_316 = arith.constant 0 : index
    %c0_317 = arith.constant 0 : index
    %456 = vector.load %arg11[%c1_315, %c0_316, %c0_317] : memref<2x32x32xbf16, #tpu.memory_space<vmem>>, vector<1x32x32xbf16>
    %457 = vector.shape_cast %456 : vector<1x32x32xbf16> to vector<32x32xbf16>
    %cst_318 = arith.constant dense<0.000000e+00> : vector<8x32xf32>
    %458 = tpu.matmul %455, %457, %cst_318 {dimension_numbers = #tpu.dot_dimension_numbers<[1], [0], [0], [1], [0, 0, 1, 1], [], []>} : vector<8x32xbf16>, vector<32x32xbf16>, vector<8x32xf32> -> vector<8x32xf32>
    %c1_319 = arith.constant 1 : index
    %c0_320 = arith.constant 0 : index
    %c0_321 = arith.constant 0 : index
    %459 = vector.load %arg12[%c1_319, %c0_320, %c0_321] : memref<2x1x32xf32, #tpu.memory_space<vmem>>, vector<1x1x32xf32>
    %460 = vector.shape_cast %459 : vector<1x1x32xf32> to vector<1x32xf32>
    %461 = vector.broadcast %460 : vector<1x32xf32> to vector<8x32xf32>
    %462 = arith.addf %458, %461 : vector<8x32xf32>
    %463 = arith.addf %462, %288 : vector<8x32xf32>
    %c1_322 = arith.constant 1 : index
    %c0_323 = arith.constant 0 : index
    %c0_324 = arith.constant 0 : index
    %464 = vector.load %arg13[%c1_322, %c0_323, %c0_324] : memref<2x1x32xf32, #tpu.memory_space<vmem>>, vector<1x1x32xf32>
    %465 = vector.shape_cast %464 : vector<1x1x32xf32> to vector<1x32xf32>
    %c1_325 = arith.constant 1 : index
    %c0_326 = arith.constant 0 : index
    %c0_327 = arith.constant 0 : index
    %466 = vector.load %arg14[%c1_325, %c0_326, %c0_327] : memref<2x1x32xf32, #tpu.memory_space<vmem>>, vector<1x1x32xf32>
    %467 = vector.shape_cast %466 : vector<1x1x32xf32> to vector<1x32xf32>
    %cst_328 = arith.constant dense<0.000000e+00> : vector<8xf32>
    %468 = vector.multi_reduction <add>, %463, %cst_328 [1] : vector<8x32xf32> to vector<8xf32>
    %469 = vector.shape_cast %468 : vector<8xf32> to vector<8x1xf32>
    %cst_329 = arith.constant 3.200000e+01 : f32
    %470 = vector.broadcast %cst_329 : f32 to vector<8x1xf32>
    %471 = arith.divf %469, %470 : vector<8x1xf32>
    %472 = vector.broadcast %471 : vector<8x1xf32> to vector<8x32xf32>
    %473 = arith.subf %463, %472 : vector<8x32xf32>
    %474 = arith.mulf %473, %473 : vector<8x32xf32>
    %cst_330 = arith.constant dense<0.000000e+00> : vector<8xf32>
    %475 = vector.multi_reduction <add>, %474, %cst_330 [1] : vector<8x32xf32> to vector<8xf32>
    %476 = vector.shape_cast %475 : vector<8xf32> to vector<8x1xf32>
    %cst_331 = arith.constant 3.200000e+01 : f32
    %477 = vector.broadcast %cst_331 : f32 to vector<8x1xf32>
    %478 = arith.divf %476, %477 : vector<8x1xf32>
    %479 = vector.broadcast %471 : vector<8x1xf32> to vector<8x32xf32>
    %480 = arith.subf %463, %479 : vector<8x32xf32>
    %cst_332 = arith.constant 9.99999996E-13 : f32
    %481 = vector.broadcast %cst_332 : f32 to vector<8x1xf32>
    %482 = arith.addf %478, %481 : vector<8x1xf32>
    %483 = math.rsqrt %482 : vector<8x1xf32>
    %484 = vector.broadcast %483 : vector<8x1xf32> to vector<8x32xf32>
    %485 = arith.mulf %480, %484 : vector<8x32xf32>
    %486 = vector.broadcast %465 : vector<1x32xf32> to vector<8x32xf32>
    %487 = arith.mulf %485, %486 : vector<8x32xf32>
    %488 = vector.broadcast %467 : vector<1x32xf32> to vector<8x32xf32>
    %489 = arith.addf %487, %488 : vector<8x32xf32>
    %490 = arith.truncf %489 : vector<8x32xf32> to vector<8x32xbf16>
    %c1_333 = arith.constant 1 : index
    %c0_334 = arith.constant 0 : index
    %c0_335 = arith.constant 0 : index
    %491 = vector.load %arg15[%c1_333, %c0_334, %c0_335] : memref<2x32x64xbf16, #tpu.memory_space<vmem>>, vector<1x32x64xbf16>
    %492 = vector.shape_cast %491 : vector<1x32x64xbf16> to vector<32x64xbf16>
    %cst_336 = arith.constant dense<0.000000e+00> : vector<8x64xf32>
    %493 = tpu.matmul %490, %492, %cst_336 {dimension_numbers = #tpu.dot_dimension_numbers<[1], [0], [0], [1], [0, 0, 1, 1], [], []>} : vector<8x32xbf16>, vector<32x64xbf16>, vector<8x64xf32> -> vector<8x64xf32>
    %c1_337 = arith.constant 1 : index
    %c0_338 = arith.constant 0 : index
    %c0_339 = arith.constant 0 : index
    %494 = vector.load %arg16[%c1_337, %c0_338, %c0_339] : memref<2x1x64xf32, #tpu.memory_space<vmem>>, vector<1x1x64xf32>
    %495 = vector.shape_cast %494 : vector<1x1x64xf32> to vector<1x64xf32>
    %496 = vector.broadcast %495 : vector<1x64xf32> to vector<8x64xf32>
    %497 = arith.addf %493, %496 : vector<8x64xf32>
    %cst_340 = arith.constant 5.000000e-01 : f32
    %498 = vector.broadcast %cst_340 : f32 to vector<8x64xf32>
    %499 = arith.mulf %498, %497 : vector<8x64xf32>
    %cst_341 = arith.constant 4.471500e-02 : f32
    %500 = vector.broadcast %cst_341 : f32 to vector<8x64xf32>
    %501 = arith.mulf %500, %497 : vector<8x64xf32>
    %502 = arith.mulf %501, %497 : vector<8x64xf32>
    %503 = arith.mulf %502, %497 : vector<8x64xf32>
    %504 = arith.addf %497, %503 : vector<8x64xf32>
    %cst_342 = arith.constant 0.797884583 : f32
    %505 = vector.broadcast %cst_342 : f32 to vector<8x64xf32>
    %506 = arith.mulf %505, %504 : vector<8x64xf32>
    %507 = math.tanh %506 : vector<8x64xf32>
    %cst_343 = arith.constant 1.000000e+00 : f32
    %508 = vector.broadcast %cst_343 : f32 to vector<8x64xf32>
    %509 = arith.addf %508, %507 : vector<8x64xf32>
    %510 = arith.mulf %499, %509 : vector<8x64xf32>
    %511 = arith.truncf %510 : vector<8x64xf32> to vector<8x64xbf16>
    %c1_344 = arith.constant 1 : index
    %c0_345 = arith.constant 0 : index
    %c0_346 = arith.constant 0 : index
    %512 = vector.load %arg17[%c1_344, %c0_345, %c0_346] : memref<2x64x32xbf16, #tpu.memory_space<vmem>>, vector<1x64x32xbf16>
    %513 = vector.shape_cast %512 : vector<1x64x32xbf16> to vector<64x32xbf16>
    %cst_347 = arith.constant dense<0.000000e+00> : vector<8x32xf32>
    %514 = tpu.matmul %511, %513, %cst_347 {dimension_numbers = #tpu.dot_dimension_numbers<[1], [0], [0], [1], [0, 0, 1, 1], [], []>} : vector<8x64xbf16>, vector<64x32xbf16>, vector<8x32xf32> -> vector<8x32xf32>
    %c1_348 = arith.constant 1 : index
    %c0_349 = arith.constant 0 : index
    %c0_350 = arith.constant 0 : index
    %515 = vector.load %arg18[%c1_348, %c0_349, %c0_350] : memref<2x1x32xf32, #tpu.memory_space<vmem>>, vector<1x1x32xf32>
    %516 = vector.shape_cast %515 : vector<1x1x32xf32> to vector<1x32xf32>
    %517 = vector.broadcast %516 : vector<1x32xf32> to vector<8x32xf32>
    %518 = arith.addf %514, %517 : vector<8x32xf32>
    %519 = arith.addf %518, %489 : vector<8x32xf32>
    %c1_351 = arith.constant 1 : index
    %c0_352 = arith.constant 0 : index
    %c0_353 = arith.constant 0 : index
    %520 = vector.load %arg19[%c1_351, %c0_352, %c0_353] : memref<2x1x32xf32, #tpu.memory_space<vmem>>, vector<1x1x32xf32>
    %521 = vector.shape_cast %520 : vector<1x1x32xf32> to vector<1x32xf32>
    %c1_354 = arith.constant 1 : index
    %c0_355 = arith.constant 0 : index
    %c0_356 = arith.constant 0 : index
    %522 = vector.load %arg20[%c1_354, %c0_355, %c0_356] : memref<2x1x32xf32, #tpu.memory_space<vmem>>, vector<1x1x32xf32>
    %523 = vector.shape_cast %522 : vector<1x1x32xf32> to vector<1x32xf32>
    %cst_357 = arith.constant dense<0.000000e+00> : vector<8xf32>
    %524 = vector.multi_reduction <add>, %519, %cst_357 [1] : vector<8x32xf32> to vector<8xf32>
    %525 = vector.shape_cast %524 : vector<8xf32> to vector<8x1xf32>
    %cst_358 = arith.constant 3.200000e+01 : f32
    %526 = vector.broadcast %cst_358 : f32 to vector<8x1xf32>
    %527 = arith.divf %525, %526 : vector<8x1xf32>
    %528 = vector.broadcast %527 : vector<8x1xf32> to vector<8x32xf32>
    %529 = arith.subf %519, %528 : vector<8x32xf32>
    %530 = arith.mulf %529, %529 : vector<8x32xf32>
    %cst_359 = arith.constant dense<0.000000e+00> : vector<8xf32>
    %531 = vector.multi_reduction <add>, %530, %cst_359 [1] : vector<8x32xf32> to vector<8xf32>
    %532 = vector.shape_cast %531 : vector<8xf32> to vector<8x1xf32>
    %cst_360 = arith.constant 3.200000e+01 : f32
    %533 = vector.broadcast %cst_360 : f32 to vector<8x1xf32>
    %534 = arith.divf %532, %533 : vector<8x1xf32>
    %535 = vector.broadcast %527 : vector<8x1xf32> to vector<8x32xf32>
    %536 = arith.subf %519, %535 : vector<8x32xf32>
    %cst_361 = arith.constant 9.99999996E-13 : f32
    %537 = vector.broadcast %cst_361 : f32 to vector<8x1xf32>
    %538 = arith.addf %534, %537 : vector<8x1xf32>
    %539 = math.rsqrt %538 : vector<8x1xf32>
    %540 = vector.broadcast %539 : vector<8x1xf32> to vector<8x32xf32>
    %541 = arith.mulf %536, %540 : vector<8x32xf32>
    %542 = vector.broadcast %521 : vector<1x32xf32> to vector<8x32xf32>
    %543 = arith.mulf %541, %542 : vector<8x32xf32>
    %544 = vector.broadcast %523 : vector<1x32xf32> to vector<8x32xf32>
    %545 = arith.addf %543, %544 : vector<8x32xf32>
    %546 = arith.truncf %545 : vector<8x32xf32> to vector<8x32xbf16>
    %c0_362 = arith.constant 0 : index
    %c0_363 = arith.constant 0 : index
    %547 = vector.load %arg21[%c0_362, %c0_363] : memref<32x32xbf16, #tpu.memory_space<vmem>>, vector<32x32xbf16>
    %cst_364 = arith.constant dense<0.000000e+00> : vector<8x32xf32>
    %548 = tpu.matmul %546, %547, %cst_364 {dimension_numbers = #tpu.dot_dimension_numbers<[1], [0], [0], [1], [0, 0, 1, 1], [], []>} : vector<8x32xbf16>, vector<32x32xbf16>, vector<8x32xf32> -> vector<8x32xf32>
    %c0_365 = arith.constant 0 : index
    %c0_366 = arith.constant 0 : index
    %549 = vector.load %arg22[%c0_365, %c0_366] : memref<1x32xf32, #tpu.memory_space<vmem>>, vector<1x32xf32>
    %550 = vector.broadcast %549 : vector<1x32xf32> to vector<8x32xf32>
    %551 = arith.addf %548, %550 : vector<8x32xf32>
    %552 = math.tanh %551 : vector<8x32xf32>
    %553 = arith.truncf %552 : vector<8x32xf32> to vector<8x32xbf16>
    %c0_367 = arith.constant 0 : index
    %c0_368 = arith.constant 0 : index
    %554 = vector.load %arg23[%c0_367, %c0_368] : memref<32x128xbf16, #tpu.memory_space<vmem>>, vector<32x128xbf16>
    %cst_369 = arith.constant dense<0.000000e+00> : vector<8x128xf32>
    %555 = tpu.matmul %553, %554, %cst_369 {dimension_numbers = #tpu.dot_dimension_numbers<[1], [0], [0], [1], [0, 0, 1, 1], [], []>} : vector<8x32xbf16>, vector<32x128xbf16>, vector<8x128xf32> -> vector<8x128xf32>
    %c0_370 = arith.constant 0 : index
    %c0_371 = arith.constant 0 : index
    %556 = vector.load %arg24[%c0_370, %c0_371] : memref<1x128xf32, #tpu.memory_space<vmem>>, vector<1x128xf32>
    %557 = vector.broadcast %556 : vector<1x128xf32> to vector<8x128xf32>
    %558 = arith.addf %555, %557 : vector<8x128xf32>
    %c0_372 = arith.constant 0 : index
    %c0_373 = arith.constant 0 : index
    %c0_374 = arith.constant 0 : index
    %559 = vector.load %arg25[%c0_372, %c0_373, %c0_374] : memref<1x8x128xf32, #tpu.memory_space<vmem>>, vector<1x8x128xf32>
    %560 = vector.shape_cast %559 : vector<1x8x128xf32> to vector<8x128xf32>
    %561 = vector.shape_cast %558 : vector<8x128xf32> to vector<1x8x128xf32>
    tpu.vector_store %arg25[%c0_372, %c0_373, %c0_374], %561 {strides = array<i32>} : memref<1x8x128xf32, #tpu.memory_space<vmem>>, vector<1x8x128xf32>,
    return
  }
  func.func @transform_0(%arg0: i32) -> (i32, i32, i32) {
    %c0_i32 = arith.constant 0 : i32
    %c0_i32_0 = arith.constant 0 : i32
    %c0_i32_1 = arith.constant 0 : i32
    return %arg0, %c0_i32, %c0_i32_0 : i32, i32, i32
  }
  func.func @transform_1(%arg0: i32) -> (i32, i32, i32) {
    %c0_i32 = arith.constant 0 : i32
    %c0_i32_0 = arith.constant 0 : i32
    %c0_i32_1 = arith.constant 0 : i32
    return %arg0, %c0_i32, %c0_i32_0 : i32, i32, i32
  }
  func.func @transform_2(%arg0: i32) -> (i32, i32) {
    %c0_i32 = arith.constant 0 : i32
    %c0_i32_0 = arith.constant 0 : i32
    %c0_i32_1 = arith.constant 0 : i32
    return %c0_i32, %c0_i32_0 : i32, i32
  }
  func.func @transform_3(%arg0: i32) -> (i32, i32) {
    %c0_i32 = arith.constant 0 : i32
    %c0_i32_0 = arith.constant 0 : i32
    %c0_i32_1 = arith.constant 0 : i32
    return %c0_i32, %c0_i32_0 : i32, i32
  }
  func.func @transform_4(%arg0: i32) -> (i32, i32, i32, i32) {
    %c0_i32 = arith.constant 0 : i32
    %c0_i32_0 = arith.constant 0 : i32
    %c0_i32_1 = arith.constant 0 : i32
    %c0_i32_2 = arith.constant 0 : i32
    %c0_i32_3 = arith.constant 0 : i32
    return %c0_i32, %c0_i32_0, %c0_i32_1, %c0_i32_2 : i32, i32, i32, i32
  }
  func.func @transform_5(%arg0: i32) -> (i32, i32, i32, i32) {
    %c0_i32 = arith.constant 0 : i32
    %c0_i32_0 = arith.constant 0 : i32
    %c0_i32_1 = arith.constant 0 : i32
    %c0_i32_2 = arith.constant 0 : i32
    %c0_i32_3 = arith.constant 0 : i32
    return %c0_i32, %c0_i32_0, %c0_i32_1, %c0_i32_2 : i32, i32, i32, i32
  }
  func.func @transform_6(%arg0: i32) -> (i32, i32, i32, i32) {
    %c0_i32 = arith.constant 0 : i32
    %c0_i32_0 = arith.constant 0 : i32
    %c0_i32_1 = arith.constant 0 : i32
    %c0_i32_2 = arith.constant 0 : i32
    %c0_i32_3 = arith.constant 0 : i32
    return %c0_i32, %c0_i32_0, %c0_i32_1, %c0_i32_2 : i32, i32, i32, i32
  }
  func.func @transform_7(%arg0: i32) -> (i32, i32, i32, i32) {
    %c0_i32 = arith.constant 0 : i32
    %c0_i32_0 = arith.constant 0 : i32
    %c0_i32_1 = arith.constant 0 : i32
    %c0_i32_2 = arith.constant 0 : i32
    %c0_i32_3 = arith.constant 0 : i32
    return %c0_i32, %c0_i32_0, %c0_i32_1, %c0_i32_2 : i32, i32, i32, i32
  }
  func.func @transform_8(%arg0: i32) -> (i32, i32, i32, i32) {
    %c0_i32 = arith.constant 0 : i32
    %c0_i32_0 = arith.constant 0 : i32
    %c0_i32_1 = arith.constant 0 : i32
    %c0_i32_2 = arith.constant 0 : i32
    %c0_i32_3 = arith.constant 0 : i32
    return %c0_i32, %c0_i32_0, %c0_i32_1, %c0_i32_2 : i32, i32, i32, i32
  }
  func.func @transform_9(%arg0: i32) -> (i32, i32, i32, i32) {
    %c0_i32 = arith.constant 0 : i32
    %c0_i32_0 = arith.constant 0 : i32
    %c0_i32_1 = arith.constant 0 : i32
    %c0_i32_2 = arith.constant 0 : i32
    %c0_i32_3 = arith.constant 0 : i32
    return %c0_i32, %c0_i32_0, %c0_i32_1, %c0_i32_2 : i32, i32, i32, i32
  }
  func.func @transform_10(%arg0: i32) -> (i32, i32, i32) {
    %c0_i32 = arith.constant 0 : i32
    %c0_i32_0 = arith.constant 0 : i32
    %c0_i32_1 = arith.constant 0 : i32
    %c0_i32_2 = arith.constant 0 : i32
    return %c0_i32, %c0_i32_0, %c0_i32_1 : i32, i32, i32
  }
  func.func @transform_11(%arg0: i32) -> (i32, i32, i32) {
    %c0_i32 = arith.constant 0 : i32
    %c0_i32_0 = arith.constant 0 : i32
    %c0_i32_1 = arith.constant 0 : i32
    %c0_i32_2 = arith.constant 0 : i32
    return %c0_i32, %c0_i32_0, %c0_i32_1 : i32, i32, i32
  }
  func.func @transform_12(%arg0: i32) -> (i32, i32, i32) {
    %c0_i32 = arith.constant 0 : i32
    %c0_i32_0 = arith.constant 0 : i32
    %c0_i32_1 = arith.constant 0 : i32
    %c0_i32_2 = arith.constant 0 : i32
    return %c0_i32, %c0_i32_0, %c0_i32_1 : i32, i32, i32
  }
  func.func @transform_13(%arg0: i32) -> (i32, i32, i32) {
    %c0_i32 = arith.constant 0 : i32
    %c0_i32_0 = arith.constant 0 : i32
    %c0_i32_1 = arith.constant 0 : i32
    %c0_i32_2 = arith.constant 0 : i32
    return %c0_i32, %c0_i32_0, %c0_i32_1 : i32, i32, i32
  }
  func.func @transform_14(%arg0: i32) -> (i32, i32, i32) {
    %c0_i32 = arith.constant 0 : i32
    %c0_i32_0 = arith.constant 0 : i32
    %c0_i32_1 = arith.constant 0 : i32
    %c0_i32_2 = arith.constant 0 : i32
    return %c0_i32, %c0_i32_0, %c0_i32_1 : i32, i32, i32
  }
  func.func @transform_15(%arg0: i32) -> (i32, i32, i32) {
    %c0_i32 = arith.constant 0 : i32
    %c0_i32_0 = arith.constant 0 : i32
    %c0_i32_1 = arith.constant 0 : i32
    %c0_i32_2 = arith.constant 0 : i32
    return %c0_i32, %c0_i32_0, %c0_i32_1 : i32, i32, i32
  }
  func.func @transform_16(%arg0: i32) -> (i32, i32, i32) {
    %c0_i32 = arith.constant 0 : i32
    %c0_i32_0 = arith.constant 0 : i32
    %c0_i32_1 = arith.constant 0 : i32
    %c0_i32_2 = arith.constant 0 : i32
    return %c0_i32, %c0_i32_0, %c0_i32_1 : i32, i32, i32
  }
  func.func @transform_17(%arg0: i32) -> (i32, i32, i32) {
    %c0_i32 = arith.constant 0 : i32
    %c0_i32_0 = arith.constant 0 : i32
    %c0_i32_1 = arith.constant 0 : i32
    %c0_i32_2 = arith.constant 0 : i32
    return %c0_i32, %c0_i32_0, %c0_i32_1 : i32, i32, i32
  }
  func.func @transform_18(%arg0: i32) -> (i32, i32, i32) {
    %c0_i32 = arith.constant 0 : i32
    %c0_i32_0 = arith.constant 0 : i32
    %c0_i32_1 = arith.constant 0 : i32
    %c0_i32_2 = arith.constant 0 : i32
    return %c0_i32, %c0_i32_0, %c0_i32_1 : i32, i32, i32
  }
  func.func @transform_19(%arg0: i32) -> (i32, i32, i32) {
    %c0_i32 = arith.constant 0 : i32
    %c0_i32_0 = arith.constant 0 : i32
    %c0_i32_1 = arith.constant 0 : i32
    %c0_i32_2 = arith.constant 0 : i32
    return %c0_i32, %c0_i32_0, %c0_i32_1 : i32, i32, i32
  }
  func.func @transform_20(%arg0: i32) -> (i32, i32) {
    %c0_i32 = arith.constant 0 : i32
    %c0_i32_0 = arith.constant 0 : i32
    %c0_i32_1 = arith.constant 0 : i32
    return %c0_i32, %c0_i32_0 : i32, i32
  }
  func.func @transform_21(%arg0: i32) -> (i32, i32) {
    %c0_i32 = arith.constant 0 : i32
    %c0_i32_0 = arith.constant 0 : i32
    %c0_i32_1 = arith.constant 0 : i32
    return %c0_i32, %c0_i32_0 : i32, i32
  }
  func.func @transform_22(%arg0: i32) -> (i32, i32) {
    %c0_i32 = arith.constant 0 : i32
    %c0_i32_0 = arith.constant 0 : i32
    %c0_i32_1 = arith.constant 0 : i32
    return %c0_i32, %c0_i32_0 : i32, i32
  }
  func.func @transform_23(%arg0: i32) -> (i32, i32) {
    %c0_i32 = arith.constant 0 : i32
    %c0_i32_0 = arith.constant 0 : i32
    %c0_i32_1 = arith.constant 0 : i32
    return %c0_i32, %c0_i32_0 : i32, i32
  }
  func.func @transform_24(%arg0: i32) -> (i32, i32, i32) {
    %c0_i32 = arith.constant 0 : i32
    %c0_i32_0 = arith.constant 0 : i32
    %c0_i32_1 = arith.constant 0 : i32
    return %arg0, %c0_i32, %c0_i32_0 : i32, i32, i32
  }
}

</mosaic_0001>

<llo_original>
// kernel: multilabel_forward.1
$region0: #{multilabel_forward.1}
  #allocation0 [shape = 'u32[]', space=smem, size = 0x4, offset = 0x4, fixed_abs, tag = 'smem constant byte address 0x4 - core index']
  #allocation1 [shape = 'u32[72,128]{1,0:T(1,128)}', space=vmem, size = 0x9000, scoped, tag = 'internal scratch']
  %s0 = inlined_call_operand.vmem [shape: f32[2,8,32], index: 0, kind: input, shape index: {}]
  %s1 = inlined_call_operand.vmem [shape: f32[2,1,8], index: 1, kind: input, shape index: {}]
  %s2 = inlined_call_operand.vmem [shape: f32[1,32], index: 2, kind: input, shape index: {}]
  %s3 = inlined_call_operand.vmem [shape: f32[1,32], index: 3, kind: input, shape index: {}, may-alias: {3,21}]
  %s4 = inlined_call_operand.hbm [shape: bf16[2,4,32,8], index: 4, kind: input, shape index: {}]
  %s5 = inlined_call_operand.vmem [shape: bf16[2,4,32,8], index: 5, kind: input, shape index: {}]
  %s6 = inlined_call_operand.vmem [shape: bf16[2,4,32,8], index: 6, kind: input, shape index: {}]
  %s7 = inlined_call_operand.vmem [shape: f32[2,4,1,8], index: 7, kind: input, shape index: {}, may-alias: {7,8,9}]
  %s8 = inlined_call_operand.vmem [shape: f32[2,4,1,8], index: 8, kind: input, shape index: {}, may-alias: {7,8,9}]
  %s9 = inlined_call_operand.vmem [shape: f32[2,4,1,8], index: 9, kind: input, shape index: {}, may-alias: {7,8,9}]
  %s10 = inlined_call_operand.vmem [shape: bf16[2,32,32], index: 10, kind: input, shape index: {}]
  %s11 = inlined_call_operand.vmem [shape: f32[2,1,32], index: 11, kind: input, shape index: {}, may-alias: {11,13,17,19}]
  %s12 = inlined_call_operand.vmem [shape: f32[2,1,32], index: 12, kind: input, shape index: {}, may-alias: {12,18}]
  %s13 = inlined_call_operand.vmem [shape: f32[2,1,32], index: 13, kind: input, shape index: {}, may-alias: {11,13,17,19}]
  %s14 = inlined_call_operand.vmem [shape: bf16[2,32,64], index: 14, kind: input, shape index: {}]
  %s15 = inlined_call_operand.vmem [shape: f32[2,1,64], index: 15, kind: input, shape index: {}]
  %s16 = inlined_call_operand.vmem [shape: bf16[2,64,32], index: 16, kind: input, shape index: {}]
  %s17 = inlined_call_operand.vmem [shape: f32[2,1,32], index: 17, kind: input, shape index: {}, may-alias: {11,13,17,19}]
  %s18 = inlined_call_operand.vmem [shape: f32[2,1,32], index: 18, kind: input, shape index: {}, may-alias: {12,18}]
  %s19 = inlined_call_operand.vmem [shape: f32[2,1,32], index: 19, kind: input, shape index: {}, may-alias: {11,13,17,19}]
  %s20 = inlined_call_operand.vmem [shape: bf16[32,32], index: 20, kind: input, shape index: {}]
  %s21 = inlined_call_operand.vmem [shape: f32[1,32], index: 21, kind: input, shape index: {}, may-alias: {3,21}]
  %s22 = inlined_call_operand.hbm [shape: bf16[32,128], index: 22, kind: input, shape index: {}]
  %s23 = inlined_call_operand.vmem [shape: f32[1,128], index: 23, kind: input, shape index: {}]
  %s24 = inlined_call_operand.vmem [shape: f32[2,8,128], index: 24, kind: output, shape index: {}]
  %s25 = sld [smem:[#allocation0]]
  $region137: #{multilabel_forward.1} parent=0
    _
  %s27 = ssub.s32 1, %s25
  %s28 = scalar_select 0, %s27, %s25
  $region1: #{multilabel_forward.1} parent=0
    #allocation2 [shape = 'u8[65536]{0}', space=vmem, size = 0x10000, scoped, tag = 'input window, operand 4, single buffered']
    #allocation3 [shape = 's32[2]{0}', space=sflag, size = 0x8, scoped, tag = 'scoped memory for multilabel_forward.1']
    #allocation4 [shape = 'u8[8192]{0}', space=vmem, size = 0x2000, scoped, tag = 'input window, operand 22, single buffered']
    #allocation5 [shape = 's32[1]{0}', space=sflag, size = 0x4, scoped, tag = 'scoped memory for multilabel_forward.1']
    %29 = vsyncpa [#allocation3], 0
    %30 = vsyncpa [#allocation5], 0
    loop: start=0, step=1, limit=4
    $region2: #{multilabel_forward.1} parent=1 // loop_pre_header
      _
    $region3: #{multilabel_forward.1} parent=1 // loop_header
      %s32 = sphi 0, %s36
      %p33 = scmp.ge.s32.totalorder %s32, 4
      %s42 = sphi 0, %s44
      %s45 = sphi 0, %s42
      %s46 = sphi 0, %s45
      %s62 = sphi 0, %s46
      %s68 = sphi 0, %s70
      %s71 = sphi 0, %s68
      %s72 = sphi 0, %s71
      %s88 = sphi 0, %s72
      %s92 = sphi 0, %s92
      %s94 = sphi 0, %s92
      %s95 = sphi 0, %s94
      %s109 = sphi 0, %s95
      %s113 = sphi 0, %s113
      %s115 = sphi 0, %s113
      %s116 = sphi 0, %s115
      %s130 = sphi 0, %s116
      %s134 = sphi 0, %s134
      %s136 = sphi 0, %s134
      %s137 = sphi 0, %s136
      %s151 = sphi 0, %s137
      %s155 = sphi 0, %s155
      %s157 = sphi 0, %s155
      %s158 = sphi 0, %s157
      %s172 = sphi 0, %s158
      %s176 = sphi 0, %s176
      %s178 = sphi 0, %s176
      %s179 = sphi 0, %s178
      %s193 = sphi 0, %s179
      %s197 = sphi 0, %s197
      %s199 = sphi 0, %s197
      %s200 = sphi 0, %s199
      %s214 = sphi 0, %s200
      %s218 = sphi 0, %s218
      %s220 = sphi 0, %s218
      %s221 = sphi 0, %s220
      %s235 = sphi 0, %s221
      %s239 = sphi 0, %s239
      %s241 = sphi 0, %s239
      %s242 = sphi 0, %s241
      %s256 = sphi 0, %s242
      %s260 = sphi 0, %s260
      %s262 = sphi 0, %s260
      %s263 = sphi 0, %s262
      %s277 = sphi 0, %s263
      %s281 = sphi 0, %s281
      %s283 = sphi 0, %s281
      %s284 = sphi 0, %s283
      %s298 = sphi 0, %s284
      %s302 = sphi 0, %s302
      %s304 = sphi 0, %s302
      %s305 = sphi 0, %s304
      %s319 = sphi 0, %s305
      %s323 = sphi 0, %s323
      %s325 = sphi 0, %s323
      %s326 = sphi 0, %s325
      %s340 = sphi 0, %s326
      %s344 = sphi 0, %s344
      %s346 = sphi 0, %s344
      %s347 = sphi 0, %s346
      %s361 = sphi 0, %s347
      %s365 = sphi 0, %s365
      %s367 = sphi 0, %s365
      %s368 = sphi 0, %s367
      %s382 = sphi 0, %s368
      %s386 = sphi 0, %s386
      %s388 = sphi 0, %s386
      %s389 = sphi 0, %s388
      %s403 = sphi 0, %s389
      %s407 = sphi 0, %s407
      %s409 = sphi 0, %s407
      %s410 = sphi 0, %s409
      %s424 = sphi 0, %s410
      %s428 = sphi 0, %s428
      %s430 = sphi 0, %s428
      %s431 = sphi 0, %s430
      %s445 = sphi 0, %s431
      %s449 = sphi 0, %s449
      %s451 = sphi 0, %s449
      %s452 = sphi 0, %s451
      %s466 = sphi 0, %s452
      %s470 = sphi 0, %s470
      %s472 = sphi 0, %s470
      %s473 = sphi 0, %s472
      %s487 = sphi 0, %s473
      %s491 = sphi 0, %s491
      %s493 = sphi 0, %s491
      %s494 = sphi 0, %s493
      %s508 = sphi 0, %s494
      %s512 = sphi 0, %s512
      %s514 = sphi 0, %s512
      %s515 = sphi 0, %s514
      %s529 = sphi 0, %s515
      %s533 = sphi 0, %s533
      %s535 = sphi 0, %s533
      %s536 = sphi 0, %s535
      %s550 = sphi 0, %s536
      %s556 = sphi 0, %s558
      %s559 = sphi 0, %s556
      %s560 = sphi 0, %s559
      %s576 = sphi 0, %s560
    $region4: #{multilabel_forward.1} parent=1 // loop_header_branch
      %35 = sbr.rel (%p33) target = $region8
    $region5: #{multilabel_forward.1} parent=1 // loop_body
      %s37 = ssub.s32 %s32, 1
      %s38 = ssub.s32 %s32, 2
      %s39 = sadd.s32 %s32, 1
      %s40 = ssub.s32 %s32, %s39
      %p41 = scmp.eq.s32.totalorder %s40, 0
      %s43 = sadd.s32 %s42, 1
      %s44 = scalar_select %p41, %s42, %s43
      %p47 = pneg %p41
      %p48 = scmp.eq.s32.totalorder %s32, 1
      %p49 = por %p47, %p48
      %p50 = scmp.ne.s32.totalorder %s42, %s45
      %p51 = scmp.eq.s32.totalorder %s32, 0
      %p52 = por %p50, %p51
      %p53 = scmp.ne.s32.totalorder %s42, %s45
      %p54 = scmp.eq.s32.totalorder %s37, 1
      %p55 = por %p53, %p54
      %p56 = scmp.ne.s32.totalorder %s45, %s46
      %p57 = scmp.eq.s32.totalorder %s37, 0
      %p58 = por %p56, %p57
      %p59 = scmp.ne.s32.totalorder %s45, %s46
      %p60 = scmp.eq.s32.totalorder %s38, 1
      %p61 = por %p59, %p60
      %p63 = scmp.ne.s32.totalorder %s46, %s62
      %p64 = scmp.eq.s32.totalorder %s38, 0
      %p65 = por %p63, %p64
      %s66 = ssub.s32 %s32, %s39
      %p67 = scmp.eq.s32.totalorder %s66, 0
      %s69 = sadd.s32 %s68, 1
      %s70 = scalar_select %p67, %s68, %s69
      %p73 = pneg %p67
      %p74 = scmp.eq.s32.totalorder %s32, 1
      %p75 = por %p73, %p74
      %p76 = scmp.ne.s32.totalorder %s68, %s71
      %p77 = scmp.eq.s32.totalorder %s32, 0
      %p78 = por %p76, %p77
      %p79 = scmp.ne.s32.totalorder %s68, %s71
      %p80 = scmp.eq.s32.totalorder %s37, 1
      %p81 = por %p79, %p80
      %p82 = scmp.ne.s32.totalorder %s71, %s72
      %p83 = scmp.eq.s32.totalorder %s37, 0
      %p84 = por %p82, %p83
      %p85 = scmp.ne.s32.totalorder %s71, %s72
      %p86 = scmp.eq.s32.totalorder %s38, 1
      %p87 = por %p85, %p86
      %p89 = scmp.ne.s32.totalorder %s72, %s88
      %p90 = scmp.eq.s32.totalorder %s38, 0
      %p91 = por %p89, %p90
      %s93 = sadd.s32 %s92, 1
      %p96 = scmp.eq.s32.totalorder %s32, 1
      %p97 = scmp.ne.s32.totalorder %s92, %s94
      %p98 = scmp.eq.s32.totalorder %s32, 0
      %p99 = por %p97, %p98
      %p100 = scmp.ne.s32.totalorder %s92, %s94
      %p101 = scmp.eq.s32.totalorder %s37, 1
      %p102 = por %p100, %p101
      %p103 = scmp.ne.s32.totalorder %s94, %s95
      %p104 = scmp.eq.s32.totalorder %s37, 0
      %p105 = por %p103, %p104
      %p106 = scmp.ne.s32.totalorder %s94, %s95
      %p107 = scmp.eq.s32.totalorder %s38, 1
      %p108 = por %p106, %p107
      %p110 = scmp.ne.s32.totalorder %s95, %s109
      %p111 = scmp.eq.s32.totalorder %s38, 0
      %p112 = por %p110, %p111
      %s114 = sadd.s32 %s113, 1
      %p117 = scmp.eq.s32.totalorder %s32, 1
      %p118 = scmp.ne.s32.totalorder %s113, %s115
      %p119 = scmp.eq.s32.totalorder %s32, 0
      %p120 = por %p118, %p119
      %p121 = scmp.ne.s32.totalorder %s113, %s115
      %p122 = scmp.eq.s32.totalorder %s37, 1
      %p123 = por %p121, %p122
      %p124 = scmp.ne.s32.totalorder %s115, %s116
      %p125 = scmp.eq.s32.totalorder %s37, 0
      %p126 = por %p124, %p125
      %p127 = scmp.ne.s32.totalorder %s115, %s116
      %p128 = scmp.eq.s32.totalorder %s38, 1
      %p129 = por %p127, %p128
      %p131 = scmp.ne.s32.totalorder %s116, %s130
      %p132 = scmp.eq.s32.totalorder %s38, 0
      %p133 = por %p131, %p132
      %s135 = sadd.s32 %s134, 1
      %p138 = scmp.eq.s32.totalorder %s32, 1
      %p139 = scmp.ne.s32.totalorder %s134, %s136
      %p140 = scmp.eq.s32.totalorder %s32, 0
      %p141 = por %p139, %p140
      %p142 = scmp.ne.s32.totalorder %s134, %s136
      %p143 = scmp.eq.s32.totalorder %s37, 1
      %p144 = por %p142, %p143
      %p145 = scmp.ne.s32.totalorder %s136, %s137
      %p146 = scmp.eq.s32.totalorder %s37, 0
      %p147 = por %p145, %p146
      %p148 = scmp.ne.s32.totalorder %s136, %s137
      %p149 = scmp.eq.s32.totalorder %s38, 1
      %p150 = por %p148, %p149
      %p152 = scmp.ne.s32.totalorder %s137, %s151
      %p153 = scmp.eq.s32.totalorder %s38, 0
      %p154 = por %p152, %p153
      %s156 = sadd.s32 %s155, 1
      %p159 = scmp.eq.s32.totalorder %s32, 1
      %p160 = scmp.ne.s32.totalorder %s155, %s157
      %p161 = scmp.eq.s32.totalorder %s32, 0
      %p162 = por %p160, %p161
      %p163 = scmp.ne.s32.totalorder %s155, %s157
      %p164 = scmp.eq.s32.totalorder %s37, 1
      %p165 = por %p163, %p164
      %p166 = scmp.ne.s32.totalorder %s157, %s158
      %p167 = scmp.eq.s32.totalorder %s37, 0
      %p168 = por %p166, %p167
      %p169 = scmp.ne.s32.totalorder %s157, %s158
      %p170 = scmp.eq.s32.totalorder %s38, 1
      %p171 = por %p169, %p170
      %p173 = scmp.ne.s32.totalorder %s158, %s172
      %p174 = scmp.eq.s32.totalorder %s38, 0
      %p175 = por %p173, %p174
      %s177 = sadd.s32 %s176, 1
      %p180 = scmp.eq.s32.totalorder %s32, 1
      %p181 = scmp.ne.s32.totalorder %s176, %s178
      %p182 = scmp.eq.s32.totalorder %s32, 0
      %p183 = por %p181, %p182
      %p184 = scmp.ne.s32.totalorder %s176, %s178
      %p185 = scmp.eq.s32.totalorder %s37, 1
      %p186 = por %p184, %p185
      %p187 = scmp.ne.s32.totalorder %s178, %s179
      %p188 = scmp.eq.s32.totalorder %s37, 0
      %p189 = por %p187, %p188
      %p190 = scmp.ne.s32.totalorder %s178, %s179
      %p191 = scmp.eq.s32.totalorder %s38, 1
      %p192 = por %p190, %p191
      %p194 = scmp.ne.s32.totalorder %s179, %s193
      %p195 = scmp.eq.s32.totalorder %s38, 0
      %p196 = por %p194, %p195
      %s198 = sadd.s32 %s197, 1
      %p201 = scmp.eq.s32.totalorder %s32, 1
      %p202 = scmp.ne.s32.totalorder %s197, %s199
      %p203 = scmp.eq.s32.totalorder %s32, 0
      %p204 = por %p202, %p203
      %p205 = scmp.ne.s32.totalorder %s197, %s199
      %p206 = scmp.eq.s32.totalorder %s37, 1
      %p207 = por %p205, %p206
      %p208 = scmp.ne.s32.totalorder %s199, %s200
      %p209 = scmp.eq.s32.totalorder %s37, 0
      %p210 = por %p208, %p209
      %p211 = scmp.ne.s32.totalorder %s199, %s200
      %p212 = scmp.eq.s32.totalorder %s38, 1
      %p213 = por %p211, %p212
      %p215 = scmp.ne.s32.totalorder %s200, %s214
      %p216 = scmp.eq.s32.totalorder %s38, 0
      %p217 = por %p215, %p216
      %s219 = sadd.s32 %s218, 1
      %p222 = scmp.eq.s32.totalorder %s32, 1
      %p223 = scmp.ne.s32.totalorder %s218, %s220
      %p224 = scmp.eq.s32.totalorder %s32, 0
      %p225 = por %p223, %p224
      %p226 = scmp.ne.s32.totalorder %s218, %s220
      %p227 = scmp.eq.s32.totalorder %s37, 1
      %p228 = por %p226, %p227
      %p229 = scmp.ne.s32.totalorder %s220, %s221
      %p230 = scmp.eq.s32.totalorder %s37, 0
      %p231 = por %p229, %p230
      %p232 = scmp.ne.s32.totalorder %s220, %s221
      %p233 = scmp.eq.s32.totalorder %s38, 1
      %p234 = por %p232, %p233
      %p236 = scmp.ne.s32.totalorder %s221, %s235
      %p237 = scmp.eq.s32.totalorder %s38, 0
      %p238 = por %p236, %p237
      %s240 = sadd.s32 %s239, 1
      %p243 = scmp.eq.s32.totalorder %s32, 1
      %p244 = scmp.ne.s32.totalorder %s239, %s241
      %p245 = scmp.eq.s32.totalorder %s32, 0
      %p246 = por %p244, %p245
      %p247 = scmp.ne.s32.totalorder %s239, %s241
      %p248 = scmp.eq.s32.totalorder %s37, 1
      %p249 = por %p247, %p248
      %p250 = scmp.ne.s32.totalorder %s241, %s242
      %p251 = scmp.eq.s32.totalorder %s37, 0
      %p252 = por %p250, %p251
      %p253 = scmp.ne.s32.totalorder %s241, %s242
      %p254 = scmp.eq.s32.totalorder %s38, 1
      %p255 = por %p253, %p254
      %p257 = scmp.ne.s32.totalorder %s242, %s256
      %p258 = scmp.eq.s32.totalorder %s38, 0
      %p259 = por %p257, %p258
      %s261 = sadd.s32 %s260, 1
      %p264 = scmp.eq.s32.totalorder %s32, 1
      %p265 = scmp.ne.s32.totalorder %s260, %s262
      %p266 = scmp.eq.s32.totalorder %s32, 0
      %p267 = por %p265, %p266
      %p268 = scmp.ne.s32.totalorder %s260, %s262
      %p269 = scmp.eq.s32.totalorder %s37, 1
      %p270 = por %p268, %p269
      %p271 = scmp.ne.s32.totalorder %s262, %s263
      %p272 = scmp.eq.s32.totalorder %s37, 0
      %p273 = por %p271, %p272
      %p274 = scmp.ne.s32.totalorder %s262, %s263
      %p275 = scmp.eq.s32.totalorder %s38, 1
      %p276 = por %p274, %p275
      %p278 = scmp.ne.s32.totalorder %s263, %s277
      %p279 = scmp.eq.s32.totalorder %s38, 0
      %p280 = por %p278, %p279
      %s282 = sadd.s32 %s281, 1
      %p285 = scmp.eq.s32.totalorder %s32, 1
      %p286 = scmp.ne.s32.totalorder %s281, %s283
      %p287 = scmp.eq.s32.totalorder %s32, 0
      %p288 = por %p286, %p287
      %p289 = scmp.ne.s32.totalorder %s281, %s283
      %p290 = scmp.eq.s32.totalorder %s37, 1
      %p291 = por %p289, %p290
      %p292 = scmp.ne.s32.totalorder %s283, %s284
      %p293 = scmp.eq.s32.totalorder %s37, 0
      %p294 = por %p292, %p293
      %p295 = scmp.ne.s32.totalorder %s283, %s284
      %p296 = scmp.eq.s32.totalorder %s38, 1
      %p297 = por %p295, %p296
      %p299 = scmp.ne.s32.totalorder %s284, %s298
      %p300 = scmp.eq.s32.totalorder %s38, 0
      %p301 = por %p299, %p300
      %s303 = sadd.s32 %s302, 1
      %p306 = scmp.eq.s32.totalorder %s32, 1
      %p307 = scmp.ne.s32.totalorder %s302, %s304
      %p308 = scmp.eq.s32.totalorder %s32, 0
      %p309 = por %p307, %p308
      %p310 = scmp.ne.s32.totalorder %s302, %s304
      %p311 = scmp.eq.s32.totalorder %s37, 1
      %p312 = por %p310, %p311
      %p313 = scmp.ne.s32.totalorder %s304, %s305
      %p314 = scmp.eq.s32.totalorder %s37, 0
      %p315 = por %p313, %p314
      %p316 = scmp.ne.s32.totalorder %s304, %s305
      %p317 = scmp.eq.s32.totalorder %s38, 1
      %p318 = por %p316, %p317
      %p320 = scmp.ne.s32.totalorder %s305, %s319
      %p321 = scmp.eq.s32.totalorder %s38, 0
      %p322 = por %p320, %p321
      %s324 = sadd.s32 %s323, 1
      %p327 = scmp.eq.s32.totalorder %s32, 1
      %p328 = scmp.ne.s32.totalorder %s323, %s325
      %p329 = scmp.eq.s32.totalorder %s32, 0
      %p330 = por %p328, %p329
      %p331 = scmp.ne.s32.totalorder %s323, %s325
      %p332 = scmp.eq.s32.totalorder %s37, 1
      %p333 = por %p331, %p332
      %p334 = scmp.ne.s32.totalorder %s325, %s326
      %p335 = scmp.eq.s32.totalorder %s37, 0
      %p336 = por %p334, %p335
      %p337 = scmp.ne.s32.totalorder %s325, %s326
      %p338 = scmp.eq.s32.totalorder %s38, 1
      %p339 = por %p337, %p338
      %p341 = scmp.ne.s32.totalorder %s326, %s340
      %p342 = scmp.eq.s32.totalorder %s38, 0
      %p343 = por %p341, %p342
      %s345 = sadd.s32 %s344, 1
      %p348 = scmp.eq.s32.totalorder %s32, 1
      %p349 = scmp.ne.s32.totalorder %s344, %s346
      %p350 = scmp.eq.s32.totalorder %s32, 0
      %p351 = por %p349, %p350
      %p352 = scmp.ne.s32.totalorder %s344, %s346
      %p353 = scmp.eq.s32.totalorder %s37, 1
      %p354 = por %p352, %p353
      %p355 = scmp.ne.s32.totalorder %s346, %s347
      %p356 = scmp.eq.s32.totalorder %s37, 0
      %p357 = por %p355, %p356
      %p358 = scmp.ne.s32.totalorder %s346, %s347
      %p359 = scmp.eq.s32.totalorder %s38, 1
      %p360 = por %p358, %p359
      %p362 = scmp.ne.s32.totalorder %s347, %s361
      %p363 = scmp.eq.s32.totalorder %s38, 0
      %p364 = por %p362, %p363
      %s366 = sadd.s32 %s365, 1
      %p369 = scmp.eq.s32.totalorder %s32, 1
      %p370 = scmp.ne.s32.totalorder %s365, %s367
      %p371 = scmp.eq.s32.totalorder %s32, 0
      %p372 = por %p370, %p371
      %p373 = scmp.ne.s32.totalorder %s365, %s367
      %p374 = scmp.eq.s32.totalorder %s37, 1
      %p375 = por %p373, %p374
      %p376 = scmp.ne.s32.totalorder %s367, %s368
      %p377 = scmp.eq.s32.totalorder %s37, 0
      %p378 = por %p376, %p377
      %p379 = scmp.ne.s32.totalorder %s367, %s368
      %p380 = scmp.eq.s32.totalorder %s38, 1
      %p381 = por %p379, %p380
      %p383 = scmp.ne.s32.totalorder %s368, %s382
      %p384 = scmp.eq.s32.totalorder %s38, 0
      %p385 = por %p383, %p384
      %s387 = sadd.s32 %s386, 1
      %p390 = scmp.eq.s32.totalorder %s32, 1
      %p391 = scmp.ne.s32.totalorder %s386, %s388
      %p392 = scmp.eq.s32.totalorder %s32, 0
      %p393 = por %p391, %p392
      %p394 = scmp.ne.s32.totalorder %s386, %s388
      %p395 = scmp.eq.s32.totalorder %s37, 1
      %p396 = por %p394, %p395
      %p397 = scmp.ne.s32.totalorder %s388, %s389
      %p398 = scmp.eq.s32.totalorder %s37, 0
      %p399 = por %p397, %p398
      %p400 = scmp.ne.s32.totalorder %s388, %s389
      %p401 = scmp.eq.s32.totalorder %s38, 1
      %p402 = por %p400, %p401
      %p404 = scmp.ne.s32.totalorder %s389, %s403
      %p405 = scmp.eq.s32.totalorder %s38, 0
      %p406 = por %p404, %p405
      %s408 = sadd.s32 %s407, 1
      %p411 = scmp.eq.s32.totalorder %s32, 1
      %p412 = scmp.ne.s32.totalorder %s407, %s409
      %p413 = scmp.eq.s32.totalorder %s32, 0
      %p414 = por %p412, %p413
      %p415 = scmp.ne.s32.totalorder %s407, %s409
      %p416 = scmp.eq.s32.totalorder %s37, 1
      %p417 = por %p415, %p416
      %p418 = scmp.ne.s32.totalorder %s409, %s410
      %p419 = scmp.eq.s32.totalorder %s37, 0
      %p420 = por %p418, %p419
      %p421 = scmp.ne.s32.totalorder %s409, %s410
      %p422 = scmp.eq.s32.totalorder %s38, 1
      %p423 = por %p421, %p422
      %p425 = scmp.ne.s32.totalorder %s410, %s424
      %p426 = scmp.eq.s32.totalorder %s38, 0
      %p427 = por %p425, %p426
      %s429 = sadd.s32 %s428, 1
      %p432 = scmp.eq.s32.totalorder %s32, 1
      %p433 = scmp.ne.s32.totalorder %s428, %s430
      %p434 = scmp.eq.s32.totalorder %s32, 0
      %p435 = por %p433, %p434
      %p436 = scmp.ne.s32.totalorder %s428, %s430
      %p437 = scmp.eq.s32.totalorder %s37, 1
      %p438 = por %p436, %p437
      %p439 = scmp.ne.s32.totalorder %s430, %s431
      %p440 = scmp.eq.s32.totalorder %s37, 0
      %p441 = por %p439, %p440
      %p442 = scmp.ne.s32.totalorder %s430, %s431
      %p443 = scmp.eq.s32.totalorder %s38, 1
      %p444 = por %p442, %p443
      %p446 = scmp.ne.s32.totalorder %s431, %s445
      %p447 = scmp.eq.s32.totalorder %s38, 0
      %p448 = por %p446, %p447
      %s450 = sadd.s32 %s449, 1
      %p453 = scmp.eq.s32.totalorder %s32, 1
      %p454 = scmp.ne.s32.totalorder %s449, %s451
      %p455 = scmp.eq.s32.totalorder %s32, 0
      %p456 = por %p454, %p455
      %p457 = scmp.ne.s32.totalorder %s449, %s451
      %p458 = scmp.eq.s32.totalorder %s37, 1
      %p459 = por %p457, %p458
      %p460 = scmp.ne.s32.totalorder %s451, %s452
      %p461 = scmp.eq.s32.totalorder %s37, 0
      %p462 = por %p460, %p461
      %p463 = scmp.ne.s32.totalorder %s451, %s452
      %p464 = scmp.eq.s32.totalorder %s38, 1
      %p465 = por %p463, %p464
      %p467 = scmp.ne.s32.totalorder %s452, %s466
      %p468 = scmp.eq.s32.totalorder %s38, 0
      %p469 = por %p467, %p468
      %s471 = sadd.s32 %s470, 1
      %p474 = scmp.eq.s32.totalorder %s32, 1
      %p475 = scmp.ne.s32.totalorder %s470, %s472
      %p476 = scmp.eq.s32.totalorder %s32, 0
      %p477 = por %p475, %p476
      %p478 = scmp.ne.s32.totalorder %s470, %s472
      %p479 = scmp.eq.s32.totalorder %s37, 1
      %p480 = por %p478, %p479
      %p481 = scmp.ne.s32.totalorder %s472, %s473
      %p482 = scmp.eq.s32.totalorder %s37, 0
      %p483 = por %p481, %p482
      %p484 = scmp.ne.s32.totalorder %s472, %s473
      %p485 = scmp.eq.s32.totalorder %s38, 1
      %p486 = por %p484, %p485
      %p488 = scmp.ne.s32.totalorder %s473, %s487
      %p489 = scmp.eq.s32.totalorder %s38, 0
      %p490 = por %p488, %p489
      %s492 = sadd.s32 %s491, 1
      %p495 = scmp.eq.s32.totalorder %s32, 1
      %p496 = scmp.ne.s32.totalorder %s491, %s493
      %p497 = scmp.eq.s32.totalorder %s32, 0
      %p498 = por %p496, %p497
      %p499 = scmp.ne.s32.totalorder %s491, %s493
      %p500 = scmp.eq.s32.totalorder %s37, 1
      %p501 = por %p499, %p500
      %p502 = scmp.ne.s32.totalorder %s493, %s494
      %p503 = scmp.eq.s32.totalorder %s37, 0
      %p504 = por %p502, %p503
      %p505 = scmp.ne.s32.totalorder %s493, %s494
      %p506 = scmp.eq.s32.totalorder %s38, 1
      %p507 = por %p505, %p506
      %p509 = scmp.ne.s32.totalorder %s494, %s508
      %p510 = scmp.eq.s32.totalorder %s38, 0
      %p511 = por %p509, %p510
      %s513 = sadd.s32 %s512, 1
      %p516 = scmp.eq.s32.totalorder %s32, 1
      %p517 = scmp.ne.s32.totalorder %s512, %s514
      %p518 = scmp.eq.s32.totalorder %s32, 0
      %p519 = por %p517, %p518
      %p520 = scmp.ne.s32.totalorder %s512, %s514
      %p521 = scmp.eq.s32.totalorder %s37, 1
      %p522 = por %p520, %p521
      %p523 = scmp.ne.s32.totalorder %s514, %s515
      %p524 = scmp.eq.s32.totalorder %s37, 0
      %p525 = por %p523, %p524
      %p526 = scmp.ne.s32.totalorder %s514, %s515
      %p527 = scmp.eq.s32.totalorder %s38, 1
      %p528 = por %p526, %p527
      %p530 = scmp.ne.s32.totalorder %s515, %s529
      %p531 = scmp.eq.s32.totalorder %s38, 0
      %p532 = por %p530, %p531
      %s534 = sadd.s32 %s533, 1
      %p537 = scmp.eq.s32.totalorder %s32, 1
      %p538 = scmp.ne.s32.totalorder %s533, %s535
      %p539 = scmp.eq.s32.totalorder %s32, 0
      %p540 = por %p538, %p539
      %p541 = scmp.ne.s32.totalorder %s533, %s535
      %p542 = scmp.eq.s32.totalorder %s37, 1
      %p543 = por %p541, %p542
      %p544 = scmp.ne.s32.totalorder %s535, %s536
      %p545 = scmp.eq.s32.totalorder %s37, 0
      %p546 = por %p544, %p545
      %p547 = scmp.ne.s32.totalorder %s535, %s536
      %p548 = scmp.eq.s32.totalorder %s38, 1
      %p549 = por %p547, %p548
      %p551 = scmp.ne.s32.totalorder %s536, %s550
      %p552 = scmp.eq.s32.totalorder %s38, 0
      %p553 = por %p551, %p552
      %s554 = ssub.s32 %s32, %s39
      %p555 = scmp.eq.s32.totalorder %s554, 0
      %s557 = sadd.s32 %s556, 1
      %s558 = scalar_select %p555, %s556, %s557
      %p561 = pneg %p555
      %p562 = scmp.eq.s32.totalorder %s32, 1
      %p563 = por %p561, %p562
      %p564 = scmp.ne.s32.totalorder %s556, %s559
      %p565 = scmp.eq.s32.totalorder %s32, 0
      %p566 = por %p564, %p565
      %p567 = scmp.ne.s32.totalorder %s556, %s559
      %p568 = scmp.eq.s32.totalorder %s37, 1
      %p569 = por %p567, %p568
      %p570 = scmp.ne.s32.totalorder %s559, %s560
      %p571 = scmp.eq.s32.totalorder %s37, 0
      %p572 = por %p570, %p571
      %p573 = scmp.ne.s32.totalorder %s559, %s560
      %p574 = scmp.eq.s32.totalorder %s38, 1
      %p575 = por %p573, %p574
      %p577 = scmp.ne.s32.totalorder %s560, %s576
      %p578 = scmp.eq.s32.totalorder %s38, 0
      %p579 = por %p577, %p578
      %p580 = scmp.le.s32.totalorder 1, %s32
      %p581 = scmp.lt.s32.totalorder %s32, 3
      %p582 = pnand %p580, %p581
      %p583 = pneg %p582
      // Predicated region
      $region9: #{multilabel_forward.1} parent=5 // pred_check
        _
      $region10: #{multilabel_forward.1} parent=5 // pred_check_branch
        %585 = sbr.rel (%p582) target = $region12
      $region11: #{multilabel_forward.1} parent=5 // pred_region
        %s586 = ssub.s32 %s32, 1
        // Predicated region
        $region13: #{multilabel_forward.1} parent=11 // pred_check
          %p587 = pneg %p105
        $region14: #{multilabel_forward.1} parent=11 // pred_check_branch
          %589 = sbr.rel (%p587) target = $region16
        $region15: #{multilabel_forward.1} parent=11 // pred_region
          _
        $region16: #{multilabel_forward.1} parent=11 // pred_fallthru
          _
        // Predicated region
        $region17: #{multilabel_forward.1} parent=11 // pred_check
          %p590 = pneg %p126
        $region18: #{multilabel_forward.1} parent=11 // pred_check_branch
          %592 = sbr.rel (%p590) target = $region20
        $region19: #{multilabel_forward.1} parent=11 // pred_region
          _
        $region20: #{multilabel_forward.1} parent=11 // pred_fallthru
          _
        // Predicated region
        $region21: #{multilabel_forward.1} parent=11 // pred_check
          %p593 = pneg %p147
        $region22: #{multilabel_forward.1} parent=11 // pred_check_branch
          %595 = sbr.rel (%p593) target = $region24
        $region23: #{multilabel_forward.1} parent=11 // pred_region
          %597 = vsyncadd [#allocation3], 0
          %s598 = sshll.u32 %s4, 4
          %s599 = int_to_ptr.hbm [resolvable:$true] %s598
          %s600 = sshll.u32 [#allocation2], 4
          %s601 = int_to_ptr.vmem [resolvable:$true] %s600
          %606 = dma.hbm_to_vmem [thread:$0]  %s599, 2048, %s601, [#allocation3], 64, 64, 4
        $region24: #{multilabel_forward.1} parent=11 // pred_fallthru
          _
        // Predicated region
        $region25: #{multilabel_forward.1} parent=11 // pred_check
          %p607 = pneg %p168
        $region26: #{multilabel_forward.1} parent=11 // pred_check_branch
          %609 = sbr.rel (%p607) target = $region28
        $region27: #{multilabel_forward.1} parent=11 // pred_region
          _
        $region28: #{multilabel_forward.1} parent=11 // pred_fallthru
          _
        // Predicated region
        $region29: #{multilabel_forward.1} parent=11 // pred_check
          %p610 = pneg %p189
        $region30: #{multilabel_forward.1} parent=11 // pred_check_branch
          %612 = sbr.rel (%p610) target = $region32
        $region31: #{multilabel_forward.1} parent=11 // pred_region
          _
        $region32: #{multilabel_forward.1} parent=11 // pred_fallthru
          _
        // Predicated region
        $region33: #{multilabel_forward.1} parent=11 // pred_check
          %p613 = pneg %p210
        $region34: #{multilabel_forward.1} parent=11 // pred_check_branch
          %615 = sbr.rel (%p613) target = $region36
        $region35: #{multilabel_forward.1} parent=11 // pred_region
          _
        $region36: #{multilabel_forward.1} parent=11 // pred_fallthru
          _
        // Predicated region
        $region37: #{multilabel_forward.1} parent=11 // pred_check
          %p616 = pneg %p231
        $region38: #{multilabel_forward.1} parent=11 // pred_check_branch
          %618 = sbr.rel (%p616) target = $region40
        $region39: #{multilabel_forward.1} parent=11 // pred_region
          _
        $region40: #{multilabel_forward.1} parent=11 // pred_fallthru
          _
        // Predicated region
        $region41: #{multilabel_forward.1} parent=11 // pred_check
          %p619 = pneg %p252
        $region42: #{multilabel_forward.1} parent=11 // pred_check_branch
          %621 = sbr.rel (%p619) target = $region44
        $region43: #{multilabel_forward.1} parent=11 // pred_region
          _
        $region44: #{multilabel_forward.1} parent=11 // pred_fallthru
          _
        // Predicated region
        $region45: #{multilabel_forward.1} parent=11 // pred_check
          %p622 = pneg %p273
        $region46: #{multilabel_forward.1} parent=11 // pred_check_branch
          %624 = sbr.rel (%p622) target = $region48
        $region47: #{multilabel_forward.1} parent=11 // pred_region
          _
        $region48: #{multilabel_forward.1} parent=11 // pred_fallthru
          _
        // Predicated region
        $region49: #{multilabel_forward.1} parent=11 // pred_check
          %p625 = pneg %p294
        $region50: #{multilabel_forward.1} parent=11 // pred_check_branch
          %627 = sbr.rel (%p625) target = $region52
        $region51: #{multilabel_forward.1} parent=11 // pred_region
          _
        $region52: #{multilabel_forward.1} parent=11 // pred_fallthru
          _
        // Predicated region
        $region53: #{multilabel_forward.1} parent=11 // pred_check
          %p628 = pneg %p315
        $region54: #{multilabel_forward.1} parent=11 // pred_check_branch
          %630 = sbr.rel (%p628) target = $region56
        $region55: #{multilabel_forward.1} parent=11 // pred_region
          _
        $region56: #{multilabel_forward.1} parent=11 // pred_fallthru
          _
        // Predicated region
        $region57: #{multilabel_forward.1} parent=11 // pred_check
          %p631 = pneg %p336
        $region58: #{multilabel_forward.1} parent=11 // pred_check_branch
          %633 = sbr.rel (%p631) target = $region60
        $region59: #{multilabel_forward.1} parent=11 // pred_region
          _
        $region60: #{multilabel_forward.1} parent=11 // pred_fallthru
          _
        // Predicated region
        $region61: #{multilabel_forward.1} parent=11 // pred_check
          %p634 = pneg %p357
        $region62: #{multilabel_forward.1} parent=11 // pred_check_branch
          %636 = sbr.rel (%p634) target = $region64
        $region63: #{multilabel_forward.1} parent=11 // pred_region
          _
        $region64: #{multilabel_forward.1} parent=11 // pred_fallthru
          _
        // Predicated region
        $region65: #{multilabel_forward.1} parent=11 // pred_check
          %p637 = pneg %p378
        $region66: #{multilabel_forward.1} parent=11 // pred_check_branch
          %639 = sbr.rel (%p637) target = $region68
        $region67: #{multilabel_forward.1} parent=11 // pred_region
          _
        $region68: #{multilabel_forward.1} parent=11 // pred_fallthru
          _
        // Predicated region
        $region69: #{multilabel_forward.1} parent=11 // pred_check
          %p640 = pneg %p399
        $region70: #{multilabel_forward.1} parent=11 // pred_check_branch
          %642 = sbr.rel (%p640) target = $region72
        $region71: #{multilabel_forward.1} parent=11 // pred_region
          _
        $region72: #{multilabel_forward.1} parent=11 // pred_fallthru
          _
        // Predicated region
        $region73: #{multilabel_forward.1} parent=11 // pred_check
          %p643 = pneg %p420
        $region74: #{multilabel_forward.1} parent=11 // pred_check_branch
          %645 = sbr.rel (%p643) target = $region76
        $region75: #{multilabel_forward.1} parent=11 // pred_region
          _
        $region76: #{multilabel_forward.1} parent=11 // pred_fallthru
          _
        // Predicated region
        $region77: #{multilabel_forward.1} parent=11 // pred_check
          %p646 = pneg %p441
        $region78: #{multilabel_forward.1} parent=11 // pred_check_branch
          %648 = sbr.rel (%p646) target = $region80
        $region79: #{multilabel_forward.1} parent=11 // pred_region
          _
        $region80: #{multilabel_forward.1} parent=11 // pred_fallthru
          _
        // Predicated region
        $region81: #{multilabel_forward.1} parent=11 // pred_check
          %p649 = pneg %p462
        $region82: #{multilabel_forward.1} parent=11 // pred_check_branch
          %651 = sbr.rel (%p649) target = $region84
        $region83: #{multilabel_forward.1} parent=11 // pred_region
          _
        $region84: #{multilabel_forward.1} parent=11 // pred_fallthru
          _
        // Predicated region
        $region85: #{multilabel_forward.1} parent=11 // pred_check
          %p652 = pneg %p483
        $region86: #{multilabel_forward.1} parent=11 // pred_check_branch
          %654 = sbr.rel (%p652) target = $region88
        $region87: #{multilabel_forward.1} parent=11 // pred_region
          _
        $region88: #{multilabel_forward.1} parent=11 // pred_fallthru
          _
        // Predicated region
        $region89: #{multilabel_forward.1} parent=11 // pred_check
          %p655 = pneg %p504
        $region90: #{multilabel_forward.1} parent=11 // pred_check_branch
          %657 = sbr.rel (%p655) target = $region92
        $region91: #{multilabel_forward.1} parent=11 // pred_region
          _
        $region92: #{multilabel_forward.1} parent=11 // pred_fallthru
          _
        // Predicated region
        $region93: #{multilabel_forward.1} parent=11 // pred_check
          %p658 = pneg %p525
        $region94: #{multilabel_forward.1} parent=11 // pred_check_branch
          %660 = sbr.rel (%p658) target = $region96
        $region95: #{multilabel_forward.1} parent=11 // pred_region
          %662 = vsyncadd [#allocation5], 0
          %s663 = sshll.u32 %s22, 4
          %s664 = int_to_ptr.hbm [resolvable:$true] %s663
          %s665 = sshll.u32 [#allocation4], 4
          %s666 = int_to_ptr.vmem [resolvable:$true] %s665
          %671 = dma.hbm_to_vmem [thread:$0]  %s664, 256, %s666, [#allocation5], 64, 64, 4
        $region96: #{multilabel_forward.1} parent=11 // pred_fallthru
          _
        // Predicated region
        $region97: #{multilabel_forward.1} parent=11 // pred_check
          %p672 = pneg %p546
        $region98: #{multilabel_forward.1} parent=11 // pred_check_branch
          %674 = sbr.rel (%p672) target = $region100
        $region99: #{multilabel_forward.1} parent=11 // pred_region
          _
        $region100: #{multilabel_forward.1} parent=11 // pred_fallthru
          _
      $region12: #{multilabel_forward.1} parent=5 // pred_fallthru
        _
      %p675 = scmp.lt.s32.totalorder %s32, 2
      // Predicated region
      $region101: #{multilabel_forward.1} parent=5 // pred_check
        %p676 = pneg %p675
      $region102: #{multilabel_forward.1} parent=5 // pred_check_branch
        %678 = sbr.rel (%p676) target = $region104
      $region103: #{multilabel_forward.1} parent=5 // pred_region
        // Predicated region
        $region105: #{multilabel_forward.1} parent=103 // pred_check
          %p679 = pneg %p52
        $region106: #{multilabel_forward.1} parent=103 // pred_check_branch
          %681 = sbr.rel (%p679) target = $region108
        $region107: #{multilabel_forward.1} parent=103 // pred_region
          %p682 = scmp.lt.s32.totalorder %s32, 1
          %s683 = scalar_select %p682, %s32, 1
          %s684 = smul.addr %s683, 8
          %s685 = scalar_lea.vmem %s0, %s684
        $region108: #{multilabel_forward.1} parent=103 // pred_fallthru
          _
        // Predicated region
        $region109: #{multilabel_forward.1} parent=103 // pred_check
          %p686 = pneg %p78
        $region110: #{multilabel_forward.1} parent=103 // pred_check_branch
          %688 = sbr.rel (%p686) target = $region112
        $region111: #{multilabel_forward.1} parent=103 // pred_region
          %p689 = scmp.lt.s32.totalorder %s32, 1
          %s690 = scalar_select %p689, %s32, 1
          %s691 = scalar_lea.vmem %s1, %s690
        $region112: #{multilabel_forward.1} parent=103 // pred_fallthru
          _
      $region104: #{multilabel_forward.1} parent=5 // pred_fallthru
        _
      %p692 = scmp.le.s32.totalorder 1, %s32
      %p693 = scmp.lt.s32.totalorder %s32, 3
      %p694 = pnand %p692, %p693
      %p695 = pneg %p694
      // Predicated region
      $region113: #{multilabel_forward.1} parent=5 // pred_check
        _
      $region114: #{multilabel_forward.1} parent=5 // pred_check_branch
        %697 = sbr.rel (%p694) target = $region116
      $region115: #{multilabel_forward.1} parent=5 // pred_region
        %s698 = ssub.s32 %s32, 1
        // Predicated region
        $region117: #{multilabel_forward.1} parent=115 // pred_check
          %p699 = pneg %p147
        $region118: #{multilabel_forward.1} parent=115 // pred_check_branch
          %701 = sbr.rel (%p699) target = $region120
        $region119: #{multilabel_forward.1} parent=115 // pred_region
          %703 = dma.done [#allocation3], 2048
        $region120: #{multilabel_forward.1} parent=115 // pred_fallthru
          _
        // Predicated region
        $region121: #{multilabel_forward.1} parent=115 // pred_check
          %p704 = pneg %p525
        $region122: #{multilabel_forward.1} parent=115 // pred_check_branch
          %706 = sbr.rel (%p704) target = $region124
        $region123: #{multilabel_forward.1} parent=115 // pred_region
          %708 = dma.done [#allocation5], 256
        $region124: #{multilabel_forward.1} parent=115 // pred_fallthru
          _
        %p709 = scmp.lt.s32.totalorder %s37, 1
        %s710 = scalar_select %p709, %s37, 1
        %s711 = smul.addr %s710, 8
        %s712 = scalar_lea.vmem %s0, %s711
        %p713 = pneg %p58
        %p714 = pneg %p55
        %p715 = scmp.lt.s32.totalorder %s37, 1
        %s716 = scalar_select %p715, %s37, 1
        %s717 = scalar_lea.vmem %s1, %s716
        %p718 = pneg %p84
        %p719 = pneg %p81
        %p720 = pneg %p105
        %p721 = pneg %p102
        %p722 = pneg %p126
        %p723 = pneg %p123
        %p724 = pneg %p147
        %p725 = pneg %p144
        %p726 = pneg %p168
        %p727 = pneg %p165
        %p728 = pneg %p189
        %p729 = pneg %p186
        %p730 = pneg %p210
        %p731 = pneg %p207
        %p732 = pneg %p231
        %p733 = pneg %p228
        %p734 = pneg %p252
        %p735 = pneg %p249
        %p736 = pneg %p273
        %p737 = pneg %p270
        %p738 = pneg %p294
        %p739 = pneg %p291
        %p740 = pneg %p315
        %p741 = pneg %p312
        %p742 = pneg %p336
        %p743 = pneg %p333
        %p744 = pneg %p357
        %p745 = pneg %p354
        %p746 = pneg %p378
        %p747 = pneg %p375
        %p748 = pneg %p399
        %p749 = pneg %p396
        %p750 = pneg %p420
        %p751 = pneg %p417
        %p752 = pneg %p441
        %p753 = pneg %p438
        %p754 = pneg %p462
        %p755 = pneg %p459
        %p756 = pneg %p483
        %p757 = pneg %p480
        %p758 = pneg %p504
        %p759 = pneg %p501
        %p760 = pneg %p525
        %p761 = pneg %p522
        %p762 = pneg %p546
        %p763 = pneg %p543
        %p764 = pneg %p572
        %p765 = pneg %p569
        %p766 = scmp.lt.s32.totalorder %s37, 1
        %s767 = scalar_select %p766, %s37, 1
        %s768 = smul.addr %s767, 8
        %s769 = scalar_lea.vmem %s24, %s768
        %p770 = scmp.lt.s32.totalorder %s37, 1
        %s771 = scalar_select %p770, %s37, 1
        %s772 = smul.addr %s771, 8
        %s773 = scalar_lea.vmem %s0, %s772
        %p774 = scmp.lt.s32.totalorder %s37, 1
        %s775 = scalar_select %p774, %s37, 1
        %s776 = scalar_lea.vmem %s1, %s775
        %p777 = scmp.lt.s32.totalorder %s37, 1
        %s778 = scalar_select %p777, %s37, 1
        %s779 = smul.addr %s778, 8
        %s780 = scalar_lea.vmem %s24, %s779
        %v782 = vld [vmem:[%s776] sm:$0x1]
        %v783 = vsub.f32 1.0, %v782
        %v784 = vmul.f32 %v783, -1e+09
        %v785 = vld [vmem:[%s773] sm:$0xff]
        %v786 = vld [vmem:[%s2] sm:$0x1]
        %v787 = vld [vmem:[%s3] sm:$0x1]
        %vm788 = vcmask 261120
        %v789 = vsel %vm788, %v785, 0.0
        %790 = vadd.xlane.f32.xlu0 %v789
        %v791 = vpop.xlane.xlu0 %790
        %v792 = vrcp.pop 32.0
        %v793 = vmul.f32 32.0, %v792
        %v794 = vsub.f32 1.0, %v793
        %v795 = vmul.f32 %v792, %v794
        %v796 = vadd.f32 %v792, %v795
        %vm797 = vweird.f32 %v792
        %v798 = vsel %vm797, %v792, %v796
        %v799 = vmul.f32 %v791, %v798
        %v800 = vsub.f32 %v785, %v799
        %v801 = vmul.f32 %v800, %v800
        %v802 = vsel %vm788, %v801, 0.0
        %803 = vadd.xlane.f32.xlu0 %v802
        %v804 = vpop.xlane.xlu0 %803
        %v805 = vmul.f32 %v804, %v798
        %v806 = vadd.f32 %v805, 1e-12
        %v807 = vrsqrt.pop %v806
        %v808 = vmul.f32 %v807, %v806
        %v809 = vmul.f32 %v808, %v807
        %v810 = vmul.f32 0.5, %v809
        %v811 = vsub.f32 1.5, %v810
        %v812 = vmul.f32 %v807, %v811
        %vm813 = vweird.f32 %v806
        %vm814 = vweird.f32 %v807
        %vm815 = vmor %vm813, %vm814
        %v816 = vsel %vm815, %v807, %v812
        %v817 = vmul.f32 %v800, %v816
        %v819 = vperm.slane %v786, 0
        %v821 = vmul.f32 %v817, %v819
        %v823 = vperm.slane %v787, 0
        %v825 = vadd.f32 %v821, %v823
        %v826 = vpack.c.bf16 %v825, %v825
        %v827 = vld [vmem:[#allocation2] sm:$0xf]
        %v828 = vld [vmem:[#allocation2 + $0x4] sm:$0xf]
        %v829 = vld [vmem:[#allocation2 + $0x8] sm:$0xf]
        %v830 = vld [vmem:[#allocation2 + $0xc] sm:$0xf]
        %v831 = vld [vmem:[%s7] sm:$0x1]
        %v833 = vperm.slane %v831, 0
        %v839 = vunpack.c.l.b16 %v827
        %v840 = vunpack.c.l.b16 %v828
        %v841 = vunpack.c.l.b16 %v829
        %v842 = vunpack.c.l.b16 %v830
        %v843 = vpack.c.b16 %v840, %v839
        %v844 = vpack.c.b16 %v842, %v841
        %v848 = vsel %vm788, %v826, 0
        %850 = vmatpush.bf16.msra.mxu0 0
        %851 = vmatpush.bf16.msra.mxu0 0
        %852 = vmatpush.bf16.msra.mxu0 0
        %853 = vmatpush.bf16.msra.mxu0 0
        %854 = vmatpush.bf16.msra.mxu0 0
        %855 = vmatpush.bf16.msra.mxu0 0
        %856 = vmatpush.bf16.msra.mxu0 %v844
        %857 = vmatpush.bf16.msra.mxu0 %v843
        %858 = vmatmul.bf16.gmra.mxu0 %v848
        %v859 = vpop.f32.mrf.mxu0
        %v860 = vadd.f32 %v833, %v859
        %v861 = vpop.f32.mrf.mxu0
        %862 = vdwg.mxu0
        %v863 = vld [vmem:[%s5] sm:$0xf]
        %v864 = vld [vmem:[%s5 + $0x4] sm:$0xf]
        %v865 = vld [vmem:[%s5 + $0x8] sm:$0xf]
        %v866 = vld [vmem:[%s5 + $0xc] sm:$0xf]
        %v867 = vld [vmem:[%s8] sm:$0x1]
        %v869 = vperm.slane %v867, 0
        %v875 = vunpack.c.l.b16 %v863
        %v876 = vunpack.c.l.b16 %v864
        %v877 = vunpack.c.l.b16 %v865
        %v878 = vunpack.c.l.b16 %v866
        %v879 = vpack.c.b16 %v876, %v875
        %v880 = vpack.c.b16 %v878, %v877
        %883 = vmatpush.bf16.msra.mxu0 0
        %884 = vmatpush.bf16.msra.mxu0 0
        %885 = vmatpush.bf16.msra.mxu0 0
        %886 = vmatpush.bf16.msra.mxu0 0
        %887 = vmatpush.bf16.msra.mxu0 0
        %888 = vmatpush.bf16.msra.mxu0 0
        %889 = vmatpush.bf16.msra.mxu0 %v880
        %890 = vmatpush.bf16.msra.mxu0 %v879
        %891 = vmatmul.bf16.gmra.mxu0 %v848
        %v892 = vpop.f32.mrf.mxu0
        %v893 = vadd.f32 %v869, %v892
        %v894 = vpop.f32.mrf.mxu0
        %895 = vdwg.mxu0
        %v896 = vld [vmem:[%s6] sm:$0xf]
        %v897 = vld [vmem:[%s6 + $0x4] sm:$0xf]
        %v898 = vld [vmem:[%s6 + $0x8] sm:$0xf]
        %v899 = vld [vmem:[%s6 + $0xc] sm:$0xf]
        %v900 = vld [vmem:[%s9] sm:$0x1]
        %v902 = vperm.slane %v900, 0
        %v908 = vunpack.c.l.b16 %v896
        %v909 = vunpack.c.l.b16 %v897
        %v910 = vunpack.c.l.b16 %v898
        %v911 = vunpack.c.l.b16 %v899
        %v912 = vpack.c.b16 %v909, %v908
        %v913 = vpack.c.b16 %v911, %v910
        %916 = vmatpush.bf16.msra.mxu0 0
        %917 = vmatpush.bf16.msra.mxu0 0
        %918 = vmatpush.bf16.msra.mxu0 0
        %919 = vmatpush.bf16.msra.mxu0 0
        %920 = vmatpush.bf16.msra.mxu0 0
        %921 = vmatpush.bf16.msra.mxu0 0
        %922 = vmatpush.bf16.msra.mxu0 %v913
        %923 = vmatpush.bf16.msra.mxu0 %v912
        %924 = vmatmul.bf16.gmra.mxu0 %v848
        %v925 = vpop.f32.mrf.mxu0
        %v926 = vadd.f32 %v902, %v925
        %v927 = vpop.f32.mrf.mxu0
        %928 = vdwg.mxu0
        %v929 = vpack.c.bf16 %v860, %v860
        %v930 = vpack.c.bf16 %v893, %v893
        %vm931 = vcmask 64512
        %v933 = vsel %vm931, %v929, 0
        %v936 = vsel %vm931, %v930, 0
        %938 = vmatpush.bf16.xpose.msra.mxu0 0
        %939 = vmatpush.bf16.xpose.msra.mxu0 0
        %940 = vmatpush.bf16.xpose.msra.mxu0 0
        %941 = vmatpush.bf16.xpose.msra.mxu0 0
        %942 = vmatpush.bf16.xpose.msra.mxu0 0
        %943 = vmatpush.bf16.xpose.msra.mxu0 0
        %944 = vmatpush.bf16.xpose.msra.mxu0 0
        %945 = vmatpush.bf16.xpose.msra.mxu0 %v936
        %946 = vmatmul.bf16.gmra.mxu0 %v933
        %v947 = vpop.f32.mrf.mxu0
        %v948 = vadd.f32 0.0, %v947
        %v949 = vpop.f32.mrf.mxu0
        %950 = vdwg.mxu0
        %v951 = vmul.f32 %v948, 0.35355338
        %v953 = vperm.slane %v784, 0
        %v955 = vadd.f32 %v951, %v953
        %v956 = vsel %vm931, %v955, -inf
        %957 = vmax.xlane.f32.xlu0 %v956
        %v958 = vpop.xlane.xlu0 %957
        %v959 = vsub.f32 %v955, %v958
        %v960 = vmul.f32 %v959, 1.442695
        %v961 = vpow.pop %v960
        %v962 = vsel %vm931, %v961, 0.0
        %963 = vadd.xlane.f32.xlu0 %v962
        %v964 = vpop.xlane.xlu0 %963
        %v965 = vrcp.pop %v964
        %v966 = vmul.f32 %v961, %v965
        %v967 = vpack.c.bf16 %v966, %v966
        %v968 = vpack.c.bf16 %v926, %v926
        %v970 = vsel %vm931, %v967, 0
        %vm972 = vcmask 1043456
        %v974 = vsel %vm972, %v968, 0
        %976 = vmatpush.bf16.msra.mxu0 0
        %977 = vmatpush.bf16.msra.mxu0 0
        %978 = vmatpush.bf16.msra.mxu0 0
        %979 = vmatpush.bf16.msra.mxu0 0
        %980 = vmatpush.bf16.msra.mxu0 0
        %981 = vmatpush.bf16.msra.mxu0 0
        %982 = vmatpush.bf16.msra.mxu0 0
        %983 = vmatpush.bf16.msra.mxu0 %v974
        %984 = vmatmul.bf16.gmra.mxu0 %v970
        %v985 = vpop.f32.mrf.mxu0
        %v986 = vadd.f32 0.0, %v985
        %v987 = vpop.f32.mrf.mxu0
        %988 = vdwg.mxu0
        %s989 = scalar_lea.vmem [#allocation2], 16
        %v990 = vld [vmem:[%s989] sm:$0xf]
        %v991 = vld [vmem:[%s989 + $0x4] sm:$0xf]
        %v992 = vld [vmem:[%s989 + $0x8] sm:$0xf]
        %v993 = vld [vmem:[%s989 + $0xc] sm:$0xf]
        %s994 = scalar_lea.vmem %s7, 1
        %v995 = vld [vmem:[%s994] sm:$0x1]
        %v997 = vperm.slane %v995, 0
        %v1003 = vunpack.c.l.b16 %v990
        %v1004 = vunpack.c.l.b16 %v991
        %v1005 = vunpack.c.l.b16 %v992
        %v1006 = vunpack.c.l.b16 %v993
        %v1007 = vpack.c.b16 %v1004, %v1003
        %v1008 = vpack.c.b16 %v1006, %v1005
        %1011 = vmatpush.bf16.msra.mxu0 0
        %1012 = vmatpush.bf16.msra.mxu0 0
        %1013 = vmatpush.bf16.msra.mxu0 0
        %1014 = vmatpush.bf16.msra.mxu0 0
        %1015 = vmatpush.bf16.msra.mxu0 0
        %1016 = vmatpush.bf16.msra.mxu0 0
        %1017 = vmatpush.bf16.msra.mxu0 %v1008
        %1018 = vmatpush.bf16.msra.mxu0 %v1007
        %1019 = vmatmul.bf16.gmra.mxu0 %v848
        %v1020 = vpop.f32.mrf.mxu0
        %v1021 = vadd.f32 %v997, %v1020
        %v1022 = vpop.f32.mrf.mxu0
        %1023 = vdwg.mxu0
        %s1024 = scalar_lea.vmem %s5, 16
        %v1025 = vld [vmem:[%s1024] sm:$0xf]
        %v1026 = vld [vmem:[%s1024 + $0x4] sm:$0xf]
        %v1027 = vld [vmem:[%s1024 + $0x8] sm:$0xf]
        %v1028 = vld [vmem:[%s1024 + $0xc] sm:$0xf]
        %s1029 = scalar_lea.vmem %s8, 1
        %v1030 = vld [vmem:[%s1029] sm:$0x1]
        %v1032 = vperm.slane %v1030, 0
        %v1038 = vunpack.c.l.b16 %v1025
        %v1039 = vunpack.c.l.b16 %v1026
        %v1040 = vunpack.c.l.b16 %v1027
        %v1041 = vunpack.c.l.b16 %v1028
        %v1042 = vpack.c.b16 %v1039, %v1038
        %v1043 = vpack.c.b16 %v1041, %v1040
        %1046 = vmatpush.bf16.msra.mxu0 0
        %1047 = vmatpush.bf16.msra.mxu0 0
        %1048 = vmatpush.bf16.msra.mxu0 0
        %1049 = vmatpush.bf16.msra.mxu0 0
        %1050 = vmatpush.bf16.msra.mxu0 0
        %1051 = vmatpush.bf16.msra.mxu0 0
        %1052 = vmatpush.bf16.msra.mxu0 %v1043
        %1053 = vmatpush.bf16.msra.mxu0 %v1042
        %1054 = vmatmul.bf16.gmra.mxu0 %v848
        %v1055 = vpop.f32.mrf.mxu0
        %v1056 = vadd.f32 %v1032, %v1055
        %v1057 = vpop.f32.mrf.mxu0
        %1058 = vdwg.mxu0
        %s1059 = scalar_lea.vmem %s6, 16
        %v1060 = vld [vmem:[%s1059] sm:$0xf]
        %v1061 = vld [vmem:[%s1059 + $0x4] sm:$0xf]
        %v1062 = vld [vmem:[%s1059 + $0x8] sm:$0xf]
        %v1063 = vld [vmem:[%s1059 + $0xc] sm:$0xf]
        %s1064 = scalar_lea.vmem %s9, 1
        %v1065 = vld [vmem:[%s1064] sm:$0x1]
        %v1067 = vperm.slane %v1065, 0
        %v1073 = vunpack.c.l.b16 %v1060
        %v1074 = vunpack.c.l.b16 %v1061
        %v1075 = vunpack.c.l.b16 %v1062
        %v1076 = vunpack.c.l.b16 %v1063
        %v1077 = vpack.c.b16 %v1074, %v1073
        %v1078 = vpack.c.b16 %v1076, %v1075
        %1081 = vmatpush.bf16.msra.mxu0 0
        %1082 = vmatpush.bf16.msra.mxu0 0
        %1083 = vmatpush.bf16.msra.mxu0 0
        %1084 = vmatpush.bf16.msra.mxu0 0
        %1085 = vmatpush.bf16.msra.mxu0 0
        %1086 = vmatpush.bf16.msra.mxu0 0
        %1087 = vmatpush.bf16.msra.mxu0 %v1078
        %1088 = vmatpush.bf16.msra.mxu0 %v1077
        %1089 = vmatmul.bf16.gmra.mxu0 %v848
        %v1090 = vpop.f32.mrf.mxu0
        %v1091 = vadd.f32 %v1067, %v1090
        %v1092 = vpop.f32.mrf.mxu0
        %1093 = vdwg.mxu0
        %v1094 = vpack.c.bf16 %v1021, %v1021
        %v1095 = vpack.c.bf16 %v1056, %v1056
        %v1097 = vsel %vm931, %v1094, 0
        %v1100 = vsel %vm931, %v1095, 0
        %1102 = vmatpush.bf16.xpose.msra.mxu0 0
        %1103 = vmatpush.bf16.xpose.msra.mxu0 0
        %1104 = vmatpush.bf16.xpose.msra.mxu0 0
        %1105 = vmatpush.bf16.xpose.msra.mxu0 0
        %1106 = vmatpush.bf16.xpose.msra.mxu0 0
        %1107 = vmatpush.bf16.xpose.msra.mxu0 0
        %1108 = vmatpush.bf16.xpose.msra.mxu0 0
        %1109 = vmatpush.bf16.xpose.msra.mxu0 %v1100
        %1110 = vmatmul.bf16.gmra.mxu0 %v1097
        %v1111 = vpop.f32.mrf.mxu0
        %v1112 = vadd.f32 0.0, %v1111
        %v1113 = vpop.f32.mrf.mxu0
        %1114 = vdwg.mxu0
        %v1115 = vmul.f32 %v1112, 0.35355338
        %v1116 = vadd.f32 %v1115, %v953
        %v1117 = vsel %vm931, %v1116, -inf
        %1118 = vmax.xlane.f32.xlu0 %v1117
        %v1119 = vpop.xlane.xlu0 %1118
        %v1120 = vsub.f32 %v1116, %v1119
        %v1121 = vmul.f32 %v1120, 1.442695
        %v1122 = vpow.pop %v1121
        %v1123 = vsel %vm931, %v1122, 0.0
        %1124 = vadd.xlane.f32.xlu0 %v1123
        %v1125 = vpop.xlane.xlu0 %1124
        %v1126 = vrcp.pop %v1125
        %v1127 = vmul.f32 %v1122, %v1126
        %v1128 = vpack.c.bf16 %v1127, %v1127
        %v1129 = vpack.c.bf16 %v1091, %v1091
        %v1131 = vsel %vm931, %v1128, 0
        %v1134 = vsel %vm972, %v1129, 0
        %1136 = vmatpush.bf16.msra.mxu0 0
        %1137 = vmatpush.bf16.msra.mxu0 0
        %1138 = vmatpush.bf16.msra.mxu0 0
        %1139 = vmatpush.bf16.msra.mxu0 0
        %1140 = vmatpush.bf16.msra.mxu0 0
        %1141 = vmatpush.bf16.msra.mxu0 0
        %1142 = vmatpush.bf16.msra.mxu0 0
        %1143 = vmatpush.bf16.msra.mxu0 %v1134
        %1144 = vmatmul.bf16.gmra.mxu0 %v1131
        %v1145 = vpop.f32.mrf.mxu0
        %v1146 = vadd.f32 0.0, %v1145
        %v1147 = vpop.f32.mrf.mxu0
        %1148 = vdwg.mxu0
        %s1149 = scalar_lea.vmem [#allocation2], 32
        %v1150 = vld [vmem:[%s1149] sm:$0xf]
        %v1151 = vld [vmem:[%s1149 + $0x4] sm:$0xf]
        %v1152 = vld [vmem:[%s1149 + $0x8] sm:$0xf]
        %v1153 = vld [vmem:[%s1149 + $0xc] sm:$0xf]
        %s1154 = scalar_lea.vmem %s7, 2
        %v1155 = vld [vmem:[%s1154] sm:$0x1]
        %v1157 = vperm.slane %v1155, 0
        %v1163 = vunpack.c.l.b16 %v1150
        %v1164 = vunpack.c.l.b16 %v1151
        %v1165 = vunpack.c.l.b16 %v1152
        %v1166 = vunpack.c.l.b16 %v1153
        %v1167 = vpack.c.b16 %v1164, %v1163
        %v1168 = vpack.c.b16 %v1166, %v1165
        %1171 = vmatpush.bf16.msra.mxu0 0
        %1172 = vmatpush.bf16.msra.mxu0 0
        %1173 = vmatpush.bf16.msra.mxu0 0
        %1174 = vmatpush.bf16.msra.mxu0 0
        %1175 = vmatpush.bf16.msra.mxu0 0
        %1176 = vmatpush.bf16.msra.mxu0 0
        %1177 = vmatpush.bf16.msra.mxu0 %v1168
        %1178 = vmatpush.bf16.msra.mxu0 %v1167
        %1179 = vmatmul.bf16.gmra.mxu0 %v848
        %v1180 = vpop.f32.mrf.mxu0
        %v1181 = vadd.f32 %v1157, %v1180
        %v1182 = vpop.f32.mrf.mxu0
        %1183 = vdwg.mxu0
        %s1184 = scalar_lea.vmem %s5, 32
        %v1185 = vld [vmem:[%s1184] sm:$0xf]
        %v1186 = vld [vmem:[%s1184 + $0x4] sm:$0xf]
        %v1187 = vld [vmem:[%s1184 + $0x8] sm:$0xf]
        %v1188 = vld [vmem:[%s1184 + $0xc] sm:$0xf]
        %s1189 = scalar_lea.vmem %s8, 2
        %v1190 = vld [vmem:[%s1189] sm:$0x1]
        %v1192 = vperm.slane %v1190, 0
        %v1198 = vunpack.c.l.b16 %v1185
        %v1199 = vunpack.c.l.b16 %v1186
        %v1200 = vunpack.c.l.b16 %v1187
        %v1201 = vunpack.c.l.b16 %v1188
        %v1202 = vpack.c.b16 %v1199, %v1198
        %v1203 = vpack.c.b16 %v1201, %v1200
        %1206 = vmatpush.bf16.msra.mxu0 0
        %1207 = vmatpush.bf16.msra.mxu0 0
        %1208 = vmatpush.bf16.msra.mxu0 0
        %1209 = vmatpush.bf16.msra.mxu0 0
        %1210 = vmatpush.bf16.msra.mxu0 0
        %1211 = vmatpush.bf16.msra.mxu0 0
        %1212 = vmatpush.bf16.msra.mxu0 %v1203
        %1213 = vmatpush.bf16.msra.mxu0 %v1202
        %1214 = vmatmul.bf16.gmra.mxu0 %v848
        %v1215 = vpop.f32.mrf.mxu0
        %v1216 = vadd.f32 %v1192, %v1215
        %v1217 = vpop.f32.mrf.mxu0
        %1218 = vdwg.mxu0
        %s1219 = scalar_lea.vmem %s6, 32
        %v1220 = vld [vmem:[%s1219] sm:$0xf]
        %v1221 = vld [vmem:[%s1219 + $0x4] sm:$0xf]
        %v1222 = vld [vmem:[%s1219 + $0x8] sm:$0xf]
        %v1223 = vld [vmem:[%s1219 + $0xc] sm:$0xf]
        %s1224 = scalar_lea.vmem %s9, 2
        %v1225 = vld [vmem:[%s1224] sm:$0x1]
        %v1227 = vperm.slane %v1225, 0
        %v1233 = vunpack.c.l.b16 %v1220
        %v1234 = vunpack.c.l.b16 %v1221
        %v1235 = vunpack.c.l.b16 %v1222
        %v1236 = vunpack.c.l.b16 %v1223
        %v1237 = vpack.c.b16 %v1234, %v1233
        %v1238 = vpack.c.b16 %v1236, %v1235
        %1241 = vmatpush.bf16.msra.mxu0 0
        %1242 = vmatpush.bf16.msra.mxu0 0
        %1243 = vmatpush.bf16.msra.mxu0 0
        %1244 = vmatpush.bf16.msra.mxu0 0
        %1245 = vmatpush.bf16.msra.mxu0 0
        %1246 = vmatpush.bf16.msra.mxu0 0
        %1247 = vmatpush.bf16.msra.mxu0 %v1238
        %1248 = vmatpush.bf16.msra.mxu0 %v1237
        %1249 = vmatmul.bf16.gmra.mxu0 %v848
        %v1250 = vpop.f32.mrf.mxu0
        %v1251 = vadd.f32 %v1227, %v1250
        %v1252 = vpop.f32.mrf.mxu0
        %1253 = vdwg.mxu0
        %v1254 = vpack.c.bf16 %v1181, %v1181
        %v1255 = vpack.c.bf16 %v1216, %v1216
        %v1257 = vsel %vm931, %v1254, 0
        %v1260 = vsel %vm931, %v1255, 0
        %1262 = vmatpush.bf16.xpose.msra.mxu0 0
        %1263 = vmatpush.bf16.xpose.msra.mxu0 0
        %1264 = vmatpush.bf16.xpose.msra.mxu0 0
        %1265 = vmatpush.bf16.xpose.msra.mxu0 0
        %1266 = vmatpush.bf16.xpose.msra.mxu0 0
        %1267 = vmatpush.bf16.xpose.msra.mxu0 0
        %1268 = vmatpush.bf16.xpose.msra.mxu0 0
        %1269 = vmatpush.bf16.xpose.msra.mxu0 %v1260
        %1270 = vmatmul.bf16.gmra.mxu0 %v1257
        %v1271 = vpop.f32.mrf.mxu0
        %v1272 = vadd.f32 0.0, %v1271
        %v1273 = vpop.f32.mrf.mxu0
        %1274 = vdwg.mxu0
        %v1275 = vmul.f32 %v1272, 0.35355338
        %v1276 = vadd.f32 %v1275, %v953
        %v1277 = vsel %vm931, %v1276, -inf
        %1278 = vmax.xlane.f32.xlu0 %v1277
        %v1279 = vpop.xlane.xlu0 %1278
        %v1280 = vsub.f32 %v1276, %v1279
        %v1281 = vmul.f32 %v1280, 1.442695
        %v1282 = vpow.pop %v1281
        %v1283 = vsel %vm931, %v1282, 0.0
        %1284 = vadd.xlane.f32.xlu0 %v1283
        %v1285 = vpop.xlane.xlu0 %1284
        %v1286 = vrcp.pop %v1285
        %v1287 = vmul.f32 %v1282, %v1286
        %v1288 = vpack.c.bf16 %v1287, %v1287
        %v1289 = vpack.c.bf16 %v1251, %v1251
        %v1291 = vsel %vm931, %v1288, 0
        %v1294 = vsel %vm972, %v1289, 0
        %1296 = vmatpush.bf16.msra.mxu0 0
        %1297 = vmatpush.bf16.msra.mxu0 0
        %1298 = vmatpush.bf16.msra.mxu0 0
        %1299 = vmatpush.bf16.msra.mxu0 0
        %1300 = vmatpush.bf16.msra.mxu0 0
        %1301 = vmatpush.bf16.msra.mxu0 0
        %1302 = vmatpush.bf16.msra.mxu0 0
        %1303 = vmatpush.bf16.msra.mxu0 %v1294
        %1304 = vmatmul.bf16.gmra.mxu0 %v1291
        %v1305 = vpop.f32.mrf.mxu0
        %v1306 = vadd.f32 0.0, %v1305
        %v1307 = vpop.f32.mrf.mxu0
        %1308 = vdwg.mxu0
        %s1309 = scalar_lea.vmem [#allocation2], 48
        %v1310 = vld [vmem:[%s1309] sm:$0xf]
        %v1311 = vld [vmem:[%s1309 + $0x4] sm:$0xf]
        %v1312 = vld [vmem:[%s1309 + $0x8] sm:$0xf]
        %v1313 = vld [vmem:[%s1309 + $0xc] sm:$0xf]
        %s1314 = scalar_lea.vmem %s7, 3
        %v1315 = vld [vmem:[%s1314] sm:$0x1]
        %v1317 = vperm.slane %v1315, 0
        %v1323 = vunpack.c.l.b16 %v1310
        %v1324 = vunpack.c.l.b16 %v1311
        %v1325 = vunpack.c.l.b16 %v1312
        %v1326 = vunpack.c.l.b16 %v1313
        %v1327 = vpack.c.b16 %v1324, %v1323
        %v1328 = vpack.c.b16 %v1326, %v1325
        %1331 = vmatpush.bf16.msra.mxu0 0
        %1332 = vmatpush.bf16.msra.mxu0 0
        %1333 = vmatpush.bf16.msra.mxu0 0
        %1334 = vmatpush.bf16.msra.mxu0 0
        %1335 = vmatpush.bf16.msra.mxu0 0
        %1336 = vmatpush.bf16.msra.mxu0 0
        %1337 = vmatpush.bf16.msra.mxu0 %v1328
        %1338 = vmatpush.bf16.msra.mxu0 %v1327
        %1339 = vmatmul.bf16.gmra.mxu0 %v848
        %v1340 = vpop.f32.mrf.mxu0
        %v1341 = vadd.f32 %v1317, %v1340
        %v1342 = vpop.f32.mrf.mxu0
        %1343 = vdwg.mxu0
        %s1344 = scalar_lea.vmem %s5, 48
        %v1345 = vld [vmem:[%s1344] sm:$0xf]
        %v1346 = vld [vmem:[%s1344 + $0x4] sm:$0xf]
        %v1347 = vld [vmem:[%s1344 + $0x8] sm:$0xf]
        %v1348 = vld [vmem:[%s1344 + $0xc] sm:$0xf]
        %s1349 = scalar_lea.vmem %s8, 3
        %v1350 = vld [vmem:[%s1349] sm:$0x1]
        %v1352 = vperm.slane %v1350, 0
        %v1358 = vunpack.c.l.b16 %v1345
        %v1359 = vunpack.c.l.b16 %v1346
        %v1360 = vunpack.c.l.b16 %v1347
        %v1361 = vunpack.c.l.b16 %v1348
        %v1362 = vpack.c.b16 %v1359, %v1358
        %v1363 = vpack.c.b16 %v1361, %v1360
        %1366 = vmatpush.bf16.msra.mxu0 0
        %1367 = vmatpush.bf16.msra.mxu0 0
        %1368 = vmatpush.bf16.msra.mxu0 0
        %1369 = vmatpush.bf16.msra.mxu0 0
        %1370 = vmatpush.bf16.msra.mxu0 0
        %1371 = vmatpush.bf16.msra.mxu0 0
        %1372 = vmatpush.bf16.msra.mxu0 %v1363
        %1373 = vmatpush.bf16.msra.mxu0 %v1362
        %1374 = vmatmul.bf16.gmra.mxu0 %v848
        %v1375 = vpop.f32.mrf.mxu0
        %v1376 = vadd.f32 %v1352, %v1375
        %v1377 = vpop.f32.mrf.mxu0
        %1378 = vdwg.mxu0
        %s1379 = scalar_lea.vmem %s6, 48
        %v1380 = vld [vmem:[%s1379] sm:$0xf]
        %v1381 = vld [vmem:[%s1379 + $0x4] sm:$0xf]
        %v1382 = vld [vmem:[%s1379 + $0x8] sm:$0xf]
        %v1383 = vld [vmem:[%s1379 + $0xc] sm:$0xf]
        %s1384 = scalar_lea.vmem %s9, 3
        %v1385 = vld [vmem:[%s1384] sm:$0x1]
        %v1387 = vperm.slane %v1385, 0
        %v1393 = vunpack.c.l.b16 %v1380
        %v1394 = vunpack.c.l.b16 %v1381
        %v1395 = vunpack.c.l.b16 %v1382
        %v1396 = vunpack.c.l.b16 %v1383
        %v1397 = vpack.c.b16 %v1394, %v1393
        %v1398 = vpack.c.b16 %v1396, %v1395
        %1401 = vmatpush.bf16.msra.mxu0 0
        %1402 = vmatpush.bf16.msra.mxu0 0
        %1403 = vmatpush.bf16.msra.mxu0 0
        %1404 = vmatpush.bf16.msra.mxu0 0
        %1405 = vmatpush.bf16.msra.mxu0 0
        %1406 = vmatpush.bf16.msra.mxu0 0
        %1407 = vmatpush.bf16.msra.mxu0 %v1398
        %1408 = vmatpush.bf16.msra.mxu0 %v1397
        %1409 = vmatmul.bf16.gmra.mxu0 %v848
        %v1410 = vpop.f32.mrf.mxu0
        %v1411 = vadd.f32 %v1387, %v1410
        %v1412 = vpop.f32.mrf.mxu0
        %1413 = vdwg.mxu0
        %v1414 = vpack.c.bf16 %v1341, %v1341
        %v1415 = vpack.c.bf16 %v1376, %v1376
        %v1417 = vsel %vm931, %v1414, 0
        %v1420 = vsel %vm931, %v1415, 0
        %1422 = vmatpush.bf16.xpose.msra.mxu0 0
        %1423 = vmatpush.bf16.xpose.msra.mxu0 0
        %1424 = vmatpush.bf16.xpose.msra.mxu0 0
        %1425 = vmatpush.bf16.xpose.msra.mxu0 0
        %1426 = vmatpush.bf16.xpose.msra.mxu0 0
        %1427 = vmatpush.bf16.xpose.msra.mxu0 0
        %1428 = vmatpush.bf16.xpose.msra.mxu0 0
        %1429 = vmatpush.bf16.xpose.msra.mxu0 %v1420
        %1430 = vmatmul.bf16.gmra.mxu0 %v1417
        %v1431 = vpop.f32.mrf.mxu0
        %v1432 = vadd.f32 0.0, %v1431
        %v1433 = vpop.f32.mrf.mxu0
        %1434 = vdwg.mxu0
        %v1435 = vmul.f32 %v1432, 0.35355338
        %v1436 = vadd.f32 %v1435, %v953
        %v1437 = vsel %vm931, %v1436, -inf
        %1438 = vmax.xlane.f32.xlu0 %v1437
        %v1439 = vpop.xlane.xlu0 %1438
        %v1440 = vsub.f32 %v1436, %v1439
        %v1441 = vmul.f32 %v1440, 1.442695
        %v1442 = vpow.pop %v1441
        %v1443 = vsel %vm931, %v1442, 0.0
        %1444 = vadd.xlane.f32.xlu0 %v1443
        %v1445 = vpop.xlane.xlu0 %1444
        %v1446 = vrcp.pop %v1445
        %v1447 = vmul.f32 %v1442, %v1446
        %v1448 = vpack.c.bf16 %v1447, %v1447
        %v1449 = vpack.c.bf16 %v1411, %v1411
        %v1451 = vsel %vm931, %v1448, 0
        %v1454 = vsel %vm972, %v1449, 0
        %1456 = vmatpush.bf16.msra.mxu0 0
        %1457 = vmatpush.bf16.msra.mxu0 0
        %1458 = vmatpush.bf16.msra.mxu0 0
        %1459 = vmatpush.bf16.msra.mxu0 0
        %1460 = vmatpush.bf16.msra.mxu0 0
        %1461 = vmatpush.bf16.msra.mxu0 0
        %1462 = vmatpush.bf16.msra.mxu0 0
        %1463 = vmatpush.bf16.msra.mxu0 %v1454
        %1464 = vmatmul.bf16.gmra.mxu0 %v1451
        %v1465 = vpop.f32.mrf.mxu0
        %v1466 = vadd.f32 0.0, %v1465
        %v1467 = vpop.f32.mrf.mxu0
        %1468 = vdwg.mxu0
        %1470 = vrot.lane.b32.xlu0 %v1146, 8
        %v1471 = vpop.permute.xlu0 %1470
        %1474 = vrot.lane.b32.xlu0 %v1306, 16
        %v1475 = vpop.permute.xlu0 %1474
        %1478 = vrot.lane.b32.xlu0 %v1466, 24
        %v1479 = vpop.permute.xlu0 %1478
        %v1481 = vsel %vm931, %v986, %v1471
        %vm1482 = vcmask 130048
        %v1483 = vsel %vm1482, %v1481, %v1475
        %vm1484 = vcmask 195584
        %v1485 = vsel %vm1484, %v1483, %v1479
        %v1486 = vpack.c.bf16 %v1485, %v1485
        %v1487 = vld [vmem:[%s10] sm:$0xf]
        %v1488 = vld [vmem:[%s10 + $0x4] sm:$0xf]
        %v1489 = vld [vmem:[%s10 + $0x8] sm:$0xf]
        %v1490 = vld [vmem:[%s10 + $0xc] sm:$0xf]
        %v1491 = vld [vmem:[%s11] sm:$0x1]
        %v1493 = vperm.slane %v1491, 0
        %v1499 = vunpack.c.l.b16 %v1487
        %v1500 = vunpack.c.l.b16 %v1488
        %v1501 = vunpack.c.l.b16 %v1489
        %v1502 = vunpack.c.l.b16 %v1490
        %v1503 = vpack.c.b16 %v1500, %v1499
        %v1504 = vpack.c.b16 %v1502, %v1501
        %v1508 = vsel %vm788, %v1486, 0
        %1510 = vmatpush.bf16.msra.mxu0 0
        %1511 = vmatpush.bf16.msra.mxu0 0
        %1512 = vmatpush.bf16.msra.mxu0 0
        %1513 = vmatpush.bf16.msra.mxu0 0
        %1514 = vmatpush.bf16.msra.mxu0 0
        %1515 = vmatpush.bf16.msra.mxu0 0
        %1516 = vmatpush.bf16.msra.mxu0 %v1504
        %1517 = vmatpush.bf16.msra.mxu0 %v1503
        %1518 = vmatmul.bf16.gmra.mxu0 %v1508
        %v1519 = vpop.f32.mrf.mxu0
        %v1520 = vadd.f32 %v1493, %v1519
        %v1521 = vpop.f32.mrf.mxu0
        %1522 = vdwg.mxu0
        %v1523 = vadd.f32 %v1520, %v825
        %v1524 = vld [vmem:[%s12] sm:$0x1]
        %v1525 = vld [vmem:[%s13] sm:$0x1]
        %v1526 = vsel %vm788, %v1523, 0.0
        %1527 = vadd.xlane.f32.xlu0 %v1526
        %v1528 = vpop.xlane.xlu0 %1527
        %v1529 = vmul.f32 %v1528, %v798
        %v1530 = vsub.f32 %v1523, %v1529
        %v1531 = vmul.f32 %v1530, %v1530
        %v1532 = vsel %vm788, %v1531, 0.0
        %1533 = vadd.xlane.f32.xlu0 %v1532
        %v1534 = vpop.xlane.xlu0 %1533
        %v1535 = vmul.f32 %v1534, %v798
        %v1536 = vadd.f32 %v1535, 1e-12
        %v1537 = vrsqrt.pop %v1536
        %v1538 = vmul.f32 %v1537, %v1536
        %v1539 = vmul.f32 %v1538, %v1537
        %v1540 = vmul.f32 0.5, %v1539
        %v1541 = vsub.f32 1.5, %v1540
        %v1542 = vmul.f32 %v1537, %v1541
        %vm1543 = vweird.f32 %v1536
        %vm1544 = vweird.f32 %v1537
        %vm1545 = vmor %vm1543, %vm1544
        %v1546 = vsel %vm1545, %v1537, %v1542
        %v1547 = vmul.f32 %v1530, %v1546
        %v1549 = vperm.slane %v1524, 0
        %v1551 = vmul.f32 %v1547, %v1549
        %v1553 = vperm.slane %v1525, 0
        %v1555 = vadd.f32 %v1551, %v1553
        %v1556 = vpack.c.bf16 %v1555, %v1555
        %v1557 = vld [vmem:[%s14] sm:$0xf]
        %v1558 = vld [vmem:[%s14 + $0x4] sm:$0xf]
        %v1559 = vld [vmem:[%s14 + $0x8] sm:$0xf]
        %v1560 = vld [vmem:[%s14 + $0xc] sm:$0xf]
        %v1561 = vld [vmem:[%s15] sm:$0x1]
        %v1563 = vperm.slane %v1561, 0
        %v1569 = vunpack.c.l.b16 %v1557
        %v1570 = vunpack.c.l.b16 %v1558
        %v1571 = vunpack.c.l.b16 %v1559
        %v1572 = vunpack.c.l.b16 %v1560
        %v1573 = vpack.c.b16 %v1570, %v1569
        %v1574 = vpack.c.b16 %v1572, %v1571
        %v1578 = vsel %vm788, %v1556, 0
        %1580 = vmatpush.bf16.msra.mxu0 0
        %1581 = vmatpush.bf16.msra.mxu0 0
        %1582 = vmatpush.bf16.msra.mxu0 0
        %1583 = vmatpush.bf16.msra.mxu0 0
        %1584 = vmatpush.bf16.msra.mxu0 0
        %1585 = vmatpush.bf16.msra.mxu0 0
        %1586 = vmatpush.bf16.msra.mxu0 %v1574
        %1587 = vmatpush.bf16.msra.mxu0 %v1573
        %1588 = vmatmul.bf16.gmra.mxu0 %v1578
        %v1589 = vpop.f32.mrf.mxu0
        %v1590 = vadd.f32 %v1563, %v1589
        %v1591 = vpop.f32.mrf.mxu0
        %1592 = vdwg.mxu0
        %v1593 = vmul.f32 %v1590, 0.5
        %v1594 = vmul.f32 %v1590, 0.044715
        %v1595 = vmul.f32 %v1594, %v1590
        %v1596 = vmul.f32 %v1595, %v1590
        %v1597 = vadd.f32 %v1590, %v1596
        %v1598 = vmul.f32 %v1597, 0.7978846
        %v1599 = vtanh.pop %v1598
        %v1600 = vadd.f32 %v1599, 1.0
        %v1601 = vmul.f32 %v1593, %v1600
        %v1602 = vpack.c.bf16 %v1601, %v1601
        %v1603 = vld [vmem:[%s16] sm:$0xf]
        %v1604 = vld [vmem:[%s16 + $0x4] sm:$0xf]
        %v1605 = vld [vmem:[%s16 + $0x8] sm:$0xf]
        %v1606 = vld [vmem:[%s16 + $0xc] sm:$0xf]
        %v1607 = vld [vmem:[%s16 + $0x10] sm:$0xf]
        %v1608 = vld [vmem:[%s16 + $0x14] sm:$0xf]
        %v1609 = vld [vmem:[%s16 + $0x18] sm:$0xf]
        %v1610 = vld [vmem:[%s16 + $0x1c] sm:$0xf]
        %v1611 = vld [vmem:[%s17] sm:$0x1]
        %v1613 = vperm.slane %v1611, 0
        %v1623 = vunpack.c.l.b16 %v1603
        %v1624 = vunpack.c.l.b16 %v1604
        %v1625 = vunpack.c.l.b16 %v1605
        %v1626 = vunpack.c.l.b16 %v1606
        %v1627 = vunpack.c.l.b16 %v1607
        %v1628 = vunpack.c.l.b16 %v1608
        %v1629 = vunpack.c.l.b16 %v1609
        %v1630 = vunpack.c.l.b16 %v1610
        %v1631 = vpack.c.b16 %v1624, %v1623
        %v1632 = vpack.c.b16 %v1626, %v1625
        %v1633 = vpack.c.b16 %v1628, %v1627
        %v1634 = vpack.c.b16 %v1630, %v1629
        %vm1639 = vcmask 523264
        %v1641 = vsel %vm1639, %v1602, 0
        %1643 = vmatpush.bf16.msra.mxu0 0
        %1644 = vmatpush.bf16.msra.mxu0 0
        %1645 = vmatpush.bf16.msra.mxu0 0
        %1646 = vmatpush.bf16.msra.mxu0 0
        %1647 = vmatpush.bf16.msra.mxu0 %v1634
        %1648 = vmatpush.bf16.msra.mxu0 %v1633
        %1649 = vmatpush.bf16.msra.mxu0 %v1632
        %1650 = vmatpush.bf16.msra.mxu0 %v1631
        %1651 = vmatmul.bf16.gmra.mxu0 %v1641
        %v1652 = vpop.f32.mrf.mxu0
        %v1653 = vadd.f32 %v1613, %v1652
        %v1654 = vpop.f32.mrf.mxu0
        %1655 = vdwg.mxu0
        %v1656 = vadd.f32 %v1653, %v1555
        %v1657 = vld [vmem:[%s18] sm:$0x1]
        %v1658 = vld [vmem:[%s19] sm:$0x1]
        %v1659 = vsel %vm788, %v1656, 0.0
        %1660 = vadd.xlane.f32.xlu0 %v1659
        %v1661 = vpop.xlane.xlu0 %1660
        %v1662 = vmul.f32 %v1661, %v798
        %v1663 = vsub.f32 %v1656, %v1662
        %v1664 = vmul.f32 %v1663, %v1663
        %v1665 = vsel %vm788, %v1664, 0.0
        %1666 = vadd.xlane.f32.xlu0 %v1665
        %v1667 = vpop.xlane.xlu0 %1666
        %v1668 = vmul.f32 %v1667, %v798
        %v1669 = vadd.f32 %v1668, 1e-12
        %v1670 = vrsqrt.pop %v1669
        %v1671 = vmul.f32 %v1670, %v1669
        %v1672 = vmul.f32 %v1671, %v1670
        %v1673 = vmul.f32 0.5, %v1672
        %v1674 = vsub.f32 1.5, %v1673
        %v1675 = vmul.f32 %v1670, %v1674
        %vm1676 = vweird.f32 %v1669
        %vm1677 = vweird.f32 %v1670
        %vm1678 = vmor %vm1676, %vm1677
        %v1679 = vsel %vm1678, %v1670, %v1675
        %v1680 = vmul.f32 %v1663, %v1679
        %v1682 = vperm.slane %v1657, 0
        %v1684 = vmul.f32 %v1680, %v1682
        %v1686 = vperm.slane %v1658, 0
        %v1688 = vadd.f32 %v1684, %v1686
        %v1689 = vpack.c.bf16 %v1688, %v1688
        %s1690 = scalar_lea.vmem [#allocation2], 64
        %v1691 = vld [vmem:[%s1690] sm:$0xf]
        %v1692 = vld [vmem:[%s1690 + $0x4] sm:$0xf]
        %v1693 = vld [vmem:[%s1690 + $0x8] sm:$0xf]
        %v1694 = vld [vmem:[%s1690 + $0xc] sm:$0xf]
        %s1695 = scalar_lea.vmem %s7, 4
        %v1696 = vld [vmem:[%s1695] sm:$0x1]
        %v1698 = vperm.slane %v1696, 0
        %v1704 = vunpack.c.l.b16 %v1691
        %v1705 = vunpack.c.l.b16 %v1692
        %v1706 = vunpack.c.l.b16 %v1693
        %v1707 = vunpack.c.l.b16 %v1694
        %v1708 = vpack.c.b16 %v1705, %v1704
        %v1709 = vpack.c.b16 %v1707, %v1706
        %v1713 = vsel %vm788, %v1689, 0
        %1715 = vmatpush.bf16.msra.mxu0 0
        %1716 = vmatpush.bf16.msra.mxu0 0
        %1717 = vmatpush.bf16.msra.mxu0 0
        %1718 = vmatpush.bf16.msra.mxu0 0
        %1719 = vmatpush.bf16.msra.mxu0 0
        %1720 = vmatpush.bf16.msra.mxu0 0
        %1721 = vmatpush.bf16.msra.mxu0 %v1709
        %1722 = vmatpush.bf16.msra.mxu0 %v1708
        %1723 = vmatmul.bf16.gmra.mxu0 %v1713
        %v1724 = vpop.f32.mrf.mxu0
        %v1725 = vadd.f32 %v1698, %v1724
        %v1726 = vpop.f32.mrf.mxu0
        %1727 = vdwg.mxu0
        %s1728 = scalar_lea.vmem %s5, 64
        %v1729 = vld [vmem:[%s1728] sm:$0xf]
        %v1730 = vld [vmem:[%s1728 + $0x4] sm:$0xf]
        %v1731 = vld [vmem:[%s1728 + $0x8] sm:$0xf]
        %v1732 = vld [vmem:[%s1728 + $0xc] sm:$0xf]
        %s1733 = scalar_lea.vmem %s8, 4
        %v1734 = vld [vmem:[%s1733] sm:$0x1]
        %v1736 = vperm.slane %v1734, 0
        %v1742 = vunpack.c.l.b16 %v1729
        %v1743 = vunpack.c.l.b16 %v1730
        %v1744 = vunpack.c.l.b16 %v1731
        %v1745 = vunpack.c.l.b16 %v1732
        %v1746 = vpack.c.b16 %v1743, %v1742
        %v1747 = vpack.c.b16 %v1745, %v1744
        %1750 = vmatpush.bf16.msra.mxu0 0
        %1751 = vmatpush.bf16.msra.mxu0 0
        %1752 = vmatpush.bf16.msra.mxu0 0
        %1753 = vmatpush.bf16.msra.mxu0 0
        %1754 = vmatpush.bf16.msra.mxu0 0
        %1755 = vmatpush.bf16.msra.mxu0 0
        %1756 = vmatpush.bf16.msra.mxu0 %v1747
        %1757 = vmatpush.bf16.msra.mxu0 %v1746
        %1758 = vmatmul.bf16.gmra.mxu0 %v1713
        %v1759 = vpop.f32.mrf.mxu0
        %v1760 = vadd.f32 %v1736, %v1759
        %v1761 = vpop.f32.mrf.mxu0
        %1762 = vdwg.mxu0
        %s1763 = scalar_lea.vmem %s6, 64
        %v1764 = vld [vmem:[%s1763] sm:$0xf]
        %v1765 = vld [vmem:[%s1763 + $0x4] sm:$0xf]
        %v1766 = vld [vmem:[%s1763 + $0x8] sm:$0xf]
        %v1767 = vld [vmem:[%s1763 + $0xc] sm:$0xf]
        %s1768 = scalar_lea.vmem %s9, 4
        %v1769 = vld [vmem:[%s1768] sm:$0x1]
        %v1771 = vperm.slane %v1769, 0
        %v1777 = vunpack.c.l.b16 %v1764
        %v1778 = vunpack.c.l.b16 %v1765
        %v1779 = vunpack.c.l.b16 %v1766
        %v1780 = vunpack.c.l.b16 %v1767
        %v1781 = vpack.c.b16 %v1778, %v1777
        %v1782 = vpack.c.b16 %v1780, %v1779
        %1785 = vmatpush.bf16.msra.mxu0 0
        %1786 = vmatpush.bf16.msra.mxu0 0
        %1787 = vmatpush.bf16.msra.mxu0 0
        %1788 = vmatpush.bf16.msra.mxu0 0
        %1789 = vmatpush.bf16.msra.mxu0 0
        %1790 = vmatpush.bf16.msra.mxu0 0
        %1791 = vmatpush.bf16.msra.mxu0 %v1782
        %1792 = vmatpush.bf16.msra.mxu0 %v1781
        %1793 = vmatmul.bf16.gmra.mxu0 %v1713
        %v1794 = vpop.f32.mrf.mxu0
        %v1795 = vadd.f32 %v1771, %v1794
        %v1796 = vpop.f32.mrf.mxu0
        %1797 = vdwg.mxu0
        %v1798 = vpack.c.bf16 %v1725, %v1725
        %v1799 = vpack.c.bf16 %v1760, %v1760
        %v1801 = vsel %vm931, %v1798, 0
        %v1804 = vsel %vm931, %v1799, 0
        %1806 = vmatpush.bf16.xpose.msra.mxu0 0
        %1807 = vmatpush.bf16.xpose.msra.mxu0 0
        %1808 = vmatpush.bf16.xpose.msra.mxu0 0
        %1809 = vmatpush.bf16.xpose.msra.mxu0 0
        %1810 = vmatpush.bf16.xpose.msra.mxu0 0
        %1811 = vmatpush.bf16.xpose.msra.mxu0 0
        %1812 = vmatpush.bf16.xpose.msra.mxu0 0
        %1813 = vmatpush.bf16.xpose.msra.mxu0 %v1804
        %1814 = vmatmul.bf16.gmra.mxu0 %v1801
        %v1815 = vpop.f32.mrf.mxu0
        %v1816 = vadd.f32 0.0, %v1815
        %v1817 = vpop.f32.mrf.mxu0
        %1818 = vdwg.mxu0
        %v1819 = vmul.f32 %v1816, 0.35355338
        %v1820 = vadd.f32 %v1819, %v953
        %v1821 = vsel %vm931, %v1820, -inf
        %1822 = vmax.xlane.f32.xlu0 %v1821
        %v1823 = vpop.xlane.xlu0 %1822
        %v1824 = vsub.f32 %v1820, %v1823
        %v1825 = vmul.f32 %v1824, 1.442695
        %v1826 = vpow.pop %v1825
        %v1827 = vsel %vm931, %v1826, 0.0
        %1828 = vadd.xlane.f32.xlu0 %v1827
        %v1829 = vpop.xlane.xlu0 %1828
        %v1830 = vrcp.pop %v1829
        %v1831 = vmul.f32 %v1826, %v1830
        %v1832 = vpack.c.bf16 %v1831, %v1831
        %v1833 = vpack.c.bf16 %v1795, %v1795
        %v1835 = vsel %vm931, %v1832, 0
        %v1838 = vsel %vm972, %v1833, 0
        %1840 = vmatpush.bf16.msra.mxu0 0
        %1841 = vmatpush.bf16.msra.mxu0 0
        %1842 = vmatpush.bf16.msra.mxu0 0
        %1843 = vmatpush.bf16.msra.mxu0 0
        %1844 = vmatpush.bf16.msra.mxu0 0
        %1845 = vmatpush.bf16.msra.mxu0 0
        %1846 = vmatpush.bf16.msra.mxu0 0
        %1847 = vmatpush.bf16.msra.mxu0 %v1838
        %1848 = vmatmul.bf16.gmra.mxu0 %v1835
        %v1849 = vpop.f32.mrf.mxu0
        %v1850 = vadd.f32 0.0, %v1849
        %v1851 = vpop.f32.mrf.mxu0
        %1852 = vdwg.mxu0
        %s1853 = scalar_lea.vmem [#allocation2], 80
        %v1854 = vld [vmem:[%s1853] sm:$0xf]
        %v1855 = vld [vmem:[%s1853 + $0x4] sm:$0xf]
        %v1856 = vld [vmem:[%s1853 + $0x8] sm:$0xf]
        %v1857 = vld [vmem:[%s1853 + $0xc] sm:$0xf]
        %s1858 = scalar_lea.vmem %s7, 5
        %v1859 = vld [vmem:[%s1858] sm:$0x1]
        %v1861 = vperm.slane %v1859, 0
        %v1867 = vunpack.c.l.b16 %v1854
        %v1868 = vunpack.c.l.b16 %v1855
        %v1869 = vunpack.c.l.b16 %v1856
        %v1870 = vunpack.c.l.b16 %v1857
        %v1871 = vpack.c.b16 %v1868, %v1867
        %v1872 = vpack.c.b16 %v1870, %v1869
        %1875 = vmatpush.bf16.msra.mxu0 0
        %1876 = vmatpush.bf16.msra.mxu0 0
        %1877 = vmatpush.bf16.msra.mxu0 0
        %1878 = vmatpush.bf16.msra.mxu0 0
        %1879 = vmatpush.bf16.msra.mxu0 0
        %1880 = vmatpush.bf16.msra.mxu0 0
        %1881 = vmatpush.bf16.msra.mxu0 %v1872
        %1882 = vmatpush.bf16.msra.mxu0 %v1871
        %1883 = vmatmul.bf16.gmra.mxu0 %v1713
        %v1884 = vpop.f32.mrf.mxu0
        %v1885 = vadd.f32 %v1861, %v1884
        %v1886 = vpop.f32.mrf.mxu0
        %1887 = vdwg.mxu0
        %s1888 = scalar_lea.vmem %s5, 80
        %v1889 = vld [vmem:[%s1888] sm:$0xf]
        %v1890 = vld [vmem:[%s1888 + $0x4] sm:$0xf]
        %v1891 = vld [vmem:[%s1888 + $0x8] sm:$0xf]
        %v1892 = vld [vmem:[%s1888 + $0xc] sm:$0xf]
        %s1893 = scalar_lea.vmem %s8, 5
        %v1894 = vld [vmem:[%s1893] sm:$0x1]
        %v1896 = vperm.slane %v1894, 0
        %v1902 = vunpack.c.l.b16 %v1889
        %v1903 = vunpack.c.l.b16 %v1890
        %v1904 = vunpack.c.l.b16 %v1891
        %v1905 = vunpack.c.l.b16 %v1892
        %v1906 = vpack.c.b16 %v1903, %v1902
        %v1907 = vpack.c.b16 %v1905, %v1904
        %1910 = vmatpush.bf16.msra.mxu0 0
        %1911 = vmatpush.bf16.msra.mxu0 0
        %1912 = vmatpush.bf16.msra.mxu0 0
        %1913 = vmatpush.bf16.msra.mxu0 0
        %1914 = vmatpush.bf16.msra.mxu0 0
        %1915 = vmatpush.bf16.msra.mxu0 0
        %1916 = vmatpush.bf16.msra.mxu0 %v1907
        %1917 = vmatpush.bf16.msra.mxu0 %v1906
        %1918 = vmatmul.bf16.gmra.mxu0 %v1713
        %v1919 = vpop.f32.mrf.mxu0
        %v1920 = vadd.f32 %v1896, %v1919
        %v1921 = vpop.f32.mrf.mxu0
        %1922 = vdwg.mxu0
        %s1923 = scalar_lea.vmem %s6, 80
        %v1924 = vld [vmem:[%s1923] sm:$0xf]
        %v1925 = vld [vmem:[%s1923 + $0x4] sm:$0xf]
        %v1926 = vld [vmem:[%s1923 + $0x8] sm:$0xf]
        %v1927 = vld [vmem:[%s1923 + $0xc] sm:$0xf]
        %s1928 = scalar_lea.vmem %s9, 5
        %v1929 = vld [vmem:[%s1928] sm:$0x1]
        %v1931 = vperm.slane %v1929, 0
        %v1937 = vunpack.c.l.b16 %v1924
        %v1938 = vunpack.c.l.b16 %v1925
        %v1939 = vunpack.c.l.b16 %v1926
        %v1940 = vunpack.c.l.b16 %v1927
        %v1941 = vpack.c.b16 %v1938, %v1937
        %v1942 = vpack.c.b16 %v1940, %v1939
        %1945 = vmatpush.bf16.msra.mxu0 0
        %1946 = vmatpush.bf16.msra.mxu0 0
        %1947 = vmatpush.bf16.msra.mxu0 0
        %1948 = vmatpush.bf16.msra.mxu0 0
        %1949 = vmatpush.bf16.msra.mxu0 0
        %1950 = vmatpush.bf16.msra.mxu0 0
        %1951 = vmatpush.bf16.msra.mxu0 %v1942
        %1952 = vmatpush.bf16.msra.mxu0 %v1941
        %1953 = vmatmul.bf16.gmra.mxu0 %v1713
        %v1954 = vpop.f32.mrf.mxu0
        %v1955 = vadd.f32 %v1931, %v1954
        %v1956 = vpop.f32.mrf.mxu0
        %1957 = vdwg.mxu0
        %v1958 = vpack.c.bf16 %v1885, %v1885
        %v1959 = vpack.c.bf16 %v1920, %v1920
        %v1961 = vsel %vm931, %v1958, 0
        %v1964 = vsel %vm931, %v1959, 0
        %1966 = vmatpush.bf16.xpose.msra.mxu0 0
        %1967 = vmatpush.bf16.xpose.msra.mxu0 0
        %1968 = vmatpush.bf16.xpose.msra.mxu0 0
        %1969 = vmatpush.bf16.xpose.msra.mxu0 0
        %1970 = vmatpush.bf16.xpose.msra.mxu0 0
        %1971 = vmatpush.bf16.xpose.msra.mxu0 0
        %1972 = vmatpush.bf16.xpose.msra.mxu0 0
        %1973 = vmatpush.bf16.xpose.msra.mxu0 %v1964
        %1974 = vmatmul.bf16.gmra.mxu0 %v1961
        %v1975 = vpop.f32.mrf.mxu0
        %v1976 = vadd.f32 0.0, %v1975
        %v1977 = vpop.f32.mrf.mxu0
        %1978 = vdwg.mxu0
        %v1979 = vmul.f32 %v1976, 0.35355338
        %v1980 = vadd.f32 %v1979, %v953
        %v1981 = vsel %vm931, %v1980, -inf
        %1982 = vmax.xlane.f32.xlu0 %v1981
        %v1983 = vpop.xlane.xlu0 %1982
        %v1984 = vsub.f32 %v1980, %v1983
        %v1985 = vmul.f32 %v1984, 1.442695
        %v1986 = vpow.pop %v1985
        %v1987 = vsel %vm931, %v1986, 0.0
        %1988 = vadd.xlane.f32.xlu0 %v1987
        %v1989 = vpop.xlane.xlu0 %1988
        %v1990 = vrcp.pop %v1989
        %v1991 = vmul.f32 %v1986, %v1990
        %v1992 = vpack.c.bf16 %v1991, %v1991
        %v1993 = vpack.c.bf16 %v1955, %v1955
        %v1995 = vsel %vm931, %v1992, 0
        %v1998 = vsel %vm972, %v1993, 0
        %2000 = vmatpush.bf16.msra.mxu0 0
        %2001 = vmatpush.bf16.msra.mxu0 0
        %2002 = vmatpush.bf16.msra.mxu0 0
        %2003 = vmatpush.bf16.msra.mxu0 0
        %2004 = vmatpush.bf16.msra.mxu0 0
        %2005 = vmatpush.bf16.msra.mxu0 0
        %2006 = vmatpush.bf16.msra.mxu0 0
        %2007 = vmatpush.bf16.msra.mxu0 %v1998
        %2008 = vmatmul.bf16.gmra.mxu0 %v1995
        %v2009 = vpop.f32.mrf.mxu0
        %v2010 = vadd.f32 0.0, %v2009
        %v2011 = vpop.f32.mrf.mxu0
        %2012 = vdwg.mxu0
        %s2013 = scalar_lea.vmem [#allocation2], 96
        %v2014 = vld [vmem:[%s2013] sm:$0xf]
        %v2015 = vld [vmem:[%s2013 + $0x4] sm:$0xf]
        %v2016 = vld [vmem:[%s2013 + $0x8] sm:$0xf]
        %v2017 = vld [vmem:[%s2013 + $0xc] sm:$0xf]
        %s2018 = scalar_lea.vmem %s7, 6
        %v2019 = vld [vmem:[%s2018] sm:$0x1]
        %v2021 = vperm.slane %v2019, 0
        %v2027 = vunpack.c.l.b16 %v2014
        %v2028 = vunpack.c.l.b16 %v2015
        %v2029 = vunpack.c.l.b16 %v2016
        %v2030 = vunpack.c.l.b16 %v2017
        %v2031 = vpack.c.b16 %v2028, %v2027
        %v2032 = vpack.c.b16 %v2030, %v2029
        %2035 = vmatpush.bf16.msra.mxu0 0
        %2036 = vmatpush.bf16.msra.mxu0 0
        %2037 = vmatpush.bf16.msra.mxu0 0
        %2038 = vmatpush.bf16.msra.mxu0 0
        %2039 = vmatpush.bf16.msra.mxu0 0
        %2040 = vmatpush.bf16.msra.mxu0 0
        %2041 = vmatpush.bf16.msra.mxu0 %v2032
        %2042 = vmatpush.bf16.msra.mxu0 %v2031
        %2043 = vmatmul.bf16.gmra.mxu0 %v1713
        %v2044 = vpop.f32.mrf.mxu0
        %v2045 = vadd.f32 %v2021, %v2044
        %v2046 = vpop.f32.mrf.mxu0
        %2047 = vdwg.mxu0
        %s2048 = scalar_lea.vmem %s5, 96
        %v2049 = vld [vmem:[%s2048] sm:$0xf]
        %v2050 = vld [vmem:[%s2048 + $0x4] sm:$0xf]
        %v2051 = vld [vmem:[%s2048 + $0x8] sm:$0xf]
        %v2052 = vld [vmem:[%s2048 + $0xc] sm:$0xf]
        %s2053 = scalar_lea.vmem %s8, 6
        %v2054 = vld [vmem:[%s2053] sm:$0x1]
        %v2056 = vperm.slane %v2054, 0
        %v2062 = vunpack.c.l.b16 %v2049
        %v2063 = vunpack.c.l.b16 %v2050
        %v2064 = vunpack.c.l.b16 %v2051
        %v2065 = vunpack.c.l.b16 %v2052
        %v2066 = vpack.c.b16 %v2063, %v2062
        %v2067 = vpack.c.b16 %v2065, %v2064
        %2070 = vmatpush.bf16.msra.mxu0 0
        %2071 = vmatpush.bf16.msra.mxu0 0
        %2072 = vmatpush.bf16.msra.mxu0 0
        %2073 = vmatpush.bf16.msra.mxu0 0
        %2074 = vmatpush.bf16.msra.mxu0 0
        %2075 = vmatpush.bf16.msra.mxu0 0
        %2076 = vmatpush.bf16.msra.mxu0 %v2067
        %2077 = vmatpush.bf16.msra.mxu0 %v2066
        %2078 = vmatmul.bf16.gmra.mxu0 %v1713
        %v2079 = vpop.f32.mrf.mxu0
        %v2080 = vadd.f32 %v2056, %v2079
        %v2081 = vpop.f32.mrf.mxu0
        %2082 = vdwg.mxu0
        %s2083 = scalar_lea.vmem %s6, 96
        %v2084 = vld [vmem:[%s2083] sm:$0xf]
        %v2085 = vld [vmem:[%s2083 + $0x4] sm:$0xf]
        %v2086 = vld [vmem:[%s2083 + $0x8] sm:$0xf]
        %v2087 = vld [vmem:[%s2083 + $0xc] sm:$0xf]
        %s2088 = scalar_lea.vmem %s9, 6
        %v2089 = vld [vmem:[%s2088] sm:$0x1]
        %v2091 = vperm.slane %v2089, 0
        %v2097 = vunpack.c.l.b16 %v2084
        %v2098 = vunpack.c.l.b16 %v2085
        %v2099 = vunpack.c.l.b16 %v2086
        %v2100 = vunpack.c.l.b16 %v2087
        %v2101 = vpack.c.b16 %v2098, %v2097
        %v2102 = vpack.c.b16 %v2100, %v2099
        %2105 = vmatpush.bf16.msra.mxu0 0
        %2106 = vmatpush.bf16.msra.mxu0 0
        %2107 = vmatpush.bf16.msra.mxu0 0
        %2108 = vmatpush.bf16.msra.mxu0 0
        %2109 = vmatpush.bf16.msra.mxu0 0
        %2110 = vmatpush.bf16.msra.mxu0 0
        %2111 = vmatpush.bf16.msra.mxu0 %v2102
        %2112 = vmatpush.bf16.msra.mxu0 %v2101
        %2113 = vmatmul.bf16.gmra.mxu0 %v1713
        %v2114 = vpop.f32.mrf.mxu0
        %v2115 = vadd.f32 %v2091, %v2114
        %v2116 = vpop.f32.mrf.mxu0
        %2117 = vdwg.mxu0
        %v2118 = vpack.c.bf16 %v2045, %v2045
        %v2119 = vpack.c.bf16 %v2080, %v2080
        %v2121 = vsel %vm931, %v2118, 0
        %v2124 = vsel %vm931, %v2119, 0
        %2126 = vmatpush.bf16.xpose.msra.mxu0 0
        %2127 = vmatpush.bf16.xpose.msra.mxu0 0
        %2128 = vmatpush.bf16.xpose.msra.mxu0 0
        %2129 = vmatpush.bf16.xpose.msra.mxu0 0
        %2130 = vmatpush.bf16.xpose.msra.mxu0 0
        %2131 = vmatpush.bf16.xpose.msra.mxu0 0
        %2132 = vmatpush.bf16.xpose.msra.mxu0 0
        %2133 = vmatpush.bf16.xpose.msra.mxu0 %v2124
        %2134 = vmatmul.bf16.gmra.mxu0 %v2121
        %v2135 = vpop.f32.mrf.mxu0
        %v2136 = vadd.f32 0.0, %v2135
        %v2137 = vpop.f32.mrf.mxu0
        %2138 = vdwg.mxu0
        %v2139 = vmul.f32 %v2136, 0.35355338
        %v2140 = vadd.f32 %v2139, %v953
        %v2141 = vsel %vm931, %v2140, -inf
        %2142 = vmax.xlane.f32.xlu0 %v2141
        %v2143 = vpop.xlane.xlu0 %2142
        %v2144 = vsub.f32 %v2140, %v2143
        %v2145 = vmul.f32 %v2144, 1.442695
        %v2146 = vpow.pop %v2145
        %v2147 = vsel %vm931, %v2146, 0.0
        %2148 = vadd.xlane.f32.xlu0 %v2147
        %v2149 = vpop.xlane.xlu0 %2148
        %v2150 = vrcp.pop %v2149
        %v2151 = vmul.f32 %v2146, %v2150
        %v2152 = vpack.c.bf16 %v2151, %v2151
        %v2153 = vpack.c.bf16 %v2115, %v2115
        %v2155 = vsel %vm931, %v2152, 0
        %v2158 = vsel %vm972, %v2153, 0
        %2160 = vmatpush.bf16.msra.mxu0 0
        %2161 = vmatpush.bf16.msra.mxu0 0
        %2162 = vmatpush.bf16.msra.mxu0 0
        %2163 = vmatpush.bf16.msra.mxu0 0
        %2164 = vmatpush.bf16.msra.mxu0 0
        %2165 = vmatpush.bf16.msra.mxu0 0
        %2166 = vmatpush.bf16.msra.mxu0 0
        %2167 = vmatpush.bf16.msra.mxu0 %v2158
        %2168 = vmatmul.bf16.gmra.mxu0 %v2155
        %v2169 = vpop.f32.mrf.mxu0
        %v2170 = vadd.f32 0.0, %v2169
        %v2171 = vpop.f32.mrf.mxu0
        %2172 = vdwg.mxu0
        %s2173 = scalar_lea.vmem [#allocation2], 112
        %v2174 = vld [vmem:[%s2173] sm:$0xf]
        %v2175 = vld [vmem:[%s2173 + $0x4] sm:$0xf]
        %v2176 = vld [vmem:[%s2173 + $0x8] sm:$0xf]
        %v2177 = vld [vmem:[%s2173 + $0xc] sm:$0xf]
        %s2178 = scalar_lea.vmem %s7, 7
        %v2179 = vld [vmem:[%s2178] sm:$0x1]
        %v2181 = vperm.slane %v2179, 0
        %v2187 = vunpack.c.l.b16 %v2174
        %v2188 = vunpack.c.l.b16 %v2175
        %v2189 = vunpack.c.l.b16 %v2176
        %v2190 = vunpack.c.l.b16 %v2177
        %v2191 = vpack.c.b16 %v2188, %v2187
        %v2192 = vpack.c.b16 %v2190, %v2189
        %2195 = vmatpush.bf16.msra.mxu0 0
        %2196 = vmatpush.bf16.msra.mxu0 0
        %2197 = vmatpush.bf16.msra.mxu0 0
        %2198 = vmatpush.bf16.msra.mxu0 0
        %2199 = vmatpush.bf16.msra.mxu0 0
        %2200 = vmatpush.bf16.msra.mxu0 0
        %2201 = vmatpush.bf16.msra.mxu0 %v2192
        %2202 = vmatpush.bf16.msra.mxu0 %v2191
        %2203 = vmatmul.bf16.gmra.mxu0 %v1713
        %v2204 = vpop.f32.mrf.mxu0
        %v2205 = vadd.f32 %v2181, %v2204
        %v2206 = vpop.f32.mrf.mxu0
        %2207 = vdwg.mxu0
        %s2208 = scalar_lea.vmem %s5, 112
        %v2209 = vld [vmem:[%s2208] sm:$0xf]
        %v2210 = vld [vmem:[%s2208 + $0x4] sm:$0xf]
        %v2211 = vld [vmem:[%s2208 + $0x8] sm:$0xf]
        %v2212 = vld [vmem:[%s2208 + $0xc] sm:$0xf]
        %s2213 = scalar_lea.vmem %s8, 7
        %v2214 = vld [vmem:[%s2213] sm:$0x1]
        %v2216 = vperm.slane %v2214, 0
        %v2222 = vunpack.c.l.b16 %v2209
        %v2223 = vunpack.c.l.b16 %v2210
        %v2224 = vunpack.c.l.b16 %v2211
        %v2225 = vunpack.c.l.b16 %v2212
        %v2226 = vpack.c.b16 %v2223, %v2222
        %v2227 = vpack.c.b16 %v2225, %v2224
        %2230 = vmatpush.bf16.msra.mxu0 0
        %2231 = vmatpush.bf16.msra.mxu0 0
        %2232 = vmatpush.bf16.msra.mxu0 0
        %2233 = vmatpush.bf16.msra.mxu0 0
        %2234 = vmatpush.bf16.msra.mxu0 0
        %2235 = vmatpush.bf16.msra.mxu0 0
        %2236 = vmatpush.bf16.msra.mxu0 %v2227
        %2237 = vmatpush.bf16.msra.mxu0 %v2226
        %2238 = vmatmul.bf16.gmra.mxu0 %v1713
        %v2239 = vpop.f32.mrf.mxu0
        %v2240 = vadd.f32 %v2216, %v2239
        %v2241 = vpop.f32.mrf.mxu0
        %2242 = vdwg.mxu0
        %s2243 = scalar_lea.vmem %s6, 112
        %v2244 = vld [vmem:[%s2243] sm:$0xf]
        %v2245 = vld [vmem:[%s2243 + $0x4] sm:$0xf]
        %v2246 = vld [vmem:[%s2243 + $0x8] sm:$0xf]
        %v2247 = vld [vmem:[%s2243 + $0xc] sm:$0xf]
        %s2248 = scalar_lea.vmem %s9, 7
        %v2249 = vld [vmem:[%s2248] sm:$0x1]
        %v2251 = vperm.slane %v2249, 0
        %v2257 = vunpack.c.l.b16 %v2244
        %v2258 = vunpack.c.l.b16 %v2245
        %v2259 = vunpack.c.l.b16 %v2246
        %v2260 = vunpack.c.l.b16 %v2247
        %v2261 = vpack.c.b16 %v2258, %v2257
        %v2262 = vpack.c.b16 %v2260, %v2259
        %2265 = vmatpush.bf16.msra.mxu0 0
        %2266 = vmatpush.bf16.msra.mxu0 0
        %2267 = vmatpush.bf16.msra.mxu0 0
        %2268 = vmatpush.bf16.msra.mxu0 0
        %2269 = vmatpush.bf16.msra.mxu0 0
        %2270 = vmatpush.bf16.msra.mxu0 0
        %2271 = vmatpush.bf16.msra.mxu0 %v2262
        %2272 = vmatpush.bf16.msra.mxu0 %v2261
        %2273 = vmatmul.bf16.gmra.mxu0 %v1713
        %v2274 = vpop.f32.mrf.mxu0
        %v2275 = vadd.f32 %v2251, %v2274
        %v2276 = vpop.f32.mrf.mxu0
        %2277 = vdwg.mxu0
        %v2278 = vpack.c.bf16 %v2205, %v2205
        %v2279 = vpack.c.bf16 %v2240, %v2240
        %v2281 = vsel %vm931, %v2278, 0
        %v2284 = vsel %vm931, %v2279, 0
        %2286 = vmatpush.bf16.xpose.msra.mxu0 0
        %2287 = vmatpush.bf16.xpose.msra.mxu0 0
        %2288 = vmatpush.bf16.xpose.msra.mxu0 0
        %2289 = vmatpush.bf16.xpose.msra.mxu0 0
        %2290 = vmatpush.bf16.xpose.msra.mxu0 0
        %2291 = vmatpush.bf16.xpose.msra.mxu0 0
        %2292 = vmatpush.bf16.xpose.msra.mxu0 0
        %2293 = vmatpush.bf16.xpose.msra.mxu0 %v2284
        %2294 = vmatmul.bf16.gmra.mxu0 %v2281
        %v2295 = vpop.f32.mrf.mxu0
        %v2296 = vadd.f32 0.0, %v2295
        %v2297 = vpop.f32.mrf.mxu0
        %2298 = vdwg.mxu0
        %v2299 = vmul.f32 %v2296, 0.35355338
        %v2300 = vadd.f32 %v2299, %v953
        %v2301 = vsel %vm931, %v2300, -inf
        %2302 = vmax.xlane.f32.xlu0 %v2301
        %v2303 = vpop.xlane.xlu0 %2302
        %v2304 = vsub.f32 %v2300, %v2303
        %v2305 = vmul.f32 %v2304, 1.442695
        %v2306 = vpow.pop %v2305
        %v2307 = vsel %vm931, %v2306, 0.0
        %2308 = vadd.xlane.f32.xlu0 %v2307
        %v2309 = vpop.xlane.xlu0 %2308
        %v2310 = vrcp.pop %v2309
        %v2311 = vmul.f32 %v2306, %v2310
        %v2312 = vpack.c.bf16 %v2311, %v2311
        %v2313 = vpack.c.bf16 %v2275, %v2275
        %v2315 = vsel %vm931, %v2312, 0
        %v2318 = vsel %vm972, %v2313, 0
        %2320 = vmatpush.bf16.msra.mxu0 0
        %2321 = vmatpush.bf16.msra.mxu0 0
        %2322 = vmatpush.bf16.msra.mxu0 0
        %2323 = vmatpush.bf16.msra.mxu0 0
        %2324 = vmatpush.bf16.msra.mxu0 0
        %2325 = vmatpush.bf16.msra.mxu0 0
        %2326 = vmatpush.bf16.msra.mxu0 0
        %2327 = vmatpush.bf16.msra.mxu0 %v2318
        %2328 = vmatmul.bf16.gmra.mxu0 %v2315
        %v2329 = vpop.f32.mrf.mxu0
        %v2330 = vadd.f32 0.0, %v2329
        %v2331 = vpop.f32.mrf.mxu0
        %2332 = vdwg.mxu0
        %2334 = vrot.lane.b32.xlu0 %v2010, 8
        %v2335 = vpop.permute.xlu0 %2334
        %2338 = vrot.lane.b32.xlu0 %v2170, 16
        %v2339 = vpop.permute.xlu0 %2338
        %2342 = vrot.lane.b32.xlu0 %v2330, 24
        %v2343 = vpop.permute.xlu0 %2342
        %v2345 = vsel %vm931, %v1850, %v2335
        %v2346 = vsel %vm1482, %v2345, %v2339
        %v2347 = vsel %vm1484, %v2346, %v2343
        %v2348 = vpack.c.bf16 %v2347, %v2347
        %s2349 = scalar_lea.vmem %s10, 16
        %v2350 = vld [vmem:[%s2349] sm:$0xf]
        %v2351 = vld [vmem:[%s2349 + $0x4] sm:$0xf]
        %v2352 = vld [vmem:[%s2349 + $0x8] sm:$0xf]
        %v2353 = vld [vmem:[%s2349 + $0xc] sm:$0xf]
        %s2354 = scalar_lea.vmem %s11, 1
        %v2355 = vld [vmem:[%s2354] sm:$0x1]
        %v2357 = vperm.slane %v2355, 0
        %v2363 = vunpack.c.l.b16 %v2350
        %v2364 = vunpack.c.l.b16 %v2351
        %v2365 = vunpack.c.l.b16 %v2352
        %v2366 = vunpack.c.l.b16 %v2353
        %v2367 = vpack.c.b16 %v2364, %v2363
        %v2368 = vpack.c.b16 %v2366, %v2365
        %v2372 = vsel %vm788, %v2348, 0
        %2374 = vmatpush.bf16.msra.mxu0 0
        %2375 = vmatpush.bf16.msra.mxu0 0
        %2376 = vmatpush.bf16.msra.mxu0 0
        %2377 = vmatpush.bf16.msra.mxu0 0
        %2378 = vmatpush.bf16.msra.mxu0 0
        %2379 = vmatpush.bf16.msra.mxu0 0
        %2380 = vmatpush.bf16.msra.mxu0 %v2368
        %2381 = vmatpush.bf16.msra.mxu0 %v2367
        %2382 = vmatmul.bf16.gmra.mxu0 %v2372
        %v2383 = vpop.f32.mrf.mxu0
        %v2384 = vadd.f32 %v2357, %v2383
        %v2385 = vpop.f32.mrf.mxu0
        %2386 = vdwg.mxu0
        %v2387 = vadd.f32 %v2384, %v1688
        %s2388 = scalar_lea.vmem %s12, 1
        %v2389 = vld [vmem:[%s2388] sm:$0x1]
        %s2390 = scalar_lea.vmem %s13, 1
        %v2391 = vld [vmem:[%s2390] sm:$0x1]
        %v2392 = vsel %vm788, %v2387, 0.0
        %2393 = vadd.xlane.f32.xlu0 %v2392
        %v2394 = vpop.xlane.xlu0 %2393
        %v2395 = vmul.f32 %v2394, %v798
        %v2396 = vsub.f32 %v2387, %v2395
        %v2397 = vmul.f32 %v2396, %v2396
        %v2398 = vsel %vm788, %v2397, 0.0
        %2399 = vadd.xlane.f32.xlu0 %v2398
        %v2400 = vpop.xlane.xlu0 %2399
        %v2401 = vmul.f32 %v2400, %v798
        %v2402 = vadd.f32 %v2401, 1e-12
        %v2403 = vrsqrt.pop %v2402
        %v2404 = vmul.f32 %v2403, %v2402
        %v2405 = vmul.f32 %v2404, %v2403
        %v2406 = vmul.f32 0.5, %v2405
        %v2407 = vsub.f32 1.5, %v2406
        %v2408 = vmul.f32 %v2403, %v2407
        %vm2409 = vweird.f32 %v2402
        %vm2410 = vweird.f32 %v2403
        %vm2411 = vmor %vm2409, %vm2410
        %v2412 = vsel %vm2411, %v2403, %v2408
        %v2413 = vmul.f32 %v2396, %v2412
        %v2415 = vperm.slane %v2389, 0
        %v2417 = vmul.f32 %v2413, %v2415
        %v2419 = vperm.slane %v2391, 0
        %v2421 = vadd.f32 %v2417, %v2419
        %v2422 = vpack.c.bf16 %v2421, %v2421
        %s2423 = scalar_lea.vmem %s14, 16
        %v2424 = vld [vmem:[%s2423] sm:$0xf]
        %v2425 = vld [vmem:[%s2423 + $0x4] sm:$0xf]
        %v2426 = vld [vmem:[%s2423 + $0x8] sm:$0xf]
        %v2427 = vld [vmem:[%s2423 + $0xc] sm:$0xf]
        %s2428 = scalar_lea.vmem %s15, 1
        %v2429 = vld [vmem:[%s2428] sm:$0x1]
        %v2431 = vperm.slane %v2429, 0
        %v2437 = vunpack.c.l.b16 %v2424
        %v2438 = vunpack.c.l.b16 %v2425
        %v2439 = vunpack.c.l.b16 %v2426
        %v2440 = vunpack.c.l.b16 %v2427
        %v2441 = vpack.c.b16 %v2438, %v2437
        %v2442 = vpack.c.b16 %v2440, %v2439
        %v2446 = vsel %vm788, %v2422, 0
        %2448 = vmatpush.bf16.msra.mxu0 0
        %2449 = vmatpush.bf16.msra.mxu0 0
        %2450 = vmatpush.bf16.msra.mxu0 0
        %2451 = vmatpush.bf16.msra.mxu0 0
        %2452 = vmatpush.bf16.msra.mxu0 0
        %2453 = vmatpush.bf16.msra.mxu0 0
        %2454 = vmatpush.bf16.msra.mxu0 %v2442
        %2455 = vmatpush.bf16.msra.mxu0 %v2441
        %2456 = vmatmul.bf16.gmra.mxu0 %v2446
        %v2457 = vpop.f32.mrf.mxu0
        %v2458 = vadd.f32 %v2431, %v2457
        %v2459 = vpop.f32.mrf.mxu0
        %2460 = vdwg.mxu0
        %v2461 = vmul.f32 %v2458, 0.5
        %v2462 = vmul.f32 %v2458, 0.044715
        %v2463 = vmul.f32 %v2462, %v2458
        %v2464 = vmul.f32 %v2463, %v2458
        %v2465 = vadd.f32 %v2458, %v2464
        %v2466 = vmul.f32 %v2465, 0.7978846
        %v2467 = vtanh.pop %v2466
        %v2468 = vadd.f32 %v2467, 1.0
        %v2469 = vmul.f32 %v2461, %v2468
        %v2470 = vpack.c.bf16 %v2469, %v2469
        %s2471 = scalar_lea.vmem %s16, 32
        %v2472 = vld [vmem:[%s2471] sm:$0xf]
        %v2473 = vld [vmem:[%s2471 + $0x4] sm:$0xf]
        %v2474 = vld [vmem:[%s2471 + $0x8] sm:$0xf]
        %v2475 = vld [vmem:[%s2471 + $0xc] sm:$0xf]
        %v2476 = vld [vmem:[%s2471 + $0x10] sm:$0xf]
        %v2477 = vld [vmem:[%s2471 + $0x14] sm:$0xf]
        %v2478 = vld [vmem:[%s2471 + $0x18] sm:$0xf]
        %v2479 = vld [vmem:[%s2471 + $0x1c] sm:$0xf]
        %s2480 = scalar_lea.vmem %s17, 1
        %v2481 = vld [vmem:[%s2480] sm:$0x1]
        %v2483 = vperm.slane %v2481, 0
        %v2493 = vunpack.c.l.b16 %v2472
        %v2494 = vunpack.c.l.b16 %v2473
        %v2495 = vunpack.c.l.b16 %v2474
        %v2496 = vunpack.c.l.b16 %v2475
        %v2497 = vunpack.c.l.b16 %v2476
        %v2498 = vunpack.c.l.b16 %v2477
        %v2499 = vunpack.c.l.b16 %v2478
        %v2500 = vunpack.c.l.b16 %v2479
        %v2501 = vpack.c.b16 %v2494, %v2493
        %v2502 = vpack.c.b16 %v2496, %v2495
        %v2503 = vpack.c.b16 %v2498, %v2497
        %v2504 = vpack.c.b16 %v2500, %v2499
        %v2510 = vsel %vm1639, %v2470, 0
        %2512 = vmatpush.bf16.msra.mxu0 0
        %2513 = vmatpush.bf16.msra.mxu0 0
        %2514 = vmatpush.bf16.msra.mxu0 0
        %2515 = vmatpush.bf16.msra.mxu0 0
        %2516 = vmatpush.bf16.msra.mxu0 %v2504
        %2517 = vmatpush.bf16.msra.mxu0 %v2503
        %2518 = vmatpush.bf16.msra.mxu0 %v2502
        %2519 = vmatpush.bf16.msra.mxu0 %v2501
        %2520 = vmatmul.bf16.gmra.mxu0 %v2510
        %v2521 = vpop.f32.mrf.mxu0
        %v2522 = vadd.f32 %v2483, %v2521
        %v2523 = vpop.f32.mrf.mxu0
        %2524 = vdwg.mxu0
        %v2525 = vadd.f32 %v2522, %v2421
        %s2526 = scalar_lea.vmem %s18, 1
        %v2527 = vld [vmem:[%s2526] sm:$0x1]
        %s2528 = scalar_lea.vmem %s19, 1
        %v2529 = vld [vmem:[%s2528] sm:$0x1]
        %v2530 = vsel %vm788, %v2525, 0.0
        %2531 = vadd.xlane.f32.xlu0 %v2530
        %v2532 = vpop.xlane.xlu0 %2531
        %v2533 = vmul.f32 %v2532, %v798
        %v2534 = vsub.f32 %v2525, %v2533
        %v2535 = vmul.f32 %v2534, %v2534
        %v2536 = vsel %vm788, %v2535, 0.0
        %2537 = vadd.xlane.f32.xlu0 %v2536
        %v2538 = vpop.xlane.xlu0 %2537
        %v2539 = vmul.f32 %v2538, %v798
        %v2540 = vadd.f32 %v2539, 1e-12
        %v2541 = vrsqrt.pop %v2540
        %v2542 = vmul.f32 %v2541, %v2540
        %v2543 = vmul.f32 %v2542, %v2541
        %v2544 = vmul.f32 0.5, %v2543
        %v2545 = vsub.f32 1.5, %v2544
        %v2546 = vmul.f32 %v2541, %v2545
        %vm2547 = vweird.f32 %v2540
        %vm2548 = vweird.f32 %v2541
        %vm2549 = vmor %vm2547, %vm2548
        %v2550 = vsel %vm2549, %v2541, %v2546
        %v2551 = vmul.f32 %v2534, %v2550
        %v2553 = vperm.slane %v2527, 0
        %v2555 = vmul.f32 %v2551, %v2553
        %v2557 = vperm.slane %v2529, 0
        %v2559 = vadd.f32 %v2555, %v2557
        %v2560 = vpack.c.bf16 %v2559, %v2559
        %v2561 = vld [vmem:[%s20] sm:$0xf]
        %v2562 = vld [vmem:[%s20 + $0x4] sm:$0xf]
        %v2563 = vld [vmem:[%s20 + $0x8] sm:$0xf]
        %v2564 = vld [vmem:[%s20 + $0xc] sm:$0xf]
        %v2565 = vld [vmem:[%s21] sm:$0x1]
        %v2567 = vperm.slane %v2565, 0
        %v2573 = vunpack.c.l.b16 %v2561
        %v2574 = vunpack.c.l.b16 %v2562
        %v2575 = vunpack.c.l.b16 %v2563
        %v2576 = vunpack.c.l.b16 %v2564
        %v2577 = vpack.c.b16 %v2574, %v2573
        %v2578 = vpack.c.b16 %v2576, %v2575
        %v2582 = vsel %vm788, %v2560, 0
        %2584 = vmatpush.bf16.msra.mxu0 0
        %2585 = vmatpush.bf16.msra.mxu0 0
        %2586 = vmatpush.bf16.msra.mxu0 0
        %2587 = vmatpush.bf16.msra.mxu0 0
        %2588 = vmatpush.bf16.msra.mxu0 0
        %2589 = vmatpush.bf16.msra.mxu0 0
        %2590 = vmatpush.bf16.msra.mxu0 %v2578
        %2591 = vmatpush.bf16.msra.mxu0 %v2577
        %2592 = vmatmul.bf16.gmra.mxu0 %v2582
        %v2593 = vpop.f32.mrf.mxu0
        %v2594 = vadd.f32 %v2567, %v2593
        %v2595 = vpop.f32.mrf.mxu0
        %2596 = vdwg.mxu0
        %v2597 = vtanh.pop %v2594
        %v2598 = vpack.c.bf16 %v2597, %v2597
        %v2599 = vld [vmem:[#allocation4] sm:$0xf]
        %v2600 = vld [vmem:[#allocation4 + $0x4] sm:$0xf]
        %v2601 = vld [vmem:[#allocation4 + $0x8] sm:$0xf]
        %v2602 = vld [vmem:[#allocation4 + $0xc] sm:$0xf]
        %v2603 = vld [vmem:[%s23] sm:$0x1]
        %v2605 = vperm.slane %v2603, 0
        %v2611 = vunpack.c.l.b16 %v2599
        %v2612 = vunpack.c.l.b16 %v2600
        %v2613 = vunpack.c.l.b16 %v2601
        %v2614 = vunpack.c.l.b16 %v2602
        %v2615 = vpack.c.b16 %v2612, %v2611
        %v2616 = vpack.c.b16 %v2614, %v2613
        %v2620 = vsel %vm788, %v2598, 0
        %2622 = vmatpush.bf16.msra.mxu0 0
        %2623 = vmatpush.bf16.msra.mxu0 0
        %2624 = vmatpush.bf16.msra.mxu0 0
        %2625 = vmatpush.bf16.msra.mxu0 0
        %2626 = vmatpush.bf16.msra.mxu0 0
        %2627 = vmatpush.bf16.msra.mxu0 0
        %2628 = vmatpush.bf16.msra.mxu0 %v2616
        %2629 = vmatpush.bf16.msra.mxu0 %v2615
        %2630 = vmatmul.bf16.gmra.mxu0 %v2620
        %v2631 = vpop.f32.mrf.mxu0
        %v2632 = vadd.f32 %v2605, %v2631
        %v2633 = vpop.f32.mrf.mxu0
        %2634 = vdwg.mxu0
        %2635 = vst [vmem:[%s780] sm:$0xff] %v2632
        %p2636 = scmp.lt.s32.totalorder %s37, 1
        %s2637 = scalar_select %p2636, %s37, 1
        %s2638 = smul.addr %s2637, 8
        %s2639 = scalar_lea.vmem %s24, %s2638
        // Predicated region
        $region125: #{multilabel_forward.1} parent=115 // pred_check
          %p2640 = pneg %p569
        $region126: #{multilabel_forward.1} parent=115 // pred_check_branch
          %2642 = sbr.rel (%p2640) target = $region128
        $region127: #{multilabel_forward.1} parent=115 // pred_region
          _
        $region128: #{multilabel_forward.1} parent=115 // pred_fallthru
          _
      $region116: #{multilabel_forward.1} parent=5 // pred_fallthru
        _
      %p2643 = scmp.le.s32.totalorder 2, %s32
      // Predicated region
      $region129: #{multilabel_forward.1} parent=5 // pred_check
        %p2644 = pneg %p2643
      $region130: #{multilabel_forward.1} parent=5 // pred_check_branch
        %2646 = sbr.rel (%p2644) target = $region132
      $region131: #{multilabel_forward.1} parent=5 // pred_region
        %s2647 = ssub.s32 %s32, 2
        // Predicated region
        $region133: #{multilabel_forward.1} parent=131 // pred_check
          %p2648 = pneg %p575
        $region134: #{multilabel_forward.1} parent=131 // pred_check_branch
          %2650 = sbr.rel (%p2648) target = $region136
        $region135: #{multilabel_forward.1} parent=131 // pred_region
          %p2651 = scmp.lt.s32.totalorder %s38, 1
          %s2652 = scalar_select %p2651, %s38, 1
          %s2653 = smul.addr %s2652, 8
          %s2654 = scalar_lea.vmem %s24, %s2653
        $region136: #{multilabel_forward.1} parent=131 // pred_fallthru
          _
      $region132: #{multilabel_forward.1} parent=5 // pred_fallthru
        _
    $region6: #{multilabel_forward.1} parent=1 // loop_footer
      %s36 = sadd.s32 1, %s32
    $region7: #{multilabel_forward.1} parent=1 // loop_footer_branch
      %31 = sbr.rel target = $region3
    $region8: #{multilabel_forward.1} parent=1 // loop_exit
      _
    %2655 = vsyncpa [#allocation3], 1
    %s2656 = scalar_lea.sflag [#allocation3], 1
    %2657 = vsyncpa %s2656, 1
    %2658 = vsyncpa [#allocation5], 1

</llo_original>
